<compile_context>
chip_gen: v7x
topology: tpu7x:2x2x1
jax: 0.10.0
libtpu: 0.0.40
codegen_flags: <defaults>
</compile_context>

<pallas_src>
import functools

import jax
import jax.numpy as jnp
from jax import lax
from jax.experimental import pallas as pl
from jax.experimental.pallas import tpu as pltpu


# ----------------------------- kernel ---------------------------------------

def _layer_norm(x, g, b, eps=1e-5):
    # Single-pass mean/variance (E[x^2] - E[x]^2) -> one cross-lane reduction
    # pair instead of two dependent mean reductions.
    mu = jnp.mean(x, axis=-1, keepdims=True)
    ms = jnp.mean(x * x, axis=-1, keepdims=True)
    var = ms - mu * mu
    return (x - mu) * lax.rsqrt(var + eps) * g + b


def _block_kernel(x_ref, wqT_ref, wkT_ref, wvT_ref, wu_ref, bu_ref,
                  g1_ref, b1_ref, w1_ref, c1_ref, w2_ref, c2_ref,
                  g2_ref, b2_ref, o_ref,
                  q_sc, k_sc, v_sc, *, heads, scale, tq):
    """One transformer block; grid = (batch, query_tile)."""
    qi = pl.program_id(1)
    t = x_ref.shape[1]
    kdim = x_ref.shape[2]
    s = kdim // heads

    # --- Q/K/V projections: computed once per batch element, cached in VMEM --
    @pl.when(qi == 0)
    def _():
        xb = x_ref[0].astype(jnp.bfloat16)                      # (T, K)

        def proj_split(wT_ref):
            # Weights are pre-transposed in the wrapper, so this rhs-transposed
            # matmul yields the (K, T) slab directly on the MXU (no XLU
            # transpose of the projection).
            pT = lax.dot_general(wT_ref[...], xb,
                                 (((1,), (1,)), ((), ())),
                                 preferred_element_type=jnp.float32)  # (K, T)
            # quirky PyTorch split: (T,K) -> transpose -> (K,T) -> view(H,T,S)
            return pT.reshape(heads, t, s).astype(jnp.bfloat16)

        q_sc[...] = proj_split(wqT_ref)                          # (H, T, S)
        k_sc[...] = proj_split(wkT_ref)
        v_sc[...] = proj_split(wvT_ref)

    # --- scaled dot-product attention for this query tile, all heads --------
    # TODO(synk): for very long sequences switch to an online-softmax (flash)
    # loop over key tiles instead of materializing the full (H, tq, T) scores.
    a0 = pl.multiple_of(qi * tq, tq)
    qh = q_sc[:, pl.ds(a0, tq), :]                               # (H, tq, S) bf16
    dot = jnp.einsum('htd,hkd->htk', qh, k_sc[...],
                     preferred_element_type=jnp.float32) * scale  # (H, tq, T) f32
    dot = dot - jnp.max(dot, axis=-1, keepdims=True)              # stable softmax
    p = jnp.exp(dot)
    p = p * pl.reciprocal(jnp.sum(p, axis=-1, keepdims=True), approx=True)
    attn = jnp.einsum('htk,hkd->htd', p.astype(jnp.bfloat16), v_sc[...],
                      preferred_element_type=jnp.float32)         # (H, tq, S) f32

    # --- merge heads + unifyheads folded into per-head contractions ---------
    # merged[t, h*s+d] = attn[h, t, d]  =>  merged @ Wu == sum_h attn[h] @ Wu_h
    attn_bf = attn.astype(jnp.bfloat16)
    u = jnp.dot(attn_bf[0], wu_ref[0], preferred_element_type=jnp.float32)
    for h in range(1, heads):
        u = u + jnp.dot(attn_bf[h], wu_ref[h], preferred_element_type=jnp.float32)
    u = u + bu_ref[...]                                           # (tq, K) f32

    # --- residual + LN1 + FF(relu) + residual + LN2 (elementwise in f32) ----
    x_tile = x_ref[0, pl.ds(a0, tq), :]                           # (tq, K) f32
    h1 = _layer_norm(u + x_tile, g1_ref[...], b1_ref[...])
    # TODO(synk): for very large K on v7x (64 MiB VMEM), tile w1/w2 over the 4K
    # hidden axis with a trailing "arbitrary" reduction grid axis.
    f = jnp.maximum(
        jnp.dot(h1.astype(jnp.bfloat16), w1_ref[...],
                preferred_element_type=jnp.float32) + c1_ref[...], 0.0)
    f = jnp.dot(f.astype(jnp.bfloat16), w2_ref[...],
                preferred_element_type=jnp.float32) + c2_ref[...]
    o_ref[0] = _layer_norm(f + h1, g2_ref[...], b2_ref[...]).astype(o_ref.dtype)


# ----------------------------- wrapper ---------------------------------------

def transformer_block(x, params, heads, *, tq=128, single_buffer_weights=True):
    b, t, k = x.shape
    assert k % heads == 0
    s = k // heads
    tq = min(tq, t)
    assert t % tq == 0
    nq = t // tq
    scale = 1.0 / (k ** 0.5)

    # One-off weight preprocessing (outside the kernel):
    #  * Q/K/V weights pre-transposed -> projection emits (K, T) directly.
    #  * unifyheads weight reshaped to (heads, s, k) -> merge folds into matmuls.
    #  * all matmul weights cast to bf16 (f32 accumulation in-kernel).
    wdt = jnp.bfloat16
    wqT = params['wq'].T.astype(wdt)
    wkT = params['wk'].T.astype(wdt)
    wvT = params['wv'].T.astype(wdt)
    wu_r = params['wu'].reshape(heads, s, k).astype(wdt)
    w1 = params['w1'].astype(wdt)
    w2 = params['w2'].astype(wdt)

    def wspec(shape):
        n = len(shape)
        idx = lambda bi, qi, _n=n: (0,) * _n
        if single_buffer_weights:
            # Constant block index every step -> single buffer is enough.
            return pl.BlockSpec(shape, idx, pipeline_mode=pl.Buffered(1))
        return pl.BlockSpec(shape, idx)

    x_spec = pl.BlockSpec((1, t, k), lambda bi, qi: (bi, 0, 0))
    o_spec = pl.BlockSpec((1, tq, k), lambda bi, qi: (bi, qi, 0))

    kernel = functools.partial(_block_kernel, heads=heads, scale=scale, tq=tq)

    return pl.pallas_call(
        kernel,
        out_shape=jax.ShapeDtypeStruct((b, t, k), jnp.float32),
        grid=(b, nq),
        in_specs=[x_spec,
                  wspec((k, k)), wspec((k, k)), wspec((k, k)),      # wqT, wkT, wvT
                  wspec((heads, s, k)), wspec((1, k)),              # wu_r, bu
                  wspec((1, k)), wspec((1, k)),                     # g1, b1
                  wspec((k, 4 * k)), wspec((1, 4 * k)),             # w1, c1
                  wspec((4 * k, k)), wspec((1, k)),                 # w2, c2
                  wspec((1, k)), wspec((1, k))],                    # g2, b2
        out_specs=o_spec,
        scratch_shapes=[pltpu.VMEM((heads, t, s), jnp.bfloat16)] * 3,
        compiler_params=pltpu.CompilerParams(
            dimension_semantics=("parallel", "arbitrary"),
            # Above the 16/32 MiB default scoped limits (v5e/v6e), below v7x's
            # 64 MiB physical VMEM.  TODO(synk): raise toward ~100 MiB on
            # v5e/v6e for large K with fully-resident weights.
            vmem_limit_bytes=48 * 1024 * 1024),
    )(x, wqT, wkT, wvT, wu_r, params['bu'], params['g1'], params['b1'],
      w1, params['c1'], w2, params['c2'], params['g2'], params['b2'])


# ----------------------------- reference (plain JAX, f32) ---------------------

def reference(x, params, heads):
    b, t, k = x.shape
    s = k // heads
    q = x @ params['wq']
    kk = x @ params['wk']
    v = x @ params['wv']

    def sh(z):  # quirky PyTorch split
        return jnp.transpose(z, (0, 2, 1)).reshape(b * heads, t, s)

    q, kk, v = sh(q), sh(kk), sh(v)
    dot = jnp.einsum('bqd,bkd->bqk', q, kk) / (k ** 0.5)
    dot = jax.nn.softmax(dot, axis=2)
    out = jnp.einsum('bqk,bkd->bqd', dot, v).reshape(b, heads, t, s)
    out = jnp.transpose(out, (0, 2, 1, 3)).reshape(b, t, k)

    def ln(z, g, bb):
        mu = z.mean(-1, keepdims=True)
        var = ((z - mu) ** 2).mean(-1, keepdims=True)
        return (z - mu) / jnp.sqrt(var + 1e-5) * g + bb

    u = out @ params['wu'] + params['bu'][0]
    h = ln(u + x, params['g1'][0], params['b1'][0])
    f = jax.nn.relu(h @ params['w1'] + params['c1'][0])
    f = f @ params['w2'] + params['c2'][0]
    return ln(f + h, params['g2'][0], params['b2'][0])


# ----------------------------- main -------------------------------------------

if __name__ == "__main__":
    B, T, K, HEADS = 2, 8, 32, 4
    key = jax.random.PRNGKey(0)
    ks = jax.random.split(key, 10)
    sc = 1.0 / (K ** 0.5)

    params = {
        'wq': jax.random.normal(ks[0], (K, K), jnp.float32) * sc,
        'wk': jax.random.normal(ks[1], (K, K), jnp.float32) * sc,
        'wv': jax.random.normal(ks[2], (K, K), jnp.float32) * sc,
        'wu': jax.random.normal(ks[3], (K, K), jnp.float32) * sc,
        'bu': jax.random.normal(ks[4], (1, K), jnp.float32) * 0.01,
        'w1': jax.random.normal(ks[5], (K, 4 * K), jnp.float32) * sc,
        'c1': jax.random.normal(ks[6], (1, 4 * K), jnp.float32) * 0.01,
        'w2': jax.random.normal(ks[7], (4 * K, K), jnp.float32) * (1.0 / (4 * K) ** 0.5),
        'c2': jax.random.normal(ks[8], (1, K), jnp.float32) * 0.01,
        'g1': jnp.ones((1, K), jnp.float32),   # LayerNorm defaults
        'b1': jnp.zeros((1, K), jnp.float32),
        'g2': jnp.ones((1, K), jnp.float32),
        'b2': jnp.zeros((1, K), jnp.float32),
    }

    x = jax.random.normal(ks[9], (B, T, K), jnp.float32)

    try:
        out = jax.block_until_ready(transformer_block(x, params, HEADS))
    except Exception:
        # pipeline_mode=pl.Buffered(1) not supported on this JAX build ->
        # fall back to default (double-buffered) weight BlockSpecs.
        out = jax.block_until_ready(
            transformer_block(x, params, HEADS, single_buffer_weights=False))

    ref = jax.block_until_ready(reference(x, params, HEADS))
    assert out.shape == (B, T, K)
    # bf16 MXU operands (per perf review) -> compare against the f32 reference
    # at a correspondingly loose tolerance.
    assert jnp.allclose(out, ref, rtol=5e-2, atol=5e-2), "mismatch vs JAX reference"

    print("KERNEL_OK")
</pallas_src>

<mosaic_0001>
module attributes {stable_mosaic.version = 11 : i64} {
  func.func @_block_kernel(%arg0: i32, %arg1: i32, %arg2: memref<1x8x32xf32, #tpu.memory_space<vmem>>, %arg3: memref<32x32xbf16, #tpu.memory_space<vmem>>, %arg4: memref<32x32xbf16, #tpu.memory_space<vmem>>, %arg5: memref<32x32xbf16, #tpu.memory_space<vmem>>, %arg6: memref<4x8x32xbf16, #tpu.memory_space<vmem>>, %arg7: memref<1x32xf32, #tpu.memory_space<vmem>>, %arg8: memref<1x32xf32, #tpu.memory_space<vmem>>, %arg9: memref<1x32xf32, #tpu.memory_space<vmem>>, %arg10: memref<32x128xbf16, #tpu.memory_space<vmem>>, %arg11: memref<1x128xf32, #tpu.memory_space<vmem>>, %arg12: memref<128x32xbf16, #tpu.memory_space<vmem>>, %arg13: memref<1x32xf32, #tpu.memory_space<vmem>>, %arg14: memref<1x32xf32, #tpu.memory_space<vmem>>, %arg15: memref<1x32xf32, #tpu.memory_space<vmem>>, %arg16: memref<1x8x32xf32, #tpu.memory_space<vmem>>, %arg17: memref<4x8x8xbf16, #tpu.memory_space<vmem>>, %arg18: memref<4x8x8xbf16, #tpu.memory_space<vmem>>, %arg19: memref<4x8x8xbf16, #tpu.memory_space<vmem>>) attributes {dimension_semantics = [#tpu.dimension_semantics<parallel>, #tpu.dimension_semantics<arbitrary>], iteration_bounds = array<i64: 2, 1>, scalar_prefetch = 0 : i64, scratch_operands = 3 : i64, tpu.core_type = #tpu.core_type<tc>, window_params = [{transform_indices = @transform_0, window_bounds = array<i64: 1, 8, 32>}, {pipeline_mode = #tpu.pipeline_mode<synchronous>, transform_indices = @transform_1, window_bounds = array<i64: 32, 32>}, {pipeline_mode = #tpu.pipeline_mode<synchronous>, transform_indices = @transform_2, window_bounds = array<i64: 32, 32>}, {pipeline_mode = #tpu.pipeline_mode<synchronous>, transform_indices = @transform_3, window_bounds = array<i64: 32, 32>}, {pipeline_mode = #tpu.pipeline_mode<synchronous>, transform_indices = @transform_4, window_bounds = array<i64: 4, 8, 32>}, {pipeline_mode = #tpu.pipeline_mode<synchronous>, transform_indices = @transform_5, window_bounds = array<i64: 1, 32>}, {pipeline_mode = #tpu.pipeline_mode<synchronous>, transform_indices = @transform_6, window_bounds = array<i64: 1, 32>}, {pipeline_mode = #tpu.pipeline_mode<synchronous>, transform_indices = @transform_7, window_bounds = array<i64: 1, 32>}, {pipeline_mode = #tpu.pipeline_mode<synchronous>, transform_indices = @transform_8, window_bounds = array<i64: 32, 128>}, {pipeline_mode = #tpu.pipeline_mode<synchronous>, transform_indices = @transform_9, window_bounds = array<i64: 1, 128>}, {pipeline_mode = #tpu.pipeline_mode<synchronous>, transform_indices = @transform_10, window_bounds = array<i64: 128, 32>}, {pipeline_mode = #tpu.pipeline_mode<synchronous>, transform_indices = @transform_11, window_bounds = array<i64: 1, 32>}, {pipeline_mode = #tpu.pipeline_mode<synchronous>, transform_indices = @transform_12, window_bounds = array<i64: 1, 32>}, {pipeline_mode = #tpu.pipeline_mode<synchronous>, transform_indices = @transform_13, window_bounds = array<i64: 1, 32>}, {transform_indices = @transform_14, window_bounds = array<i64: 1, 8, 32>}]} {
    %c0_i32 = arith.constant 0 : i32
    %0 = arith.cmpi eq, %arg1, %c0_i32 : i32
    %1 = arith.extui %0 : i1 to i32
    %c0_i32_0 = arith.constant 0 : i32
    %2 = arith.cmpi ne, %1, %c0_i32_0 : i32
    scf.if %2 {
      %c0_61 = arith.constant 0 : index
      %c0_62 = arith.constant 0 : index
      %c0_63 = arith.constant 0 : index
      %121 = vector.load %arg2[%c0_61, %c0_62, %c0_63] : memref<1x8x32xf32, #tpu.memory_space<vmem>>, vector<1x8x32xf32>
      %122 = vector.shape_cast %121 : vector<1x8x32xf32> to vector<8x32xf32>
      %123 = arith.truncf %122 : vector<8x32xf32> to vector<8x32xbf16>
      %c0_64 = arith.constant 0 : index
      %c0_65 = arith.constant 0 : index
      %124 = vector.load %arg3[%c0_64, %c0_65] : memref<32x32xbf16, #tpu.memory_space<vmem>>, vector<32x32xbf16>
      %cst_66 = arith.constant dense<0.000000e+00> : vector<32x8xf32>
      %125 = tpu.matmul %124, %123, %cst_66 {dimension_numbers = #tpu.dot_dimension_numbers<[1], [1], [0], [0], [0, 0, 1, 0], [], []>} : vector<32x32xbf16>, vector<8x32xbf16>, vector<32x8xf32> -> vector<32x8xf32>
      %126 = vector.shape_cast %125 : vector<32x8xf32> to vector<4x8x8xf32>
      %127 = arith.truncf %126 : vector<4x8x8xf32> to vector<4x8x8xbf16>
      %c0_67 = arith.constant 0 : index
      %c0_68 = arith.constant 0 : index
      %c0_69 = arith.constant 0 : index
      %128 = vector.load %arg17[%c0_67, %c0_68, %c0_69] : memref<4x8x8xbf16, #tpu.memory_space<vmem>>, vector<4x8x8xbf16>
      tpu.vector_store %arg17[%c0_67, %c0_68, %c0_69], %127 {strides = array<i32>} : memref<4x8x8xbf16, #tpu.memory_space<vmem>>, vector<4x8x8xbf16>,
      %c0_70 = arith.constant 0 : index
      %c0_71 = arith.constant 0 : index
      %129 = vector.load %arg4[%c0_70, %c0_71] : memref<32x32xbf16, #tpu.memory_space<vmem>>, vector<32x32xbf16>
      %cst_72 = arith.constant dense<0.000000e+00> : vector<32x8xf32>
      %130 = tpu.matmul %129, %123, %cst_72 {dimension_numbers = #tpu.dot_dimension_numbers<[1], [1], [0], [0], [0, 0, 1, 0], [], []>} : vector<32x32xbf16>, vector<8x32xbf16>, vector<32x8xf32> -> vector<32x8xf32>
      %131 = vector.shape_cast %130 : vector<32x8xf32> to vector<4x8x8xf32>
      %132 = arith.truncf %131 : vector<4x8x8xf32> to vector<4x8x8xbf16>
      %c0_73 = arith.constant 0 : index
      %c0_74 = arith.constant 0 : index
      %c0_75 = arith.constant 0 : index
      %133 = vector.load %arg18[%c0_73, %c0_74, %c0_75] : memref<4x8x8xbf16, #tpu.memory_space<vmem>>, vector<4x8x8xbf16>
      tpu.vector_store %arg18[%c0_73, %c0_74, %c0_75], %132 {strides = array<i32>} : memref<4x8x8xbf16, #tpu.memory_space<vmem>>, vector<4x8x8xbf16>,
      %c0_76 = arith.constant 0 : index
      %c0_77 = arith.constant 0 : index
      %134 = vector.load %arg5[%c0_76, %c0_77] : memref<32x32xbf16, #tpu.memory_space<vmem>>, vector<32x32xbf16>
      %cst_78 = arith.constant dense<0.000000e+00> : vector<32x8xf32>
      %135 = tpu.matmul %134, %123, %cst_78 {dimension_numbers = #tpu.dot_dimension_numbers<[1], [1], [0], [0], [0, 0, 1, 0], [], []>} : vector<32x32xbf16>, vector<8x32xbf16>, vector<32x8xf32> -> vector<32x8xf32>
      %136 = vector.shape_cast %135 : vector<32x8xf32> to vector<4x8x8xf32>
      %137 = arith.truncf %136 : vector<4x8x8xf32> to vector<4x8x8xbf16>
      %c0_79 = arith.constant 0 : index
      %c0_80 = arith.constant 0 : index
      %c0_81 = arith.constant 0 : index
      %138 = vector.load %arg19[%c0_79, %c0_80, %c0_81] : memref<4x8x8xbf16, #tpu.memory_space<vmem>>, vector<4x8x8xbf16>
      tpu.vector_store %arg19[%c0_79, %c0_80, %c0_81], %137 {strides = array<i32>} : memref<4x8x8xbf16, #tpu.memory_space<vmem>>, vector<4x8x8xbf16>,
    } else {
    }
    %c8_i32 = arith.constant 8 : i32
    %3 = arith.muli %arg1, %c8_i32 : i32
    %4 = tpu.assume_multiple %3, 8 : i32
    %c0 = arith.constant 0 : index
    %5 = arith.index_cast %4 : i32 to index
    %c0_1 = arith.constant 0 : index
    %6 = vector.load %arg17[%c0, %5, %c0_1] : memref<4x8x8xbf16, #tpu.memory_space<vmem>>, vector<4x8x8xbf16>
    %c0_2 = arith.constant 0 : index
    %c0_3 = arith.constant 0 : index
    %c0_4 = arith.constant 0 : index
    %7 = vector.load %arg18[%c0_2, %c0_3, %c0_4] : memref<4x8x8xbf16, #tpu.memory_space<vmem>>, vector<4x8x8xbf16>
    "tpu.trace_start"() <{level = 10 : i32, message = "htd,hkd->htk"}> : () -> ()
    %cst = arith.constant dense<0.000000e+00> : vector<4x8x8xf32>
    %8 = tpu.matmul %6, %7, %cst {dimension_numbers = #tpu.dot_dimension_numbers<[2], [2], [1], [1], [0, 0, 0, 1, 1, 1], [0], [0]>} : vector<4x8x8xbf16>, vector<4x8x8xbf16>, vector<4x8x8xf32> -> vector<4x8x8xf32>
    "tpu.trace_stop"() : () -> ()
    %cst_5 = arith.constant 0.176776692 : f32
    %9 = vector.broadcast %cst_5 : f32 to vector<4x8x8xf32>
    %10 = arith.mulf %8, %9 : vector<4x8x8xf32>
    %cst_6 = arith.constant dense<0xFF800000> : vector<4x8xf32>
    %11 = vector.multi_reduction <maximumf>, %10, %cst_6 [2] : vector<4x8x8xf32> to vector<4x8xf32>
    %12 = vector.shape_cast %11 : vector<4x8xf32> to vector<4x8x1xf32>
    %13 = vector.broadcast %12 : vector<4x8x1xf32> to vector<4x8x8xf32>
    %14 = arith.subf %10, %13 : vector<4x8x8xf32>
    %15 = math.exp %14 : vector<4x8x8xf32>
    %cst_7 = arith.constant dense<0.000000e+00> : vector<4x8xf32>
    %16 = vector.multi_reduction <add>, %15, %cst_7 [2] : vector<4x8x8xf32> to vector<4x8xf32>
    %17 = vector.shape_cast %16 : vector<4x8xf32> to vector<4x8x1xf32>
    %18 = tpu.reciprocal %17 {approx = true} : vector<4x8x1xf32> -> vector<4x8x1xf32>
    %19 = vector.broadcast %18 : vector<4x8x1xf32> to vector<4x8x8xf32>
    %20 = arith.mulf %15, %19 : vector<4x8x8xf32>
    %21 = arith.truncf %20 : vector<4x8x8xf32> to vector<4x8x8xbf16>
    %c0_8 = arith.constant 0 : index
    %c0_9 = arith.constant 0 : index
    %c0_10 = arith.constant 0 : index
    %22 = vector.load %arg19[%c0_8, %c0_9, %c0_10] : memref<4x8x8xbf16, #tpu.memory_space<vmem>>, vector<4x8x8xbf16>
    "tpu.trace_start"() <{level = 10 : i32, message = "htk,hkd->htd"}> : () -> ()
    %cst_11 = arith.constant dense<0.000000e+00> : vector<4x8x8xf32>
    %23 = tpu.matmul %21, %22, %cst_11 {dimension_numbers = #tpu.dot_dimension_numbers<[2], [1], [1], [2], [0, 0, 0, 1, 1, 2], [0], [0]>} : vector<4x8x8xbf16>, vector<4x8x8xbf16>, vector<4x8x8xf32> -> vector<4x8x8xf32>
    "tpu.trace_stop"() : () -> ()
    %24 = arith.truncf %23 : vector<4x8x8xf32> to vector<4x8x8xbf16>
    %25 = vector.extract_strided_slice %24 {offsets = [0, 0, 0], sizes = [1, 8, 8], strides = [1, 1, 1]} : vector<4x8x8xbf16> to vector<1x8x8xbf16>
    %26 = vector.shape_cast %25 : vector<1x8x8xbf16> to vector<8x8xbf16>
    %c0_12 = arith.constant 0 : index
    %c0_13 = arith.constant 0 : index
    %c0_14 = arith.constant 0 : index
    %27 = vector.load %arg6[%c0_12, %c0_13, %c0_14] : memref<4x8x32xbf16, #tpu.memory_space<vmem>>, vector<1x8x32xbf16>
    %28 = vector.shape_cast %27 : vector<1x8x32xbf16> to vector<8x32xbf16>
    %cst_15 = arith.constant dense<0.000000e+00> : vector<8x32xf32>
    %29 = tpu.matmul %26, %28, %cst_15 {dimension_numbers = #tpu.dot_dimension_numbers<[1], [0], [0], [1], [0, 0, 1, 1], [], []>} : vector<8x8xbf16>, vector<8x32xbf16>, vector<8x32xf32> -> vector<8x32xf32>
    %30 = vector.extract_strided_slice %24 {offsets = [1, 0, 0], sizes = [1, 8, 8], strides = [1, 1, 1]} : vector<4x8x8xbf16> to vector<1x8x8xbf16>
    %31 = vector.shape_cast %30 : vector<1x8x8xbf16> to vector<8x8xbf16>
    %c1 = arith.constant 1 : index
    %c0_16 = arith.constant 0 : index
    %c0_17 = arith.constant 0 : index
    %32 = vector.load %arg6[%c1, %c0_16, %c0_17] : memref<4x8x32xbf16, #tpu.memory_space<vmem>>, vector<1x8x32xbf16>
    %33 = vector.shape_cast %32 : vector<1x8x32xbf16> to vector<8x32xbf16>
    %cst_18 = arith.constant dense<0.000000e+00> : vector<8x32xf32>
    %34 = tpu.matmul %31, %33, %cst_18 {dimension_numbers = #tpu.dot_dimension_numbers<[1], [0], [0], [1], [0, 0, 1, 1], [], []>} : vector<8x8xbf16>, vector<8x32xbf16>, vector<8x32xf32> -> vector<8x32xf32>
    %35 = arith.addf %29, %34 : vector<8x32xf32>
    %36 = vector.extract_strided_slice %24 {offsets = [2, 0, 0], sizes = [1, 8, 8], strides = [1, 1, 1]} : vector<4x8x8xbf16> to vector<1x8x8xbf16>
    %37 = vector.shape_cast %36 : vector<1x8x8xbf16> to vector<8x8xbf16>
    %c2 = arith.constant 2 : index
    %c0_19 = arith.constant 0 : index
    %c0_20 = arith.constant 0 : index
    %38 = vector.load %arg6[%c2, %c0_19, %c0_20] : memref<4x8x32xbf16, #tpu.memory_space<vmem>>, vector<1x8x32xbf16>
    %39 = vector.shape_cast %38 : vector<1x8x32xbf16> to vector<8x32xbf16>
    %cst_21 = arith.constant dense<0.000000e+00> : vector<8x32xf32>
    %40 = tpu.matmul %37, %39, %cst_21 {dimension_numbers = #tpu.dot_dimension_numbers<[1], [0], [0], [1], [0, 0, 1, 1], [], []>} : vector<8x8xbf16>, vector<8x32xbf16>, vector<8x32xf32> -> vector<8x32xf32>
    %41 = arith.addf %35, %40 : vector<8x32xf32>
    %42 = vector.extract_strided_slice %24 {offsets = [3, 0, 0], sizes = [1, 8, 8], strides = [1, 1, 1]} : vector<4x8x8xbf16> to vector<1x8x8xbf16>
    %43 = vector.shape_cast %42 : vector<1x8x8xbf16> to vector<8x8xbf16>
    %c3 = arith.constant 3 : index
    %c0_22 = arith.constant 0 : index
    %c0_23 = arith.constant 0 : index
    %44 = vector.load %arg6[%c3, %c0_22, %c0_23] : memref<4x8x32xbf16, #tpu.memory_space<vmem>>, vector<1x8x32xbf16>
    %45 = vector.shape_cast %44 : vector<1x8x32xbf16> to vector<8x32xbf16>
    %cst_24 = arith.constant dense<0.000000e+00> : vector<8x32xf32>
    %46 = tpu.matmul %43, %45, %cst_24 {dimension_numbers = #tpu.dot_dimension_numbers<[1], [0], [0], [1], [0, 0, 1, 1], [], []>} : vector<8x8xbf16>, vector<8x32xbf16>, vector<8x32xf32> -> vector<8x32xf32>
    %47 = arith.addf %41, %46 : vector<8x32xf32>
    %c0_25 = arith.constant 0 : index
    %c0_26 = arith.constant 0 : index
    %48 = vector.load %arg7[%c0_25, %c0_26] : memref<1x32xf32, #tpu.memory_space<vmem>>, vector<1x32xf32>
    %49 = vector.broadcast %48 : vector<1x32xf32> to vector<8x32xf32>
    %50 = arith.addf %47, %49 : vector<8x32xf32>
    %c0_27 = arith.constant 0 : index
    %51 = arith.index_cast %4 : i32 to index
    %c0_28 = arith.constant 0 : index
    %52 = vector.load %arg2[%c0_27, %51, %c0_28] : memref<1x8x32xf32, #tpu.memory_space<vmem>>, vector<1x8x32xf32>
    %53 = vector.shape_cast %52 : vector<1x8x32xf32> to vector<8x32xf32>
    %54 = arith.addf %50, %53 : vector<8x32xf32>
    %c0_29 = arith.constant 0 : index
    %c0_30 = arith.constant 0 : index
    %55 = vector.load %arg8[%c0_29, %c0_30] : memref<1x32xf32, #tpu.memory_space<vmem>>, vector<1x32xf32>
    %c0_31 = arith.constant 0 : index
    %c0_32 = arith.constant 0 : index
    %56 = vector.load %arg9[%c0_31, %c0_32] : memref<1x32xf32, #tpu.memory_space<vmem>>, vector<1x32xf32>
    %cst_33 = arith.constant dense<0.000000e+00> : vector<8xf32>
    %57 = vector.multi_reduction <add>, %54, %cst_33 [1] : vector<8x32xf32> to vector<8xf32>
    %58 = vector.shape_cast %57 : vector<8xf32> to vector<8x1xf32>
    %cst_34 = arith.constant 3.200000e+01 : f32
    %59 = vector.broadcast %cst_34 : f32 to vector<8x1xf32>
    %60 = arith.divf %58, %59 : vector<8x1xf32>
    %61 = arith.mulf %54, %54 : vector<8x32xf32>
    %cst_35 = arith.constant dense<0.000000e+00> : vector<8xf32>
    %62 = vector.multi_reduction <add>, %61, %cst_35 [1] : vector<8x32xf32> to vector<8xf32>
    %63 = vector.shape_cast %62 : vector<8xf32> to vector<8x1xf32>
    %cst_36 = arith.constant 3.200000e+01 : f32
    %64 = vector.broadcast %cst_36 : f32 to vector<8x1xf32>
    %65 = arith.divf %63, %64 : vector<8x1xf32>
    %66 = arith.mulf %60, %60 : vector<8x1xf32>
    %67 = arith.subf %65, %66 : vector<8x1xf32>
    %68 = vector.broadcast %60 : vector<8x1xf32> to vector<8x32xf32>
    %69 = arith.subf %54, %68 : vector<8x32xf32>
    %cst_37 = arith.constant 9.99999974E-6 : f32
    %70 = vector.broadcast %cst_37 : f32 to vector<8x1xf32>
    %71 = arith.addf %67, %70 : vector<8x1xf32>
    %72 = math.rsqrt %71 : vector<8x1xf32>
    %73 = vector.broadcast %72 : vector<8x1xf32> to vector<8x32xf32>
    %74 = arith.mulf %69, %73 : vector<8x32xf32>
    %75 = vector.broadcast %55 : vector<1x32xf32> to vector<8x32xf32>
    %76 = arith.mulf %74, %75 : vector<8x32xf32>
    %77 = vector.broadcast %56 : vector<1x32xf32> to vector<8x32xf32>
    %78 = arith.addf %76, %77 : vector<8x32xf32>
    %79 = arith.truncf %78 : vector<8x32xf32> to vector<8x32xbf16>
    %c0_38 = arith.constant 0 : index
    %c0_39 = arith.constant 0 : index
    %80 = vector.load %arg10[%c0_38, %c0_39] : memref<32x128xbf16, #tpu.memory_space<vmem>>, vector<32x128xbf16>
    %cst_40 = arith.constant dense<0.000000e+00> : vector<8x128xf32>
    %81 = tpu.matmul %79, %80, %cst_40 {dimension_numbers = #tpu.dot_dimension_numbers<[1], [0], [0], [1], [0, 0, 1, 1], [], []>} : vector<8x32xbf16>, vector<32x128xbf16>, vector<8x128xf32> -> vector<8x128xf32>
    %c0_41 = arith.constant 0 : index
    %c0_42 = arith.constant 0 : index
    %82 = vector.load %arg11[%c0_41, %c0_42] : memref<1x128xf32, #tpu.memory_space<vmem>>, vector<1x128xf32>
    %83 = vector.broadcast %82 : vector<1x128xf32> to vector<8x128xf32>
    %84 = arith.addf %81, %83 : vector<8x128xf32>
    %cst_43 = arith.constant 0.000000e+00 : f32
    %85 = vector.broadcast %cst_43 : f32 to vector<8x128xf32>
    %86 = arith.maximumf %84, %85 : vector<8x128xf32>
    %87 = arith.truncf %86 : vector<8x128xf32> to vector<8x128xbf16>
    %c0_44 = arith.constant 0 : index
    %c0_45 = arith.constant 0 : index
    %88 = vector.load %arg12[%c0_44, %c0_45] : memref<128x32xbf16, #tpu.memory_space<vmem>>, vector<128x32xbf16>
    %cst_46 = arith.constant dense<0.000000e+00> : vector<8x32xf32>
    %89 = tpu.matmul %87, %88, %cst_46 {dimension_numbers = #tpu.dot_dimension_numbers<[1], [0], [0], [1], [0, 0, 1, 1], [], []>} : vector<8x128xbf16>, vector<128x32xbf16>, vector<8x32xf32> -> vector<8x32xf32>
    %c0_47 = arith.constant 0 : index
    %c0_48 = arith.constant 0 : index
    %90 = vector.load %arg13[%c0_47, %c0_48] : memref<1x32xf32, #tpu.memory_space<vmem>>, vector<1x32xf32>
    %91 = vector.broadcast %90 : vector<1x32xf32> to vector<8x32xf32>
    %92 = arith.addf %89, %91 : vector<8x32xf32>
    %93 = arith.addf %92, %78 : vector<8x32xf32>
    %c0_49 = arith.constant 0 : index
    %c0_50 = arith.constant 0 : index
    %94 = vector.load %arg14[%c0_49, %c0_50] : memref<1x32xf32, #tpu.memory_space<vmem>>, vector<1x32xf32>
    %c0_51 = arith.constant 0 : index
    %c0_52 = arith.constant 0 : index
    %95 = vector.load %arg15[%c0_51, %c0_52] : memref<1x32xf32, #tpu.memory_space<vmem>>, vector<1x32xf32>
    %cst_53 = arith.constant dense<0.000000e+00> : vector<8xf32>
    %96 = vector.multi_reduction <add>, %93, %cst_53 [1] : vector<8x32xf32> to vector<8xf32>
    %97 = vector.shape_cast %96 : vector<8xf32> to vector<8x1xf32>
    %cst_54 = arith.constant 3.200000e+01 : f32
    %98 = vector.broadcast %cst_54 : f32 to vector<8x1xf32>
    %99 = arith.divf %97, %98 : vector<8x1xf32>
    %100 = arith.mulf %93, %93 : vector<8x32xf32>
    %cst_55 = arith.constant dense<0.000000e+00> : vector<8xf32>
    %101 = vector.multi_reduction <add>, %100, %cst_55 [1] : vector<8x32xf32> to vector<8xf32>
    %102 = vector.shape_cast %101 : vector<8xf32> to vector<8x1xf32>
    %cst_56 = arith.constant 3.200000e+01 : f32
    %103 = vector.broadcast %cst_56 : f32 to vector<8x1xf32>
    %104 = arith.divf %102, %103 : vector<8x1xf32>
    %105 = arith.mulf %99, %99 : vector<8x1xf32>
    %106 = arith.subf %104, %105 : vector<8x1xf32>
    %107 = vector.broadcast %99 : vector<8x1xf32> to vector<8x32xf32>
    %108 = arith.subf %93, %107 : vector<8x32xf32>
    %cst_57 = arith.constant 9.99999974E-6 : f32
    %109 = vector.broadcast %cst_57 : f32 to vector<8x1xf32>
    %110 = arith.addf %106, %109 : vector<8x1xf32>
    %111 = math.rsqrt %110 : vector<8x1xf32>
    %112 = vector.broadcast %111 : vector<8x1xf32> to vector<8x32xf32>
    %113 = arith.mulf %108, %112 : vector<8x32xf32>
    %114 = vector.broadcast %94 : vector<1x32xf32> to vector<8x32xf32>
    %115 = arith.mulf %113, %114 : vector<8x32xf32>
    %116 = vector.broadcast %95 : vector<1x32xf32> to vector<8x32xf32>
    %117 = arith.addf %115, %116 : vector<8x32xf32>
    %c0_58 = arith.constant 0 : index
    %c0_59 = arith.constant 0 : index
    %c0_60 = arith.constant 0 : index
    %118 = vector.load %arg16[%c0_58, %c0_59, %c0_60] : memref<1x8x32xf32, #tpu.memory_space<vmem>>, vector<1x8x32xf32>
    %119 = vector.shape_cast %118 : vector<1x8x32xf32> to vector<8x32xf32>
    %120 = vector.shape_cast %117 : vector<8x32xf32> to vector<1x8x32xf32>
    tpu.vector_store %arg16[%c0_58, %c0_59, %c0_60], %120 {strides = array<i32>} : memref<1x8x32xf32, #tpu.memory_space<vmem>>, vector<1x8x32xf32>,
    return
  }
  func.func @transform_0(%arg0: i32, %arg1: i32) -> (i32, i32, i32) {
    %c0_i32 = arith.constant 0 : i32
    %c0_i32_0 = arith.constant 0 : i32
    %c0_i32_1 = arith.constant 0 : i32
    return %arg0, %c0_i32, %c0_i32_0 : i32, i32, i32
  }
  func.func @transform_1(%arg0: i32, %arg1: i32) -> (i32, i32) {
    %c0_i32 = arith.constant 0 : i32
    %c0_i32_0 = arith.constant 0 : i32
    %c0_i32_1 = arith.constant 0 : i32
    return %c0_i32, %c0_i32_0 : i32, i32
  }
  func.func @transform_2(%arg0: i32, %arg1: i32) -> (i32, i32) {
    %c0_i32 = arith.constant 0 : i32
    %c0_i32_0 = arith.constant 0 : i32
    %c0_i32_1 = arith.constant 0 : i32
    return %c0_i32, %c0_i32_0 : i32, i32
  }
  func.func @transform_3(%arg0: i32, %arg1: i32) -> (i32, i32) {
    %c0_i32 = arith.constant 0 : i32
    %c0_i32_0 = arith.constant 0 : i32
    %c0_i32_1 = arith.constant 0 : i32
    return %c0_i32, %c0_i32_0 : i32, i32
  }
  func.func @transform_4(%arg0: i32, %arg1: i32) -> (i32, i32, i32) {
    %c0_i32 = arith.constant 0 : i32
    %c0_i32_0 = arith.constant 0 : i32
    %c0_i32_1 = arith.constant 0 : i32
    %c0_i32_2 = arith.constant 0 : i32
    return %c0_i32, %c0_i32_0, %c0_i32_1 : i32, i32, i32
  }
  func.func @transform_5(%arg0: i32, %arg1: i32) -> (i32, i32) {
    %c0_i32 = arith.constant 0 : i32
    %c0_i32_0 = arith.constant 0 : i32
    %c0_i32_1 = arith.constant 0 : i32
    return %c0_i32, %c0_i32_0 : i32, i32
  }
  func.func @transform_6(%arg0: i32, %arg1: i32) -> (i32, i32) {
    %c0_i32 = arith.constant 0 : i32
    %c0_i32_0 = arith.constant 0 : i32
    %c0_i32_1 = arith.constant 0 : i32
    return %c0_i32, %c0_i32_0 : i32, i32
  }
  func.func @transform_7(%arg0: i32, %arg1: i32) -> (i32, i32) {
    %c0_i32 = arith.constant 0 : i32
    %c0_i32_0 = arith.constant 0 : i32
    %c0_i32_1 = arith.constant 0 : i32
    return %c0_i32, %c0_i32_0 : i32, i32
  }
  func.func @transform_8(%arg0: i32, %arg1: i32) -> (i32, i32) {
    %c0_i32 = arith.constant 0 : i32
    %c0_i32_0 = arith.constant 0 : i32
    %c0_i32_1 = arith.constant 0 : i32
    return %c0_i32, %c0_i32_0 : i32, i32
  }
  func.func @transform_9(%arg0: i32, %arg1: i32) -> (i32, i32) {
    %c0_i32 = arith.constant 0 : i32
    %c0_i32_0 = arith.constant 0 : i32
    %c0_i32_1 = arith.constant 0 : i32
    return %c0_i32, %c0_i32_0 : i32, i32
  }
  func.func @transform_10(%arg0: i32, %arg1: i32) -> (i32, i32) {
    %c0_i32 = arith.constant 0 : i32
    %c0_i32_0 = arith.constant 0 : i32
    %c0_i32_1 = arith.constant 0 : i32
    return %c0_i32, %c0_i32_0 : i32, i32
  }
  func.func @transform_11(%arg0: i32, %arg1: i32) -> (i32, i32) {
    %c0_i32 = arith.constant 0 : i32
    %c0_i32_0 = arith.constant 0 : i32
    %c0_i32_1 = arith.constant 0 : i32
    return %c0_i32, %c0_i32_0 : i32, i32
  }
  func.func @transform_12(%arg0: i32, %arg1: i32) -> (i32, i32) {
    %c0_i32 = arith.constant 0 : i32
    %c0_i32_0 = arith.constant 0 : i32
    %c0_i32_1 = arith.constant 0 : i32
    return %c0_i32, %c0_i32_0 : i32, i32
  }
  func.func @transform_13(%arg0: i32, %arg1: i32) -> (i32, i32) {
    %c0_i32 = arith.constant 0 : i32
    %c0_i32_0 = arith.constant 0 : i32
    %c0_i32_1 = arith.constant 0 : i32
    return %c0_i32, %c0_i32_0 : i32, i32
  }
  func.func @transform_14(%arg0: i32, %arg1: i32) -> (i32, i32, i32) {
    %c0_i32 = arith.constant 0 : i32
    %c0_i32_0 = arith.constant 0 : i32
    return %arg0, %arg1, %c0_i32 : i32, i32, i32
  }
}

module attributes {stable_mosaic.version = 11 : i64} {
  func.func @_block_kernel(%arg0: i32, %arg1: i32, %arg2: memref<1x8x32xf32, #tpu.memory_space<vmem>>, %arg3: memref<32x32xbf16, #tpu.memory_space<vmem>>, %arg4: memref<32x32xbf16, #tpu.memory_space<vmem>>, %arg5: memref<32x32xbf16, #tpu.memory_space<vmem>>, %arg6: memref<4x8x32xbf16, #tpu.memory_space<vmem>>, %arg7: memref<1x32xf32, #tpu.memory_space<vmem>>, %arg8: memref<1x32xf32, #tpu.memory_space<vmem>>, %arg9: memref<1x32xf32, #tpu.memory_space<vmem>>, %arg10: memref<32x128xbf16, #tpu.memory_space<vmem>>, %arg11: memref<1x128xf32, #tpu.memory_space<vmem>>, %arg12: memref<128x32xbf16, #tpu.memory_space<vmem>>, %arg13: memref<1x32xf32, #tpu.memory_space<vmem>>, %arg14: memref<1x32xf32, #tpu.memory_space<vmem>>, %arg15: memref<1x32xf32, #tpu.memory_space<vmem>>, %arg16: memref<1x8x32xf32, #tpu.memory_space<vmem>>, %arg17: memref<4x8x8xbf16, #tpu.memory_space<vmem>>, %arg18: memref<4x8x8xbf16, #tpu.memory_space<vmem>>, %arg19: memref<4x8x8xbf16, #tpu.memory_space<vmem>>) attributes {dimension_semantics = [#tpu.dimension_semantics<parallel>, #tpu.dimension_semantics<arbitrary>], iteration_bounds = array<i64: 2, 1>, scalar_prefetch = 0 : i64, scratch_operands = 3 : i64, tpu.core_type = #tpu.core_type<tc>, window_params = [{transform_indices = @transform_0, window_bounds = array<i64: 1, 8, 32>}, {pipeline_mode = #tpu.pipeline_mode<synchronous>, transform_indices = @transform_1, window_bounds = array<i64: 32, 32>}, {pipeline_mode = #tpu.pipeline_mode<synchronous>, transform_indices = @transform_2, window_bounds = array<i64: 32, 32>}, {pipeline_mode = #tpu.pipeline_mode<synchronous>, transform_indices = @transform_3, window_bounds = array<i64: 32, 32>}, {pipeline_mode = #tpu.pipeline_mode<synchronous>, transform_indices = @transform_4, window_bounds = array<i64: 4, 8, 32>}, {pipeline_mode = #tpu.pipeline_mode<synchronous>, transform_indices = @transform_5, window_bounds = array<i64: 1, 32>}, {pipeline_mode = #tpu.pipeline_mode<synchronous>, transform_indices = @transform_6, window_bounds = array<i64: 1, 32>}, {pipeline_mode = #tpu.pipeline_mode<synchronous>, transform_indices = @transform_7, window_bounds = array<i64: 1, 32>}, {pipeline_mode = #tpu.pipeline_mode<synchronous>, transform_indices = @transform_8, window_bounds = array<i64: 32, 128>}, {pipeline_mode = #tpu.pipeline_mode<synchronous>, transform_indices = @transform_9, window_bounds = array<i64: 1, 128>}, {pipeline_mode = #tpu.pipeline_mode<synchronous>, transform_indices = @transform_10, window_bounds = array<i64: 128, 32>}, {pipeline_mode = #tpu.pipeline_mode<synchronous>, transform_indices = @transform_11, window_bounds = array<i64: 1, 32>}, {pipeline_mode = #tpu.pipeline_mode<synchronous>, transform_indices = @transform_12, window_bounds = array<i64: 1, 32>}, {pipeline_mode = #tpu.pipeline_mode<synchronous>, transform_indices = @transform_13, window_bounds = array<i64: 1, 32>}, {transform_indices = @transform_14, window_bounds = array<i64: 1, 8, 32>}]} {
    %c0_i32 = arith.constant 0 : i32
    %0 = arith.cmpi eq, %arg1, %c0_i32 : i32
    %1 = arith.extui %0 : i1 to i32
    %c0_i32_0 = arith.constant 0 : i32
    %2 = arith.cmpi ne, %1, %c0_i32_0 : i32
    scf.if %2 {
      %c0_61 = arith.constant 0 : index
      %c0_62 = arith.constant 0 : index
      %c0_63 = arith.constant 0 : index
      %121 = vector.load %arg2[%c0_61, %c0_62, %c0_63] : memref<1x8x32xf32, #tpu.memory_space<vmem>>, vector<1x8x32xf32>
      %122 = vector.shape_cast %121 : vector<1x8x32xf32> to vector<8x32xf32>
      %123 = arith.truncf %122 : vector<8x32xf32> to vector<8x32xbf16>
      %c0_64 = arith.constant 0 : index
      %c0_65 = arith.constant 0 : index
      %124 = vector.load %arg3[%c0_64, %c0_65] : memref<32x32xbf16, #tpu.memory_space<vmem>>, vector<32x32xbf16>
      %cst_66 = arith.constant dense<0.000000e+00> : vector<32x8xf32>
      %125 = tpu.matmul %124, %123, %cst_66 {dimension_numbers = #tpu.dot_dimension_numbers<[1], [1], [0], [0], [0, 0, 1, 0], [], []>} : vector<32x32xbf16>, vector<8x32xbf16>, vector<32x8xf32> -> vector<32x8xf32>
      %126 = vector.shape_cast %125 : vector<32x8xf32> to vector<4x8x8xf32>
      %127 = arith.truncf %126 : vector<4x8x8xf32> to vector<4x8x8xbf16>
      %c0_67 = arith.constant 0 : index
      %c0_68 = arith.constant 0 : index
      %c0_69 = arith.constant 0 : index
      %128 = vector.load %arg17[%c0_67, %c0_68, %c0_69] : memref<4x8x8xbf16, #tpu.memory_space<vmem>>, vector<4x8x8xbf16>
      tpu.vector_store %arg17[%c0_67, %c0_68, %c0_69], %127 {strides = array<i32>} : memref<4x8x8xbf16, #tpu.memory_space<vmem>>, vector<4x8x8xbf16>,
      %c0_70 = arith.constant 0 : index
      %c0_71 = arith.constant 0 : index
      %129 = vector.load %arg4[%c0_70, %c0_71] : memref<32x32xbf16, #tpu.memory_space<vmem>>, vector<32x32xbf16>
      %cst_72 = arith.constant dense<0.000000e+00> : vector<32x8xf32>
      %130 = tpu.matmul %129, %123, %cst_72 {dimension_numbers = #tpu.dot_dimension_numbers<[1], [1], [0], [0], [0, 0, 1, 0], [], []>} : vector<32x32xbf16>, vector<8x32xbf16>, vector<32x8xf32> -> vector<32x8xf32>
      %131 = vector.shape_cast %130 : vector<32x8xf32> to vector<4x8x8xf32>
      %132 = arith.truncf %131 : vector<4x8x8xf32> to vector<4x8x8xbf16>
      %c0_73 = arith.constant 0 : index
      %c0_74 = arith.constant 0 : index
      %c0_75 = arith.constant 0 : index
      %133 = vector.load %arg18[%c0_73, %c0_74, %c0_75] : memref<4x8x8xbf16, #tpu.memory_space<vmem>>, vector<4x8x8xbf16>
      tpu.vector_store %arg18[%c0_73, %c0_74, %c0_75], %132 {strides = array<i32>} : memref<4x8x8xbf16, #tpu.memory_space<vmem>>, vector<4x8x8xbf16>,
      %c0_76 = arith.constant 0 : index
      %c0_77 = arith.constant 0 : index
      %134 = vector.load %arg5[%c0_76, %c0_77] : memref<32x32xbf16, #tpu.memory_space<vmem>>, vector<32x32xbf16>
      %cst_78 = arith.constant dense<0.000000e+00> : vector<32x8xf32>
      %135 = tpu.matmul %134, %123, %cst_78 {dimension_numbers = #tpu.dot_dimension_numbers<[1], [1], [0], [0], [0, 0, 1, 0], [], []>} : vector<32x32xbf16>, vector<8x32xbf16>, vector<32x8xf32> -> vector<32x8xf32>
      %136 = vector.shape_cast %135 : vector<32x8xf32> to vector<4x8x8xf32>
      %137 = arith.truncf %136 : vector<4x8x8xf32> to vector<4x8x8xbf16>
      %c0_79 = arith.constant 0 : index
      %c0_80 = arith.constant 0 : index
      %c0_81 = arith.constant 0 : index
      %138 = vector.load %arg19[%c0_79, %c0_80, %c0_81] : memref<4x8x8xbf16, #tpu.memory_space<vmem>>, vector<4x8x8xbf16>
      tpu.vector_store %arg19[%c0_79, %c0_80, %c0_81], %137 {strides = array<i32>} : memref<4x8x8xbf16, #tpu.memory_space<vmem>>, vector<4x8x8xbf16>,
    } else {
    }
    %c8_i32 = arith.constant 8 : i32
    %3 = arith.muli %arg1, %c8_i32 : i32
    %4 = tpu.assume_multiple %3, 8 : i32
    %c0 = arith.constant 0 : index
    %5 = arith.index_cast %4 : i32 to index
    %c0_1 = arith.constant 0 : index
    %6 = vector.load %arg17[%c0, %5, %c0_1] : memref<4x8x8xbf16, #tpu.memory_space<vmem>>, vector<4x8x8xbf16>
    %c0_2 = arith.constant 0 : index
    %c0_3 = arith.constant 0 : index
    %c0_4 = arith.constant 0 : index
    %7 = vector.load %arg18[%c0_2, %c0_3, %c0_4] : memref<4x8x8xbf16, #tpu.memory_space<vmem>>, vector<4x8x8xbf16>
    "tpu.trace_start"() <{level = 10 : i32, message = "htd,hkd->htk"}> : () -> ()
    %cst = arith.constant dense<0.000000e+00> : vector<4x8x8xf32>
    %8 = tpu.matmul %6, %7, %cst {dimension_numbers = #tpu.dot_dimension_numbers<[2], [2], [1], [1], [0, 0, 0, 1, 1, 1], [0], [0]>} : vector<4x8x8xbf16>, vector<4x8x8xbf16>, vector<4x8x8xf32> -> vector<4x8x8xf32>
    "tpu.trace_stop"() : () -> ()
    %cst_5 = arith.constant 0.176776692 : f32
    %9 = vector.broadcast %cst_5 : f32 to vector<4x8x8xf32>
    %10 = arith.mulf %8, %9 : vector<4x8x8xf32>
    %cst_6 = arith.constant dense<0xFF800000> : vector<4x8xf32>
    %11 = vector.multi_reduction <maximumf>, %10, %cst_6 [2] : vector<4x8x8xf32> to vector<4x8xf32>
    %12 = vector.shape_cast %11 : vector<4x8xf32> to vector<4x8x1xf32>
    %13 = vector.broadcast %12 : vector<4x8x1xf32> to vector<4x8x8xf32>
    %14 = arith.subf %10, %13 : vector<4x8x8xf32>
    %15 = math.exp %14 : vector<4x8x8xf32>
    %cst_7 = arith.constant dense<0.000000e+00> : vector<4x8xf32>
    %16 = vector.multi_reduction <add>, %15, %cst_7 [2] : vector<4x8x8xf32> to vector<4x8xf32>
    %17 = vector.shape_cast %16 : vector<4x8xf32> to vector<4x8x1xf32>
    %18 = tpu.reciprocal %17 {approx = true} : vector<4x8x1xf32> -> vector<4x8x1xf32>
    %19 = vector.broadcast %18 : vector<4x8x1xf32> to vector<4x8x8xf32>
    %20 = arith.mulf %15, %19 : vector<4x8x8xf32>
    %21 = arith.truncf %20 : vector<4x8x8xf32> to vector<4x8x8xbf16>
    %c0_8 = arith.constant 0 : index
    %c0_9 = arith.constant 0 : index
    %c0_10 = arith.constant 0 : index
    %22 = vector.load %arg19[%c0_8, %c0_9, %c0_10] : memref<4x8x8xbf16, #tpu.memory_space<vmem>>, vector<4x8x8xbf16>
    "tpu.trace_start"() <{level = 10 : i32, message = "htk,hkd->htd"}> : () -> ()
    %cst_11 = arith.constant dense<0.000000e+00> : vector<4x8x8xf32>
    %23 = tpu.matmul %21, %22, %cst_11 {dimension_numbers = #tpu.dot_dimension_numbers<[2], [1], [1], [2], [0, 0, 0, 1, 1, 2], [0], [0]>} : vector<4x8x8xbf16>, vector<4x8x8xbf16>, vector<4x8x8xf32> -> vector<4x8x8xf32>
    "tpu.trace_stop"() : () -> ()
    %24 = arith.truncf %23 : vector<4x8x8xf32> to vector<4x8x8xbf16>
    %25 = vector.extract_strided_slice %24 {offsets = [0, 0, 0], sizes = [1, 8, 8], strides = [1, 1, 1]} : vector<4x8x8xbf16> to vector<1x8x8xbf16>
    %26 = vector.shape_cast %25 : vector<1x8x8xbf16> to vector<8x8xbf16>
    %c0_12 = arith.constant 0 : index
    %c0_13 = arith.constant 0 : index
    %c0_14 = arith.constant 0 : index
    %27 = vector.load %arg6[%c0_12, %c0_13, %c0_14] : memref<4x8x32xbf16, #tpu.memory_space<vmem>>, vector<1x8x32xbf16>
    %28 = vector.shape_cast %27 : vector<1x8x32xbf16> to vector<8x32xbf16>
    %cst_15 = arith.constant dense<0.000000e+00> : vector<8x32xf32>
    %29 = tpu.matmul %26, %28, %cst_15 {dimension_numbers = #tpu.dot_dimension_numbers<[1], [0], [0], [1], [0, 0, 1, 1], [], []>} : vector<8x8xbf16>, vector<8x32xbf16>, vector<8x32xf32> -> vector<8x32xf32>
    %30 = vector.extract_strided_slice %24 {offsets = [1, 0, 0], sizes = [1, 8, 8], strides = [1, 1, 1]} : vector<4x8x8xbf16> to vector<1x8x8xbf16>
    %31 = vector.shape_cast %30 : vector<1x8x8xbf16> to vector<8x8xbf16>
    %c1 = arith.constant 1 : index
    %c0_16 = arith.constant 0 : index
    %c0_17 = arith.constant 0 : index
    %32 = vector.load %arg6[%c1, %c0_16, %c0_17] : memref<4x8x32xbf16, #tpu.memory_space<vmem>>, vector<1x8x32xbf16>
    %33 = vector.shape_cast %32 : vector<1x8x32xbf16> to vector<8x32xbf16>
    %cst_18 = arith.constant dense<0.000000e+00> : vector<8x32xf32>
    %34 = tpu.matmul %31, %33, %cst_18 {dimension_numbers = #tpu.dot_dimension_numbers<[1], [0], [0], [1], [0, 0, 1, 1], [], []>} : vector<8x8xbf16>, vector<8x32xbf16>, vector<8x32xf32> -> vector<8x32xf32>
    %35 = arith.addf %29, %34 : vector<8x32xf32>
    %36 = vector.extract_strided_slice %24 {offsets = [2, 0, 0], sizes = [1, 8, 8], strides = [1, 1, 1]} : vector<4x8x8xbf16> to vector<1x8x8xbf16>
    %37 = vector.shape_cast %36 : vector<1x8x8xbf16> to vector<8x8xbf16>
    %c2 = arith.constant 2 : index
    %c0_19 = arith.constant 0 : index
    %c0_20 = arith.constant 0 : index
    %38 = vector.load %arg6[%c2, %c0_19, %c0_20] : memref<4x8x32xbf16, #tpu.memory_space<vmem>>, vector<1x8x32xbf16>
    %39 = vector.shape_cast %38 : vector<1x8x32xbf16> to vector<8x32xbf16>
    %cst_21 = arith.constant dense<0.000000e+00> : vector<8x32xf32>
    %40 = tpu.matmul %37, %39, %cst_21 {dimension_numbers = #tpu.dot_dimension_numbers<[1], [0], [0], [1], [0, 0, 1, 1], [], []>} : vector<8x8xbf16>, vector<8x32xbf16>, vector<8x32xf32> -> vector<8x32xf32>
    %41 = arith.addf %35, %40 : vector<8x32xf32>
    %42 = vector.extract_strided_slice %24 {offsets = [3, 0, 0], sizes = [1, 8, 8], strides = [1, 1, 1]} : vector<4x8x8xbf16> to vector<1x8x8xbf16>
    %43 = vector.shape_cast %42 : vector<1x8x8xbf16> to vector<8x8xbf16>
    %c3 = arith.constant 3 : index
    %c0_22 = arith.constant 0 : index
    %c0_23 = arith.constant 0 : index
    %44 = vector.load %arg6[%c3, %c0_22, %c0_23] : memref<4x8x32xbf16, #tpu.memory_space<vmem>>, vector<1x8x32xbf16>
    %45 = vector.shape_cast %44 : vector<1x8x32xbf16> to vector<8x32xbf16>
    %cst_24 = arith.constant dense<0.000000e+00> : vector<8x32xf32>
    %46 = tpu.matmul %43, %45, %cst_24 {dimension_numbers = #tpu.dot_dimension_numbers<[1], [0], [0], [1], [0, 0, 1, 1], [], []>} : vector<8x8xbf16>, vector<8x32xbf16>, vector<8x32xf32> -> vector<8x32xf32>
    %47 = arith.addf %41, %46 : vector<8x32xf32>
    %c0_25 = arith.constant 0 : index
    %c0_26 = arith.constant 0 : index
    %48 = vector.load %arg7[%c0_25, %c0_26] : memref<1x32xf32, #tpu.memory_space<vmem>>, vector<1x32xf32>
    %49 = vector.broadcast %48 : vector<1x32xf32> to vector<8x32xf32>
    %50 = arith.addf %47, %49 : vector<8x32xf32>
    %c0_27 = arith.constant 0 : index
    %51 = arith.index_cast %4 : i32 to index
    %c0_28 = arith.constant 0 : index
    %52 = vector.load %arg2[%c0_27, %51, %c0_28] : memref<1x8x32xf32, #tpu.memory_space<vmem>>, vector<1x8x32xf32>
    %53 = vector.shape_cast %52 : vector<1x8x32xf32> to vector<8x32xf32>
    %54 = arith.addf %50, %53 : vector<8x32xf32>
    %c0_29 = arith.constant 0 : index
    %c0_30 = arith.constant 0 : index
    %55 = vector.load %arg8[%c0_29, %c0_30] : memref<1x32xf32, #tpu.memory_space<vmem>>, vector<1x32xf32>
    %c0_31 = arith.constant 0 : index
    %c0_32 = arith.constant 0 : index
    %56 = vector.load %arg9[%c0_31, %c0_32] : memref<1x32xf32, #tpu.memory_space<vmem>>, vector<1x32xf32>
    %cst_33 = arith.constant dense<0.000000e+00> : vector<8xf32>
    %57 = vector.multi_reduction <add>, %54, %cst_33 [1] : vector<8x32xf32> to vector<8xf32>
    %58 = vector.shape_cast %57 : vector<8xf32> to vector<8x1xf32>
    %cst_34 = arith.constant 3.200000e+01 : f32
    %59 = vector.broadcast %cst_34 : f32 to vector<8x1xf32>
    %60 = arith.divf %58, %59 : vector<8x1xf32>
    %61 = arith.mulf %54, %54 : vector<8x32xf32>
    %cst_35 = arith.constant dense<0.000000e+00> : vector<8xf32>
    %62 = vector.multi_reduction <add>, %61, %cst_35 [1] : vector<8x32xf32> to vector<8xf32>
    %63 = vector.shape_cast %62 : vector<8xf32> to vector<8x1xf32>
    %cst_36 = arith.constant 3.200000e+01 : f32
    %64 = vector.broadcast %cst_36 : f32 to vector<8x1xf32>
    %65 = arith.divf %63, %64 : vector<8x1xf32>
    %66 = arith.mulf %60, %60 : vector<8x1xf32>
    %67 = arith.subf %65, %66 : vector<8x1xf32>
    %68 = vector.broadcast %60 : vector<8x1xf32> to vector<8x32xf32>
    %69 = arith.subf %54, %68 : vector<8x32xf32>
    %cst_37 = arith.constant 9.99999974E-6 : f32
    %70 = vector.broadcast %cst_37 : f32 to vector<8x1xf32>
    %71 = arith.addf %67, %70 : vector<8x1xf32>
    %72 = math.rsqrt %71 : vector<8x1xf32>
    %73 = vector.broadcast %72 : vector<8x1xf32> to vector<8x32xf32>
    %74 = arith.mulf %69, %73 : vector<8x32xf32>
    %75 = vector.broadcast %55 : vector<1x32xf32> to vector<8x32xf32>
    %76 = arith.mulf %74, %75 : vector<8x32xf32>
    %77 = vector.broadcast %56 : vector<1x32xf32> to vector<8x32xf32>
    %78 = arith.addf %76, %77 : vector<8x32xf32>
    %79 = arith.truncf %78 : vector<8x32xf32> to vector<8x32xbf16>
    %c0_38 = arith.constant 0 : index
    %c0_39 = arith.constant 0 : index
    %80 = vector.load %arg10[%c0_38, %c0_39] : memref<32x128xbf16, #tpu.memory_space<vmem>>, vector<32x128xbf16>
    %cst_40 = arith.constant dense<0.000000e+00> : vector<8x128xf32>
    %81 = tpu.matmul %79, %80, %cst_40 {dimension_numbers = #tpu.dot_dimension_numbers<[1], [0], [0], [1], [0, 0, 1, 1], [], []>} : vector<8x32xbf16>, vector<32x128xbf16>, vector<8x128xf32> -> vector<8x128xf32>
    %c0_41 = arith.constant 0 : index
    %c0_42 = arith.constant 0 : index
    %82 = vector.load %arg11[%c0_41, %c0_42] : memref<1x128xf32, #tpu.memory_space<vmem>>, vector<1x128xf32>
    %83 = vector.broadcast %82 : vector<1x128xf32> to vector<8x128xf32>
    %84 = arith.addf %81, %83 : vector<8x128xf32>
    %cst_43 = arith.constant 0.000000e+00 : f32
    %85 = vector.broadcast %cst_43 : f32 to vector<8x128xf32>
    %86 = arith.maximumf %84, %85 : vector<8x128xf32>
    %87 = arith.truncf %86 : vector<8x128xf32> to vector<8x128xbf16>
    %c0_44 = arith.constant 0 : index
    %c0_45 = arith.constant 0 : index
    %88 = vector.load %arg12[%c0_44, %c0_45] : memref<128x32xbf16, #tpu.memory_space<vmem>>, vector<128x32xbf16>
    %cst_46 = arith.constant dense<0.000000e+00> : vector<8x32xf32>
    %89 = tpu.matmul %87, %88, %cst_46 {dimension_numbers = #tpu.dot_dimension_numbers<[1], [0], [0], [1], [0, 0, 1, 1], [], []>} : vector<8x128xbf16>, vector<128x32xbf16>, vector<8x32xf32> -> vector<8x32xf32>
    %c0_47 = arith.constant 0 : index
    %c0_48 = arith.constant 0 : index
    %90 = vector.load %arg13[%c0_47, %c0_48] : memref<1x32xf32, #tpu.memory_space<vmem>>, vector<1x32xf32>
    %91 = vector.broadcast %90 : vector<1x32xf32> to vector<8x32xf32>
    %92 = arith.addf %89, %91 : vector<8x32xf32>
    %93 = arith.addf %92, %78 : vector<8x32xf32>
    %c0_49 = arith.constant 0 : index
    %c0_50 = arith.constant 0 : index
    %94 = vector.load %arg14[%c0_49, %c0_50] : memref<1x32xf32, #tpu.memory_space<vmem>>, vector<1x32xf32>
    %c0_51 = arith.constant 0 : index
    %c0_52 = arith.constant 0 : index
    %95 = vector.load %arg15[%c0_51, %c0_52] : memref<1x32xf32, #tpu.memory_space<vmem>>, vector<1x32xf32>
    %cst_53 = arith.constant dense<0.000000e+00> : vector<8xf32>
    %96 = vector.multi_reduction <add>, %93, %cst_53 [1] : vector<8x32xf32> to vector<8xf32>
    %97 = vector.shape_cast %96 : vector<8xf32> to vector<8x1xf32>
    %cst_54 = arith.constant 3.200000e+01 : f32
    %98 = vector.broadcast %cst_54 : f32 to vector<8x1xf32>
    %99 = arith.divf %97, %98 : vector<8x1xf32>
    %100 = arith.mulf %93, %93 : vector<8x32xf32>
    %cst_55 = arith.constant dense<0.000000e+00> : vector<8xf32>
    %101 = vector.multi_reduction <add>, %100, %cst_55 [1] : vector<8x32xf32> to vector<8xf32>
    %102 = vector.shape_cast %101 : vector<8xf32> to vector<8x1xf32>
    %cst_56 = arith.constant 3.200000e+01 : f32
    %103 = vector.broadcast %cst_56 : f32 to vector<8x1xf32>
    %104 = arith.divf %102, %103 : vector<8x1xf32>
    %105 = arith.mulf %99, %99 : vector<8x1xf32>
    %106 = arith.subf %104, %105 : vector<8x1xf32>
    %107 = vector.broadcast %99 : vector<8x1xf32> to vector<8x32xf32>
    %108 = arith.subf %93, %107 : vector<8x32xf32>
    %cst_57 = arith.constant 9.99999974E-6 : f32
    %109 = vector.broadcast %cst_57 : f32 to vector<8x1xf32>
    %110 = arith.addf %106, %109 : vector<8x1xf32>
    %111 = math.rsqrt %110 : vector<8x1xf32>
    %112 = vector.broadcast %111 : vector<8x1xf32> to vector<8x32xf32>
    %113 = arith.mulf %108, %112 : vector<8x32xf32>
    %114 = vector.broadcast %94 : vector<1x32xf32> to vector<8x32xf32>
    %115 = arith.mulf %113, %114 : vector<8x32xf32>
    %116 = vector.broadcast %95 : vector<1x32xf32> to vector<8x32xf32>
    %117 = arith.addf %115, %116 : vector<8x32xf32>
    %c0_58 = arith.constant 0 : index
    %c0_59 = arith.constant 0 : index
    %c0_60 = arith.constant 0 : index
    %118 = vector.load %arg16[%c0_58, %c0_59, %c0_60] : memref<1x8x32xf32, #tpu.memory_space<vmem>>, vector<1x8x32xf32>
    %119 = vector.shape_cast %118 : vector<1x8x32xf32> to vector<8x32xf32>
    %120 = vector.shape_cast %117 : vector<8x32xf32> to vector<1x8x32xf32>
    tpu.vector_store %arg16[%c0_58, %c0_59, %c0_60], %120 {strides = array<i32>} : memref<1x8x32xf32, #tpu.memory_space<vmem>>, vector<1x8x32xf32>,
    return
  }
  func.func @transform_0(%arg0: i32, %arg1: i32) -> (i32, i32, i32) {
    %c0_i32 = arith.constant 0 : i32
    %c0_i32_0 = arith.constant 0 : i32
    %c0_i32_1 = arith.constant 0 : i32
    return %arg0, %c0_i32, %c0_i32_0 : i32, i32, i32
  }
  func.func @transform_1(%arg0: i32, %arg1: i32) -> (i32, i32) {
    %c0_i32 = arith.constant 0 : i32
    %c0_i32_0 = arith.constant 0 : i32
    %c0_i32_1 = arith.constant 0 : i32
    return %c0_i32, %c0_i32_0 : i32, i32
  }
  func.func @transform_2(%arg0: i32, %arg1: i32) -> (i32, i32) {
    %c0_i32 = arith.constant 0 : i32
    %c0_i32_0 = arith.constant 0 : i32
    %c0_i32_1 = arith.constant 0 : i32
    return %c0_i32, %c0_i32_0 : i32, i32
  }
  func.func @transform_3(%arg0: i32, %arg1: i32) -> (i32, i32) {
    %c0_i32 = arith.constant 0 : i32
    %c0_i32_0 = arith.constant 0 : i32
    %c0_i32_1 = arith.constant 0 : i32
    return %c0_i32, %c0_i32_0 : i32, i32
  }
  func.func @transform_4(%arg0: i32, %arg1: i32) -> (i32, i32, i32) {
    %c0_i32 = arith.constant 0 : i32
    %c0_i32_0 = arith.constant 0 : i32
    %c0_i32_1 = arith.constant 0 : i32
    %c0_i32_2 = arith.constant 0 : i32
    return %c0_i32, %c0_i32_0, %c0_i32_1 : i32, i32, i32
  }
  func.func @transform_5(%arg0: i32, %arg1: i32) -> (i32, i32) {
    %c0_i32 = arith.constant 0 : i32
    %c0_i32_0 = arith.constant 0 : i32
    %c0_i32_1 = arith.constant 0 : i32
    return %c0_i32, %c0_i32_0 : i32, i32
  }
  func.func @transform_6(%arg0: i32, %arg1: i32) -> (i32, i32) {
    %c0_i32 = arith.constant 0 : i32
    %c0_i32_0 = arith.constant 0 : i32
    %c0_i32_1 = arith.constant 0 : i32
    return %c0_i32, %c0_i32_0 : i32, i32
  }
  func.func @transform_7(%arg0: i32, %arg1: i32) -> (i32, i32) {
    %c0_i32 = arith.constant 0 : i32
    %c0_i32_0 = arith.constant 0 : i32
    %c0_i32_1 = arith.constant 0 : i32
    return %c0_i32, %c0_i32_0 : i32, i32
  }
  func.func @transform_8(%arg0: i32, %arg1: i32) -> (i32, i32) {
    %c0_i32 = arith.constant 0 : i32
    %c0_i32_0 = arith.constant 0 : i32
    %c0_i32_1 = arith.constant 0 : i32
    return %c0_i32, %c0_i32_0 : i32, i32
  }
  func.func @transform_9(%arg0: i32, %arg1: i32) -> (i32, i32) {
    %c0_i32 = arith.constant 0 : i32
    %c0_i32_0 = arith.constant 0 : i32
    %c0_i32_1 = arith.constant 0 : i32
    return %c0_i32, %c0_i32_0 : i32, i32
  }
  func.func @transform_10(%arg0: i32, %arg1: i32) -> (i32, i32) {
    %c0_i32 = arith.constant 0 : i32
    %c0_i32_0 = arith.constant 0 : i32
    %c0_i32_1 = arith.constant 0 : i32
    return %c0_i32, %c0_i32_0 : i32, i32
  }
  func.func @transform_11(%arg0: i32, %arg1: i32) -> (i32, i32) {
    %c0_i32 = arith.constant 0 : i32
    %c0_i32_0 = arith.constant 0 : i32
    %c0_i32_1 = arith.constant 0 : i32
    return %c0_i32, %c0_i32_0 : i32, i32
  }
  func.func @transform_12(%arg0: i32, %arg1: i32) -> (i32, i32) {
    %c0_i32 = arith.constant 0 : i32
    %c0_i32_0 = arith.constant 0 : i32
    %c0_i32_1 = arith.constant 0 : i32
    return %c0_i32, %c0_i32_0 : i32, i32
  }
  func.func @transform_13(%arg0: i32, %arg1: i32) -> (i32, i32) {
    %c0_i32 = arith.constant 0 : i32
    %c0_i32_0 = arith.constant 0 : i32
    %c0_i32_1 = arith.constant 0 : i32
    return %c0_i32, %c0_i32_0 : i32, i32
  }
  func.func @transform_14(%arg0: i32, %arg1: i32) -> (i32, i32, i32) {
    %c0_i32 = arith.constant 0 : i32
    %c0_i32_0 = arith.constant 0 : i32
    return %arg0, %arg1, %c0_i32 : i32, i32, i32
  }
}

</mosaic_0001>

<llo_original>
// kernel: tpu_custom_call.1
$region0: #{tpu_custom_call.1}
  #allocation0 [shape = 'u32[]', space=smem, size = 0x4, offset = 0x4, fixed_abs, tag = 'smem constant byte address 0x4 - core index']
  #allocation1 [shape = 'u32[144,128]{1,0:T(1,128)}', space=vmem, size = 0x12000, scoped, tag = 'internal scratch']
  #allocation2 [shape = 'bf16[4,8,8]{2,1,0:T(8,128)(2,1)}', space=vmem, size = 0x2000, scoped, tag = 'scratch operand']
  #allocation3 [shape = 'bf16[4,8,8]{2,1,0:T(8,128)(2,1)}', space=vmem, size = 0x2000, scoped, tag = 'scratch operand']
  #allocation4 [shape = 'bf16[4,8,8]{2,1,0:T(8,128)(2,1)}', space=vmem, size = 0x2000, scoped, tag = 'scratch operand']
  %s0 = inlined_call_operand.vmem [shape: f32[2,8,32], index: 0, kind: input, shape index: {}]
  %s1 = inlined_call_operand.vmem [shape: bf16[32,32], index: 1, kind: input, shape index: {}]
  %s2 = inlined_call_operand.vmem [shape: bf16[32,32], index: 2, kind: input, shape index: {}]
  %s3 = inlined_call_operand.vmem [shape: bf16[32,32], index: 3, kind: input, shape index: {}]
  %s4 = inlined_call_operand.vmem [shape: bf16[4,8,32], index: 4, kind: input, shape index: {}]
  %s5 = inlined_call_operand.vmem [shape: f32[1,32], index: 5, kind: input, shape index: {}]
  %s6 = inlined_call_operand.vmem [shape: f32[1,32], index: 6, kind: input, shape index: {}]
  %s7 = inlined_call_operand.vmem [shape: f32[1,32], index: 7, kind: input, shape index: {}]
  %s8 = inlined_call_operand.hbm [shape: bf16[32,128], index: 8, kind: input, shape index: {}]
  %s9 = inlined_call_operand.vmem [shape: f32[1,128], index: 9, kind: input, shape index: {}]
  %s10 = inlined_call_operand.vmem [shape: bf16[128,32], index: 10, kind: input, shape index: {}]
  %s11 = inlined_call_operand.vmem [shape: f32[1,32], index: 11, kind: input, shape index: {}]
  %s12 = inlined_call_operand.vmem [shape: f32[1,32], index: 12, kind: input, shape index: {}]
  %s13 = inlined_call_operand.vmem [shape: f32[1,32], index: 13, kind: input, shape index: {}]
  %s14 = inlined_call_operand.hbm [shape: f32[2,8,32], index: 14, kind: output, shape index: {}]
  %s15 = sld [smem:[#allocation0]]
  $region97: #{tpu_custom_call.1} parent=0
    _
  %s17 = ssub.s32 1, %s15
  %s18 = scalar_select 0, %s17, %s15
  $region1: #{tpu_custom_call.1} parent=0
    #allocation5 [shape = 'u8[8192]{0}', space=vmem, size = 0x2000, scoped, tag = 'input window, operand 8, single buffered']
    #allocation6 [shape = 's32[2]{0}', space=sflag, size = 0x8, scoped, tag = 'scoped memory for tpu_custom_call.1']
    #allocation7 [shape = 's32[2]{0}', space=sflag, size = 0x8, scoped, tag = 'scoped memory for tpu_custom_call.1']
    #allocation8 [shape = 'u8[8192]{0}', space=vmem, size = 0x2000, scoped, tag = 'output window, operand 0']
    %19 = vsyncpa [#allocation6], 0
    %20 = vsyncpa [#allocation7], 0
    %s21 = scalar_lea.sflag [#allocation7], 1
    %22 = vsyncpa %s21, 0
    loop: start=0, step=1, limit=4
    $region2: #{tpu_custom_call.1} parent=1 // loop_pre_header
      _
    $region3: #{tpu_custom_call.1} parent=1 // loop_header
      %s24 = sphi 0, %s28
      %p25 = scmp.ge.s32.totalorder %s24, 4
      %s31 = sphi 0, %s43
      %s32 = sphi 0, %s39
      %s33 = sphi 0, %s31
      %s34 = sphi 0, %s32
      %s35 = sphi 0, %s33
      %s36 = sphi 0, %s34
      %s46 = sphi 0, %s48
      %s49 = sphi 0, %s46
      %s50 = sphi 0, %s49
      %s66 = sphi 0, %s50
      %s70 = sphi 0, %s70
      %s72 = sphi 0, %s70
      %s73 = sphi 0, %s72
      %s87 = sphi 0, %s73
      %s91 = sphi 0, %s91
      %s93 = sphi 0, %s91
      %s94 = sphi 0, %s93
      %s108 = sphi 0, %s94
      %s112 = sphi 0, %s112
      %s114 = sphi 0, %s112
      %s115 = sphi 0, %s114
      %s129 = sphi 0, %s115
      %s133 = sphi 0, %s133
      %s135 = sphi 0, %s133
      %s136 = sphi 0, %s135
      %s150 = sphi 0, %s136
      %s154 = sphi 0, %s154
      %s156 = sphi 0, %s154
      %s157 = sphi 0, %s156
      %s171 = sphi 0, %s157
      %s175 = sphi 0, %s175
      %s177 = sphi 0, %s175
      %s178 = sphi 0, %s177
      %s192 = sphi 0, %s178
      %s196 = sphi 0, %s196
      %s198 = sphi 0, %s196
      %s199 = sphi 0, %s198
      %s213 = sphi 0, %s199
      %s217 = sphi 0, %s217
      %s219 = sphi 0, %s217
      %s220 = sphi 0, %s219
      %s234 = sphi 0, %s220
      %s238 = sphi 0, %s238
      %s240 = sphi 0, %s238
      %s241 = sphi 0, %s240
      %s255 = sphi 0, %s241
      %s259 = sphi 0, %s259
      %s261 = sphi 0, %s259
      %s262 = sphi 0, %s261
      %s276 = sphi 0, %s262
      %s280 = sphi 0, %s280
      %s282 = sphi 0, %s280
      %s283 = sphi 0, %s282
      %s297 = sphi 0, %s283
      %s301 = sphi 0, %s301
      %s303 = sphi 0, %s301
      %s304 = sphi 0, %s303
      %s318 = sphi 0, %s304
      %s322 = sphi 0, %s322
      %s324 = sphi 0, %s322
      %s325 = sphi 0, %s324
      %s339 = sphi 0, %s325
      %s347 = sphi 0, %s349
      %s350 = sphi 0, %s347
      %s351 = sphi 0, %s350
      %s367 = sphi 0, %s351
    $region4: #{tpu_custom_call.1} parent=1 // loop_header_branch
      %27 = sbr.rel (%p25) target = $region8
    $region5: #{tpu_custom_call.1} parent=1 // loop_body
      %s29 = ssub.s32 %s24, 1
      %s30 = ssub.s32 %s24, 2
      %s37 = sadd.s32 1, %s32
      %p38 = scmp.ge.s32.totalorder %s37, 1
      %s39 = scalar_select %p38, 0, %s37
      %s40 = sadd.s32 1, %s31
      %s41 = scalar_select %p38, %s40, %s31
      %p42 = scmp.ge.s32.totalorder %s41, 2
      %s43 = scalar_select %p42, 0, %s41
      %s44 = ssub.s32 %s31, %s43
      %p45 = scmp.eq.s32.totalorder %s44, 0
      %s47 = sadd.s32 %s46, 1
      %s48 = scalar_select %p45, %s46, %s47
      %p51 = pneg %p45
      %p52 = scmp.eq.s32.totalorder %s24, 1
      %p53 = por %p51, %p52
      %p54 = scmp.ne.s32.totalorder %s46, %s49
      %p55 = scmp.eq.s32.totalorder %s24, 0
      %p56 = por %p54, %p55
      %p57 = scmp.ne.s32.totalorder %s46, %s49
      %p58 = scmp.eq.s32.totalorder %s29, 1
      %p59 = por %p57, %p58
      %p60 = scmp.ne.s32.totalorder %s49, %s50
      %p61 = scmp.eq.s32.totalorder %s29, 0
      %p62 = por %p60, %p61
      %p63 = scmp.ne.s32.totalorder %s49, %s50
      %p64 = scmp.eq.s32.totalorder %s30, 1
      %p65 = por %p63, %p64
      %p67 = scmp.ne.s32.totalorder %s50, %s66
      %p68 = scmp.eq.s32.totalorder %s30, 0
      %p69 = por %p67, %p68
      %s71 = sadd.s32 %s70, 1
      %p74 = scmp.eq.s32.totalorder %s24, 1
      %p75 = scmp.ne.s32.totalorder %s70, %s72
      %p76 = scmp.eq.s32.totalorder %s24, 0
      %p77 = por %p75, %p76
      %p78 = scmp.ne.s32.totalorder %s70, %s72
      %p79 = scmp.eq.s32.totalorder %s29, 1
      %p80 = por %p78, %p79
      %p81 = scmp.ne.s32.totalorder %s72, %s73
      %p82 = scmp.eq.s32.totalorder %s29, 0
      %p83 = por %p81, %p82
      %p84 = scmp.ne.s32.totalorder %s72, %s73
      %p85 = scmp.eq.s32.totalorder %s30, 1
      %p86 = por %p84, %p85
      %p88 = scmp.ne.s32.totalorder %s73, %s87
      %p89 = scmp.eq.s32.totalorder %s30, 0
      %p90 = por %p88, %p89
      %s92 = sadd.s32 %s91, 1
      %p95 = scmp.eq.s32.totalorder %s24, 1
      %p96 = scmp.ne.s32.totalorder %s91, %s93
      %p97 = scmp.eq.s32.totalorder %s24, 0
      %p98 = por %p96, %p97
      %p99 = scmp.ne.s32.totalorder %s91, %s93
      %p100 = scmp.eq.s32.totalorder %s29, 1
      %p101 = por %p99, %p100
      %p102 = scmp.ne.s32.totalorder %s93, %s94
      %p103 = scmp.eq.s32.totalorder %s29, 0
      %p104 = por %p102, %p103
      %p105 = scmp.ne.s32.totalorder %s93, %s94
      %p106 = scmp.eq.s32.totalorder %s30, 1
      %p107 = por %p105, %p106
      %p109 = scmp.ne.s32.totalorder %s94, %s108
      %p110 = scmp.eq.s32.totalorder %s30, 0
      %p111 = por %p109, %p110
      %s113 = sadd.s32 %s112, 1
      %p116 = scmp.eq.s32.totalorder %s24, 1
      %p117 = scmp.ne.s32.totalorder %s112, %s114
      %p118 = scmp.eq.s32.totalorder %s24, 0
      %p119 = por %p117, %p118
      %p120 = scmp.ne.s32.totalorder %s112, %s114
      %p121 = scmp.eq.s32.totalorder %s29, 1
      %p122 = por %p120, %p121
      %p123 = scmp.ne.s32.totalorder %s114, %s115
      %p124 = scmp.eq.s32.totalorder %s29, 0
      %p125 = por %p123, %p124
      %p126 = scmp.ne.s32.totalorder %s114, %s115
      %p127 = scmp.eq.s32.totalorder %s30, 1
      %p128 = por %p126, %p127
      %p130 = scmp.ne.s32.totalorder %s115, %s129
      %p131 = scmp.eq.s32.totalorder %s30, 0
      %p132 = por %p130, %p131
      %s134 = sadd.s32 %s133, 1
      %p137 = scmp.eq.s32.totalorder %s24, 1
      %p138 = scmp.ne.s32.totalorder %s133, %s135
      %p139 = scmp.eq.s32.totalorder %s24, 0
      %p140 = por %p138, %p139
      %p141 = scmp.ne.s32.totalorder %s133, %s135
      %p142 = scmp.eq.s32.totalorder %s29, 1
      %p143 = por %p141, %p142
      %p144 = scmp.ne.s32.totalorder %s135, %s136
      %p145 = scmp.eq.s32.totalorder %s29, 0
      %p146 = por %p144, %p145
      %p147 = scmp.ne.s32.totalorder %s135, %s136
      %p148 = scmp.eq.s32.totalorder %s30, 1
      %p149 = por %p147, %p148
      %p151 = scmp.ne.s32.totalorder %s136, %s150
      %p152 = scmp.eq.s32.totalorder %s30, 0
      %p153 = por %p151, %p152
      %s155 = sadd.s32 %s154, 1
      %p158 = scmp.eq.s32.totalorder %s24, 1
      %p159 = scmp.ne.s32.totalorder %s154, %s156
      %p160 = scmp.eq.s32.totalorder %s24, 0
      %p161 = por %p159, %p160
      %p162 = scmp.ne.s32.totalorder %s154, %s156
      %p163 = scmp.eq.s32.totalorder %s29, 1
      %p164 = por %p162, %p163
      %p165 = scmp.ne.s32.totalorder %s156, %s157
      %p166 = scmp.eq.s32.totalorder %s29, 0
      %p167 = por %p165, %p166
      %p168 = scmp.ne.s32.totalorder %s156, %s157
      %p169 = scmp.eq.s32.totalorder %s30, 1
      %p170 = por %p168, %p169
      %p172 = scmp.ne.s32.totalorder %s157, %s171
      %p173 = scmp.eq.s32.totalorder %s30, 0
      %p174 = por %p172, %p173
      %s176 = sadd.s32 %s175, 1
      %p179 = scmp.eq.s32.totalorder %s24, 1
      %p180 = scmp.ne.s32.totalorder %s175, %s177
      %p181 = scmp.eq.s32.totalorder %s24, 0
      %p182 = por %p180, %p181
      %p183 = scmp.ne.s32.totalorder %s175, %s177
      %p184 = scmp.eq.s32.totalorder %s29, 1
      %p185 = por %p183, %p184
      %p186 = scmp.ne.s32.totalorder %s177, %s178
      %p187 = scmp.eq.s32.totalorder %s29, 0
      %p188 = por %p186, %p187
      %p189 = scmp.ne.s32.totalorder %s177, %s178
      %p190 = scmp.eq.s32.totalorder %s30, 1
      %p191 = por %p189, %p190
      %p193 = scmp.ne.s32.totalorder %s178, %s192
      %p194 = scmp.eq.s32.totalorder %s30, 0
      %p195 = por %p193, %p194
      %s197 = sadd.s32 %s196, 1
      %p200 = scmp.eq.s32.totalorder %s24, 1
      %p201 = scmp.ne.s32.totalorder %s196, %s198
      %p202 = scmp.eq.s32.totalorder %s24, 0
      %p203 = por %p201, %p202
      %p204 = scmp.ne.s32.totalorder %s196, %s198
      %p205 = scmp.eq.s32.totalorder %s29, 1
      %p206 = por %p204, %p205
      %p207 = scmp.ne.s32.totalorder %s198, %s199
      %p208 = scmp.eq.s32.totalorder %s29, 0
      %p209 = por %p207, %p208
      %p210 = scmp.ne.s32.totalorder %s198, %s199
      %p211 = scmp.eq.s32.totalorder %s30, 1
      %p212 = por %p210, %p211
      %p214 = scmp.ne.s32.totalorder %s199, %s213
      %p215 = scmp.eq.s32.totalorder %s30, 0
      %p216 = por %p214, %p215
      %s218 = sadd.s32 %s217, 1
      %p221 = scmp.eq.s32.totalorder %s24, 1
      %p222 = scmp.ne.s32.totalorder %s217, %s219
      %p223 = scmp.eq.s32.totalorder %s24, 0
      %p224 = por %p222, %p223
      %p225 = scmp.ne.s32.totalorder %s217, %s219
      %p226 = scmp.eq.s32.totalorder %s29, 1
      %p227 = por %p225, %p226
      %p228 = scmp.ne.s32.totalorder %s219, %s220
      %p229 = scmp.eq.s32.totalorder %s29, 0
      %p230 = por %p228, %p229
      %p231 = scmp.ne.s32.totalorder %s219, %s220
      %p232 = scmp.eq.s32.totalorder %s30, 1
      %p233 = por %p231, %p232
      %p235 = scmp.ne.s32.totalorder %s220, %s234
      %p236 = scmp.eq.s32.totalorder %s30, 0
      %p237 = por %p235, %p236
      %s239 = sadd.s32 %s238, 1
      %p242 = scmp.eq.s32.totalorder %s24, 1
      %p243 = scmp.ne.s32.totalorder %s238, %s240
      %p244 = scmp.eq.s32.totalorder %s24, 0
      %p245 = por %p243, %p244
      %p246 = scmp.ne.s32.totalorder %s238, %s240
      %p247 = scmp.eq.s32.totalorder %s29, 1
      %p248 = por %p246, %p247
      %p249 = scmp.ne.s32.totalorder %s240, %s241
      %p250 = scmp.eq.s32.totalorder %s29, 0
      %p251 = por %p249, %p250
      %p252 = scmp.ne.s32.totalorder %s240, %s241
      %p253 = scmp.eq.s32.totalorder %s30, 1
      %p254 = por %p252, %p253
      %p256 = scmp.ne.s32.totalorder %s241, %s255
      %p257 = scmp.eq.s32.totalorder %s30, 0
      %p258 = por %p256, %p257
      %s260 = sadd.s32 %s259, 1
      %p263 = scmp.eq.s32.totalorder %s24, 1
      %p264 = scmp.ne.s32.totalorder %s259, %s261
      %p265 = scmp.eq.s32.totalorder %s24, 0
      %p266 = por %p264, %p265
      %p267 = scmp.ne.s32.totalorder %s259, %s261
      %p268 = scmp.eq.s32.totalorder %s29, 1
      %p269 = por %p267, %p268
      %p270 = scmp.ne.s32.totalorder %s261, %s262
      %p271 = scmp.eq.s32.totalorder %s29, 0
      %p272 = por %p270, %p271
      %p273 = scmp.ne.s32.totalorder %s261, %s262
      %p274 = scmp.eq.s32.totalorder %s30, 1
      %p275 = por %p273, %p274
      %p277 = scmp.ne.s32.totalorder %s262, %s276
      %p278 = scmp.eq.s32.totalorder %s30, 0
      %p279 = por %p277, %p278
      %s281 = sadd.s32 %s280, 1
      %p284 = scmp.eq.s32.totalorder %s24, 1
      %p285 = scmp.ne.s32.totalorder %s280, %s282
      %p286 = scmp.eq.s32.totalorder %s24, 0
      %p287 = por %p285, %p286
      %p288 = scmp.ne.s32.totalorder %s280, %s282
      %p289 = scmp.eq.s32.totalorder %s29, 1
      %p290 = por %p288, %p289
      %p291 = scmp.ne.s32.totalorder %s282, %s283
      %p292 = scmp.eq.s32.totalorder %s29, 0
      %p293 = por %p291, %p292
      %p294 = scmp.ne.s32.totalorder %s282, %s283
      %p295 = scmp.eq.s32.totalorder %s30, 1
      %p296 = por %p294, %p295
      %p298 = scmp.ne.s32.totalorder %s283, %s297
      %p299 = scmp.eq.s32.totalorder %s30, 0
      %p300 = por %p298, %p299
      %s302 = sadd.s32 %s301, 1
      %p305 = scmp.eq.s32.totalorder %s24, 1
      %p306 = scmp.ne.s32.totalorder %s301, %s303
      %p307 = scmp.eq.s32.totalorder %s24, 0
      %p308 = por %p306, %p307
      %p309 = scmp.ne.s32.totalorder %s301, %s303
      %p310 = scmp.eq.s32.totalorder %s29, 1
      %p311 = por %p309, %p310
      %p312 = scmp.ne.s32.totalorder %s303, %s304
      %p313 = scmp.eq.s32.totalorder %s29, 0
      %p314 = por %p312, %p313
      %p315 = scmp.ne.s32.totalorder %s303, %s304
      %p316 = scmp.eq.s32.totalorder %s30, 1
      %p317 = por %p315, %p316
      %p319 = scmp.ne.s32.totalorder %s304, %s318
      %p320 = scmp.eq.s32.totalorder %s30, 0
      %p321 = por %p319, %p320
      %s323 = sadd.s32 %s322, 1
      %p326 = scmp.eq.s32.totalorder %s24, 1
      %p327 = scmp.ne.s32.totalorder %s322, %s324
      %p328 = scmp.eq.s32.totalorder %s24, 0
      %p329 = por %p327, %p328
      %p330 = scmp.ne.s32.totalorder %s322, %s324
      %p331 = scmp.eq.s32.totalorder %s29, 1
      %p332 = por %p330, %p331
      %p333 = scmp.ne.s32.totalorder %s324, %s325
      %p334 = scmp.eq.s32.totalorder %s29, 0
      %p335 = por %p333, %p334
      %p336 = scmp.ne.s32.totalorder %s324, %s325
      %p337 = scmp.eq.s32.totalorder %s30, 1
      %p338 = por %p336, %p337
      %p340 = scmp.ne.s32.totalorder %s325, %s339
      %p341 = scmp.eq.s32.totalorder %s30, 0
      %p342 = por %p340, %p341
      %s343 = ssub.s32 %s31, %s43
      %s344 = ssub.s32 %s32, %s39
      %s345 = sor.u32 %s343, %s344
      %p346 = scmp.eq.s32.totalorder %s345, 0
      %s348 = sadd.s32 %s347, 1
      %s349 = scalar_select %p346, %s347, %s348
      %p352 = pneg %p346
      %p353 = scmp.eq.s32.totalorder %s24, 1
      %p354 = por %p352, %p353
      %p355 = scmp.ne.s32.totalorder %s347, %s350
      %p356 = scmp.eq.s32.totalorder %s24, 0
      %p357 = por %p355, %p356
      %p358 = scmp.ne.s32.totalorder %s347, %s350
      %p359 = scmp.eq.s32.totalorder %s29, 1
      %p360 = por %p358, %p359
      %p361 = scmp.ne.s32.totalorder %s350, %s351
      %p362 = scmp.eq.s32.totalorder %s29, 0
      %p363 = por %p361, %p362
      %p364 = scmp.ne.s32.totalorder %s350, %s351
      %p365 = scmp.eq.s32.totalorder %s30, 1
      %p366 = por %p364, %p365
      %p368 = scmp.ne.s32.totalorder %s351, %s367
      %p369 = scmp.eq.s32.totalorder %s30, 0
      %p370 = por %p368, %p369
      %p371 = scmp.le.s32.totalorder 1, %s24
      %p372 = scmp.lt.s32.totalorder %s24, 3
      %p373 = pnand %p371, %p372
      %p374 = pneg %p373
      // Predicated region
      $region9: #{tpu_custom_call.1} parent=5 // pred_check
        _
      $region10: #{tpu_custom_call.1} parent=5 // pred_check_branch
        %376 = sbr.rel (%p373) target = $region12
      $region11: #{tpu_custom_call.1} parent=5 // pred_region
        %s377 = ssub.s32 %s24, 1
        // Predicated region
        $region13: #{tpu_custom_call.1} parent=11 // pred_check
          %p378 = pneg %p83
        $region14: #{tpu_custom_call.1} parent=11 // pred_check_branch
          %380 = sbr.rel (%p378) target = $region16
        $region15: #{tpu_custom_call.1} parent=11 // pred_region
          _
        $region16: #{tpu_custom_call.1} parent=11 // pred_fallthru
          _
        // Predicated region
        $region17: #{tpu_custom_call.1} parent=11 // pred_check
          %p381 = pneg %p104
        $region18: #{tpu_custom_call.1} parent=11 // pred_check_branch
          %383 = sbr.rel (%p381) target = $region20
        $region19: #{tpu_custom_call.1} parent=11 // pred_region
          _
        $region20: #{tpu_custom_call.1} parent=11 // pred_fallthru
          _
        // Predicated region
        $region21: #{tpu_custom_call.1} parent=11 // pred_check
          %p384 = pneg %p125
        $region22: #{tpu_custom_call.1} parent=11 // pred_check_branch
          %386 = sbr.rel (%p384) target = $region24
        $region23: #{tpu_custom_call.1} parent=11 // pred_region
          _
        $region24: #{tpu_custom_call.1} parent=11 // pred_fallthru
          _
        // Predicated region
        $region25: #{tpu_custom_call.1} parent=11 // pred_check
          %p387 = pneg %p146
        $region26: #{tpu_custom_call.1} parent=11 // pred_check_branch
          %389 = sbr.rel (%p387) target = $region28
        $region27: #{tpu_custom_call.1} parent=11 // pred_region
          _
        $region28: #{tpu_custom_call.1} parent=11 // pred_fallthru
          _
        // Predicated region
        $region29: #{tpu_custom_call.1} parent=11 // pred_check
          %p390 = pneg %p167
        $region30: #{tpu_custom_call.1} parent=11 // pred_check_branch
          %392 = sbr.rel (%p390) target = $region32
        $region31: #{tpu_custom_call.1} parent=11 // pred_region
          _
        $region32: #{tpu_custom_call.1} parent=11 // pred_fallthru
          _
        // Predicated region
        $region33: #{tpu_custom_call.1} parent=11 // pred_check
          %p393 = pneg %p188
        $region34: #{tpu_custom_call.1} parent=11 // pred_check_branch
          %395 = sbr.rel (%p393) target = $region36
        $region35: #{tpu_custom_call.1} parent=11 // pred_region
          _
        $region36: #{tpu_custom_call.1} parent=11 // pred_fallthru
          _
        // Predicated region
        $region37: #{tpu_custom_call.1} parent=11 // pred_check
          %p396 = pneg %p209
        $region38: #{tpu_custom_call.1} parent=11 // pred_check_branch
          %398 = sbr.rel (%p396) target = $region40
        $region39: #{tpu_custom_call.1} parent=11 // pred_region
          _
        $region40: #{tpu_custom_call.1} parent=11 // pred_fallthru
          _
        // Predicated region
        $region41: #{tpu_custom_call.1} parent=11 // pred_check
          %p399 = pneg %p230
        $region42: #{tpu_custom_call.1} parent=11 // pred_check_branch
          %401 = sbr.rel (%p399) target = $region44
        $region43: #{tpu_custom_call.1} parent=11 // pred_region
          %s403 = ssub.s32 256, 256
          %404 = vsyncadd [#allocation6], %s403
          %s405 = sshll.u32 [#allocation5], 4
          %s406 = int_to_ptr.vmem [resolvable:$true] %s405
          %411 = dma.hbm_to_vmem [thread:$0]  %s8, 256, %s406, [#allocation6], 64, 64, 4
        $region44: #{tpu_custom_call.1} parent=11 // pred_fallthru
          _
        // Predicated region
        $region45: #{tpu_custom_call.1} parent=11 // pred_check
          %p412 = pneg %p251
        $region46: #{tpu_custom_call.1} parent=11 // pred_check_branch
          %414 = sbr.rel (%p412) target = $region48
        $region47: #{tpu_custom_call.1} parent=11 // pred_region
          _
        $region48: #{tpu_custom_call.1} parent=11 // pred_fallthru
          _
        // Predicated region
        $region49: #{tpu_custom_call.1} parent=11 // pred_check
          %p415 = pneg %p272
        $region50: #{tpu_custom_call.1} parent=11 // pred_check_branch
          %417 = sbr.rel (%p415) target = $region52
        $region51: #{tpu_custom_call.1} parent=11 // pred_region
          _
        $region52: #{tpu_custom_call.1} parent=11 // pred_fallthru
          _
        // Predicated region
        $region53: #{tpu_custom_call.1} parent=11 // pred_check
          %p418 = pneg %p293
        $region54: #{tpu_custom_call.1} parent=11 // pred_check_branch
          %420 = sbr.rel (%p418) target = $region56
        $region55: #{tpu_custom_call.1} parent=11 // pred_region
          _
        $region56: #{tpu_custom_call.1} parent=11 // pred_fallthru
          _
        // Predicated region
        $region57: #{tpu_custom_call.1} parent=11 // pred_check
          %p421 = pneg %p314
        $region58: #{tpu_custom_call.1} parent=11 // pred_check_branch
          %423 = sbr.rel (%p421) target = $region60
        $region59: #{tpu_custom_call.1} parent=11 // pred_region
          _
        $region60: #{tpu_custom_call.1} parent=11 // pred_fallthru
          _
        // Predicated region
        $region61: #{tpu_custom_call.1} parent=11 // pred_check
          %p424 = pneg %p335
        $region62: #{tpu_custom_call.1} parent=11 // pred_check_branch
          %426 = sbr.rel (%p424) target = $region64
        $region63: #{tpu_custom_call.1} parent=11 // pred_region
          _
        $region64: #{tpu_custom_call.1} parent=11 // pred_fallthru
          _
      $region12: #{tpu_custom_call.1} parent=5 // pred_fallthru
        _
      %p427 = scmp.lt.s32.totalorder %s24, 2
      // Predicated region
      $region65: #{tpu_custom_call.1} parent=5 // pred_check
        %p428 = pneg %p427
      $region66: #{tpu_custom_call.1} parent=5 // pred_check_branch
        %430 = sbr.rel (%p428) target = $region68
      $region67: #{tpu_custom_call.1} parent=5 // pred_region
        // Predicated region
        $region69: #{tpu_custom_call.1} parent=67 // pred_check
          %p431 = pneg %p56
        $region70: #{tpu_custom_call.1} parent=67 // pred_check_branch
          %433 = sbr.rel (%p431) target = $region72
        $region71: #{tpu_custom_call.1} parent=67 // pred_region
          %p434 = scmp.lt.s32.totalorder %s31, 1
          %s435 = scalar_select %p434, %s31, 1
          %s436 = smul.addr %s435, 8
          %s437 = scalar_lea.vmem %s0, %s436
        $region72: #{tpu_custom_call.1} parent=67 // pred_fallthru
          _
      $region68: #{tpu_custom_call.1} parent=5 // pred_fallthru
        _
      %p438 = scmp.le.s32.totalorder 1, %s24
      %p439 = scmp.lt.s32.totalorder %s24, 3
      %p440 = pnand %p438, %p439
      %p441 = pneg %p440
      // Predicated region
      $region73: #{tpu_custom_call.1} parent=5 // pred_check
        _
      $region74: #{tpu_custom_call.1} parent=5 // pred_check_branch
        %443 = sbr.rel (%p440) target = $region76
      $region75: #{tpu_custom_call.1} parent=5 // pred_region
        %s444 = ssub.s32 %s24, 1
        // Predicated region
        $region77: #{tpu_custom_call.1} parent=75 // pred_check
          %p445 = pneg %p230
        $region78: #{tpu_custom_call.1} parent=75 // pred_check_branch
          %447 = sbr.rel (%p445) target = $region80
        $region79: #{tpu_custom_call.1} parent=75 // pred_region
          %448 = dma.done [#allocation6], 256
        $region80: #{tpu_custom_call.1} parent=75 // pred_fallthru
          _
        %p449 = scmp.lt.s32.totalorder %s33, 1
        %s450 = scalar_select %p449, %s33, 1
        %s451 = smul.addr %s450, 8
        %s452 = scalar_lea.vmem %s0, %s451
        %p453 = pneg %p62
        %p454 = pneg %p59
        %p455 = pneg %p83
        %p456 = pneg %p80
        %p457 = pneg %p104
        %p458 = pneg %p101
        %p459 = pneg %p125
        %p460 = pneg %p122
        %p461 = pneg %p146
        %p462 = pneg %p143
        %p463 = pneg %p167
        %p464 = pneg %p164
        %p465 = pneg %p188
        %p466 = pneg %p185
        %p467 = pneg %p209
        %p468 = pneg %p206
        %p469 = pneg %p230
        %p470 = pneg %p227
        %p471 = pneg %p251
        %p472 = pneg %p248
        %p473 = pneg %p272
        %p474 = pneg %p269
        %p475 = pneg %p293
        %p476 = pneg %p290
        %p477 = pneg %p314
        %p478 = pneg %p311
        %p479 = pneg %p335
        %p480 = pneg %p332
        %p481 = pneg %p363
        %p482 = pneg %p360
        %s483 = sand.u32 %s350, 1
        %s484 = scalar_lea.sflag [#allocation7], %s483
        %s485 = sand.u32 %s350, 1
        %s486 = smul.addr %s485, 8
        %s487 = scalar_lea.vmem [#allocation8], %s486
        %p488 = scmp.lt.s32.totalorder %s33, 1
        %s489 = scalar_select %p488, %s33, 1
        %s490 = smul.addr %s489, 8
        %s491 = scalar_lea.vmem %s0, %s490
        %p493 = scmp.eq.s32.totalorder %s34, 0
        // Predicated region
        $region81: #{tpu_custom_call.1} parent=75 // pred_check
          %p494 = pneg %p493
        $region82: #{tpu_custom_call.1} parent=75 // pred_check_branch
          %496 = sbr.rel (%p494) target = $region84
        $region83: #{tpu_custom_call.1} parent=75 // pred_region
          %v497 = vld [vmem:[%s491] sm:$0xff]
          %v498 = vpack.c.bf16 %v497, %v497
          %v499 = vld [vmem:[%s1] sm:$0xf]
          %v500 = vld [vmem:[%s1 + $0x4] sm:$0xf]
          %v501 = vld [vmem:[%s1 + $0x8] sm:$0xf]
          %v502 = vld [vmem:[%s1 + $0xc] sm:$0xf]
          %v507 = vunpack.c.l.b16 %v499
          %v508 = vunpack.c.l.b16 %v500
          %v509 = vunpack.c.l.b16 %v501
          %v510 = vunpack.c.l.b16 %v502
          %v511 = vpack.c.b16 %v508, %v507
          %v512 = vpack.c.b16 %v510, %v509
          %vm513 = vcmask 261120
          %v515 = vsel %vm513, %v511, 0
          %v518 = vsel %vm513, %v512, 0
          %v521 = vsel %vm513, %v498, 0
          %523 = vmatprep.subr.bf16.mxu0 0
          %524 = vmatpush1.bf16.xpose.msra.mxu0 %v521
          %525 = vmatprep.subr.bf16.mxu0 0
          %526 = vmatpush1.bf16.xpose.msra.mxu0 0
          %527 = vmatprep.subr.bf16.mxu0 0
          %528 = vmatpush1.bf16.xpose.msra.mxu0 0
          %529 = vmatprep.subr.bf16.mxu0 0
          %530 = vmatpush1.bf16.xpose.msra.mxu0 0
          %531 = vmatprep.subr.bf16.mxu0 0
          %532 = vmatpush1.bf16.xpose.msra.mxu0 0
          %533 = vmatprep.subr.bf16.mxu0 0
          %534 = vmatpush1.bf16.xpose.msra.mxu0 0
          %535 = vmatprep.subr.bf16.mxu0 0
          %536 = vmatpush1.bf16.xpose.msra.mxu0 0
          %537 = vmatprep.subr.bf16.mxu0 0
          %538 = vmatpush1.bf16.xpose.msra.mxu0 0
          %539 = vmatprep.subr.bf16.mxu0 0
          %540 = vmatpush1.bf16.xpose.msra.mxu0 0
          %541 = vmatprep.subr.bf16.mxu0 0
          %542 = vmatpush1.bf16.xpose.msra.mxu0 0
          %543 = vmatprep.subr.bf16.mxu0 0
          %544 = vmatpush1.bf16.xpose.msra.mxu0 0
          %545 = vmatprep.subr.bf16.mxu0 0
          %546 = vmatpush1.bf16.xpose.msra.mxu0 0
          %547 = vmatprep.subr.bf16.mxu0 0
          %548 = vmatpush1.bf16.xpose.msra.mxu0 0
          %549 = vmatprep.subr.bf16.mxu0 0
          %550 = vmatpush1.bf16.xpose.msra.mxu0 0
          %551 = vmatprep.subr.bf16.mxu0 0
          %552 = vmatpush1.bf16.xpose.msra.mxu0 0
          %553 = vmatprep.subr.bf16.mxu0 0
          %554 = vmatpush1.bf16.xpose.msra.mxu0 0
          %555 = vmatprep.mubr.bf16.mxu0 0
          %556 = vmatmul.mubr.bf16.gmra.mrb[0].mxu0 %v515
          %v557 = vpop.f32.mrb[0].mxu0
          %v558 = vadd.f32 0.0, %v557
          %v559 = vpop.f32.mrb[0].mxu0
          %v560 = vpop.f32.mrb[0].mxu0
          %v561 = vadd.f32 0.0, %v560
          %v562 = vpop.f32.mrb[0].mxu0
          %563 = vmatprep.mubr.bf16.mxu0 0
          %564 = vmatmul.mubr.bf16.gmra.mrb[0].mxu0 %v518
          %v565 = vpop.f32.mrb[0].mxu0
          %v566 = vadd.f32 0.0, %v565
          %v567 = vpop.f32.mrb[0].mxu0
          %v568 = vpop.f32.mrb[0].mxu0
          %v569 = vadd.f32 0.0, %v568
          %v570 = vpop.f32.mrb[0].mxu0
          %571 = vdwg.mxu0
          %v572 = vpack.c.bf16 %v558, %v558
          %v573 = vpack.c.bf16 %v561, %v561
          %v574 = vpack.c.bf16 %v566, %v566
          %v575 = vpack.c.bf16 %v569, %v569
          %vm576 = vcmask 60416
          %577 = vst.msk [vmem:[#allocation2] sm:$0xf] %vm576, %v572
          %578 = vst.msk [vmem:[#allocation2 + $0x4] sm:$0xf] %vm576, %v573
          %579 = vst.msk [vmem:[#allocation2 + $0x8] sm:$0xf] %vm576, %v574
          %580 = vst.msk [vmem:[#allocation2 + $0xc] sm:$0xf] %vm576, %v575
          %v581 = vld [vmem:[%s2] sm:$0xf]
          %v582 = vld [vmem:[%s2 + $0x4] sm:$0xf]
          %v583 = vld [vmem:[%s2 + $0x8] sm:$0xf]
          %v584 = vld [vmem:[%s2 + $0xc] sm:$0xf]
          %v589 = vunpack.c.l.b16 %v581
          %v590 = vunpack.c.l.b16 %v582
          %v591 = vunpack.c.l.b16 %v583
          %v592 = vunpack.c.l.b16 %v584
          %v593 = vpack.c.b16 %v590, %v589
          %v594 = vpack.c.b16 %v592, %v591
          %v596 = vsel %vm513, %v593, 0
          %v599 = vsel %vm513, %v594, 0
          %601 = vmatprep.subr.bf16.mxu0 0
          %602 = vmatpush1.bf16.xpose.msra.mxu0 %v521
          %603 = vmatprep.subr.bf16.mxu0 0
          %604 = vmatpush1.bf16.xpose.msra.mxu0 0
          %605 = vmatprep.subr.bf16.mxu0 0
          %606 = vmatpush1.bf16.xpose.msra.mxu0 0
          %607 = vmatprep.subr.bf16.mxu0 0
          %608 = vmatpush1.bf16.xpose.msra.mxu0 0
          %609 = vmatprep.subr.bf16.mxu0 0
          %610 = vmatpush1.bf16.xpose.msra.mxu0 0
          %611 = vmatprep.subr.bf16.mxu0 0
          %612 = vmatpush1.bf16.xpose.msra.mxu0 0
          %613 = vmatprep.subr.bf16.mxu0 0
          %614 = vmatpush1.bf16.xpose.msra.mxu0 0
          %615 = vmatprep.subr.bf16.mxu0 0
          %616 = vmatpush1.bf16.xpose.msra.mxu0 0
          %617 = vmatprep.subr.bf16.mxu0 0
          %618 = vmatpush1.bf16.xpose.msra.mxu0 0
          %619 = vmatprep.subr.bf16.mxu0 0
          %620 = vmatpush1.bf16.xpose.msra.mxu0 0
          %621 = vmatprep.subr.bf16.mxu0 0
          %622 = vmatpush1.bf16.xpose.msra.mxu0 0
          %623 = vmatprep.subr.bf16.mxu0 0
          %624 = vmatpush1.bf16.xpose.msra.mxu0 0
          %625 = vmatprep.subr.bf16.mxu0 0
          %626 = vmatpush1.bf16.xpose.msra.mxu0 0
          %627 = vmatprep.subr.bf16.mxu0 0
          %628 = vmatpush1.bf16.xpose.msra.mxu0 0
          %629 = vmatprep.subr.bf16.mxu0 0
          %630 = vmatpush1.bf16.xpose.msra.mxu0 0
          %631 = vmatprep.subr.bf16.mxu0 0
          %632 = vmatpush1.bf16.xpose.msra.mxu0 0
          %633 = vmatprep.mubr.bf16.mxu0 0
          %634 = vmatmul.mubr.bf16.gmra.mrb[0].mxu0 %v596
          %v635 = vpop.f32.mrb[0].mxu0
          %v636 = vadd.f32 0.0, %v635
          %v637 = vpop.f32.mrb[0].mxu0
          %v638 = vpop.f32.mrb[0].mxu0
          %v639 = vadd.f32 0.0, %v638
          %v640 = vpop.f32.mrb[0].mxu0
          %641 = vmatprep.mubr.bf16.mxu0 0
          %642 = vmatmul.mubr.bf16.gmra.mrb[0].mxu0 %v599
          %v643 = vpop.f32.mrb[0].mxu0
          %v644 = vadd.f32 0.0, %v643
          %v645 = vpop.f32.mrb[0].mxu0
          %v646 = vpop.f32.mrb[0].mxu0
          %v647 = vadd.f32 0.0, %v646
          %v648 = vpop.f32.mrb[0].mxu0
          %649 = vdwg.mxu0
          %v650 = vpack.c.bf16 %v636, %v636
          %v651 = vpack.c.bf16 %v639, %v639
          %v652 = vpack.c.bf16 %v644, %v644
          %v653 = vpack.c.bf16 %v647, %v647
          %654 = vst.msk [vmem:[#allocation3] sm:$0xf] %vm576, %v650
          %655 = vst.msk [vmem:[#allocation3 + $0x4] sm:$0xf] %vm576, %v651
          %656 = vst.msk [vmem:[#allocation3 + $0x8] sm:$0xf] %vm576, %v652
          %657 = vst.msk [vmem:[#allocation3 + $0xc] sm:$0xf] %vm576, %v653
          %v658 = vld [vmem:[%s3] sm:$0xf]
          %v659 = vld [vmem:[%s3 + $0x4] sm:$0xf]
          %v660 = vld [vmem:[%s3 + $0x8] sm:$0xf]
          %v661 = vld [vmem:[%s3 + $0xc] sm:$0xf]
          %v666 = vunpack.c.l.b16 %v658
          %v667 = vunpack.c.l.b16 %v659
          %v668 = vunpack.c.l.b16 %v660
          %v669 = vunpack.c.l.b16 %v661
          %v670 = vpack.c.b16 %v667, %v666
          %v671 = vpack.c.b16 %v669, %v668
          %v673 = vsel %vm513, %v670, 0
          %v676 = vsel %vm513, %v671, 0
          %678 = vmatprep.subr.bf16.mxu0 0
          %679 = vmatpush1.bf16.xpose.msra.mxu0 %v521
          %680 = vmatprep.subr.bf16.mxu0 0
          %681 = vmatpush1.bf16.xpose.msra.mxu0 0
          %682 = vmatprep.subr.bf16.mxu0 0
          %683 = vmatpush1.bf16.xpose.msra.mxu0 0
          %684 = vmatprep.subr.bf16.mxu0 0
          %685 = vmatpush1.bf16.xpose.msra.mxu0 0
          %686 = vmatprep.subr.bf16.mxu0 0
          %687 = vmatpush1.bf16.xpose.msra.mxu0 0
          %688 = vmatprep.subr.bf16.mxu0 0
          %689 = vmatpush1.bf16.xpose.msra.mxu0 0
          %690 = vmatprep.subr.bf16.mxu0 0
          %691 = vmatpush1.bf16.xpose.msra.mxu0 0
          %692 = vmatprep.subr.bf16.mxu0 0
          %693 = vmatpush1.bf16.xpose.msra.mxu0 0
          %694 = vmatprep.subr.bf16.mxu0 0
          %695 = vmatpush1.bf16.xpose.msra.mxu0 0
          %696 = vmatprep.subr.bf16.mxu0 0
          %697 = vmatpush1.bf16.xpose.msra.mxu0 0
          %698 = vmatprep.subr.bf16.mxu0 0
          %699 = vmatpush1.bf16.xpose.msra.mxu0 0
          %700 = vmatprep.subr.bf16.mxu0 0
          %701 = vmatpush1.bf16.xpose.msra.mxu0 0
          %702 = vmatprep.subr.bf16.mxu0 0
          %703 = vmatpush1.bf16.xpose.msra.mxu0 0
          %704 = vmatprep.subr.bf16.mxu0 0
          %705 = vmatpush1.bf16.xpose.msra.mxu0 0
          %706 = vmatprep.subr.bf16.mxu0 0
          %707 = vmatpush1.bf16.xpose.msra.mxu0 0
          %708 = vmatprep.subr.bf16.mxu0 0
          %709 = vmatpush1.bf16.xpose.msra.mxu0 0
          %710 = vmatprep.mubr.bf16.mxu0 0
          %711 = vmatmul.mubr.bf16.gmra.mrb[0].mxu0 %v673
          %v712 = vpop.f32.mrb[0].mxu0
          %v713 = vadd.f32 0.0, %v712
          %v714 = vpop.f32.mrb[0].mxu0
          %v715 = vpop.f32.mrb[0].mxu0
          %v716 = vadd.f32 0.0, %v715
          %v717 = vpop.f32.mrb[0].mxu0
          %718 = vmatprep.mubr.bf16.mxu0 0
          %719 = vmatmul.mubr.bf16.gmra.mrb[0].mxu0 %v676
          %v720 = vpop.f32.mrb[0].mxu0
          %v721 = vadd.f32 0.0, %v720
          %v722 = vpop.f32.mrb[0].mxu0
          %v723 = vpop.f32.mrb[0].mxu0
          %v724 = vadd.f32 0.0, %v723
          %v725 = vpop.f32.mrb[0].mxu0
          %726 = vdwg.mxu0
          %v727 = vpack.c.bf16 %v713, %v713
          %v728 = vpack.c.bf16 %v716, %v716
          %v729 = vpack.c.bf16 %v721, %v721
          %v730 = vpack.c.bf16 %v724, %v724
          %731 = vst.msk [vmem:[#allocation4] sm:$0xf] %vm576, %v727
          %732 = vst.msk [vmem:[#allocation4 + $0x4] sm:$0xf] %vm576, %v728
          %733 = vst.msk [vmem:[#allocation4 + $0x8] sm:$0xf] %vm576, %v729
          %734 = vst.msk [vmem:[#allocation4 + $0xc] sm:$0xf] %vm576, %v730
        $region84: #{tpu_custom_call.1} parent=75 // pred_fallthru
          _
        %s735 = smul.u32 %s34, 8
        %s736 = sshra.s32 %s735, 3
        %s737 = sand.u32 %s735, 7
        %s738 = smul.addr %s736, 4
        %s739 = scalar_lea.vmem [#allocation2], %s738
        %v740 = vld [vmem:[%s739] sm:$0xf]
        %v741 = vld [vmem:[%s739 + $0x4] sm:$0xf]
        %v742 = vld [vmem:[%s739 + $0x8] sm:$0xf]
        %v743 = vld [vmem:[%s739 + $0xc] sm:$0xf]
        %v744 = vld [vmem:[#allocation3] sm:$0xf]
        %v745 = vld [vmem:[#allocation3 + $0x4] sm:$0xf]
        %v746 = vld [vmem:[#allocation3 + $0x8] sm:$0xf]
        %v747 = vld [vmem:[#allocation3 + $0xc] sm:$0xf]
        %vm748 = vcmask 64512
        %v750 = vsel %vm748, %v740, 0
        %v753 = vsel %vm748, %v744, 0
        %755 = vmatprep.subr.bf16.mxu0 0
        %756 = vmatpush1.bf16.xpose.msra.mxu0 %v753
        %757 = vmatprep.subr.bf16.mxu0 0
        %758 = vmatpush1.bf16.xpose.msra.mxu0 0
        %759 = vmatprep.subr.bf16.mxu0 0
        %760 = vmatpush1.bf16.xpose.msra.mxu0 0
        %761 = vmatprep.subr.bf16.mxu0 0
        %762 = vmatpush1.bf16.xpose.msra.mxu0 0
        %763 = vmatprep.subr.bf16.mxu0 0
        %764 = vmatpush1.bf16.xpose.msra.mxu0 0
        %765 = vmatprep.subr.bf16.mxu0 0
        %766 = vmatpush1.bf16.xpose.msra.mxu0 0
        %767 = vmatprep.subr.bf16.mxu0 0
        %768 = vmatpush1.bf16.xpose.msra.mxu0 0
        %769 = vmatprep.subr.bf16.mxu0 0
        %770 = vmatpush1.bf16.xpose.msra.mxu0 0
        %771 = vmatprep.subr.bf16.mxu0 0
        %772 = vmatpush1.bf16.xpose.msra.mxu0 0
        %773 = vmatprep.subr.bf16.mxu0 0
        %774 = vmatpush1.bf16.xpose.msra.mxu0 0
        %775 = vmatprep.subr.bf16.mxu0 0
        %776 = vmatpush1.bf16.xpose.msra.mxu0 0
        %777 = vmatprep.subr.bf16.mxu0 0
        %778 = vmatpush1.bf16.xpose.msra.mxu0 0
        %779 = vmatprep.subr.bf16.mxu0 0
        %780 = vmatpush1.bf16.xpose.msra.mxu0 0
        %781 = vmatprep.subr.bf16.mxu0 0
        %782 = vmatpush1.bf16.xpose.msra.mxu0 0
        %783 = vmatprep.subr.bf16.mxu0 0
        %784 = vmatpush1.bf16.xpose.msra.mxu0 0
        %785 = vmatprep.subr.bf16.mxu0 0
        %786 = vmatpush1.bf16.xpose.msra.mxu0 0
        %787 = vmatprep.mubr.bf16.mxu0 0
        %788 = vmatmul.mubr.bf16.gmra.mrb[0].mxu0 %v750
        %v789 = vpop.f32.mrb[0].mxu0
        %v790 = vadd.f32 0.0, %v789
        %v791 = vpop.f32.mrb[0].mxu0
        %v792 = vpop.f32.mrb[0].mxu0
        %v793 = vpop.f32.mrb[0].mxu0
        %794 = vdwg.mxu0
        %v796 = vsel %vm748, %v741, 0
        %v799 = vsel %vm748, %v745, 0
        %801 = vmatprep.subr.bf16.mxu0 0
        %802 = vmatpush1.bf16.xpose.msra.mxu0 %v799
        %803 = vmatprep.subr.bf16.mxu0 0
        %804 = vmatpush1.bf16.xpose.msra.mxu0 0
        %805 = vmatprep.subr.bf16.mxu0 0
        %806 = vmatpush1.bf16.xpose.msra.mxu0 0
        %807 = vmatprep.subr.bf16.mxu0 0
        %808 = vmatpush1.bf16.xpose.msra.mxu0 0
        %809 = vmatprep.subr.bf16.mxu0 0
        %810 = vmatpush1.bf16.xpose.msra.mxu0 0
        %811 = vmatprep.subr.bf16.mxu0 0
        %812 = vmatpush1.bf16.xpose.msra.mxu0 0
        %813 = vmatprep.subr.bf16.mxu0 0
        %814 = vmatpush1.bf16.xpose.msra.mxu0 0
        %815 = vmatprep.subr.bf16.mxu0 0
        %816 = vmatpush1.bf16.xpose.msra.mxu0 0
        %817 = vmatprep.subr.bf16.mxu0 0
        %818 = vmatpush1.bf16.xpose.msra.mxu0 0
        %819 = vmatprep.subr.bf16.mxu0 0
        %820 = vmatpush1.bf16.xpose.msra.mxu0 0
        %821 = vmatprep.subr.bf16.mxu0 0
        %822 = vmatpush1.bf16.xpose.msra.mxu0 0
        %823 = vmatprep.subr.bf16.mxu0 0
        %824 = vmatpush1.bf16.xpose.msra.mxu0 0
        %825 = vmatprep.subr.bf16.mxu0 0
        %826 = vmatpush1.bf16.xpose.msra.mxu0 0
        %827 = vmatprep.subr.bf16.mxu0 0
        %828 = vmatpush1.bf16.xpose.msra.mxu0 0
        %829 = vmatprep.subr.bf16.mxu0 0
        %830 = vmatpush1.bf16.xpose.msra.mxu0 0
        %831 = vmatprep.subr.bf16.mxu0 0
        %832 = vmatpush1.bf16.xpose.msra.mxu0 0
        %833 = vmatprep.mubr.bf16.mxu0 0
        %834 = vmatmul.mubr.bf16.gmra.mrb[0].mxu0 %v796
        %v835 = vpop.f32.mrb[0].mxu0
        %v836 = vadd.f32 0.0, %v835
        %v837 = vpop.f32.mrb[0].mxu0
        %v838 = vpop.f32.mrb[0].mxu0
        %v839 = vpop.f32.mrb[0].mxu0
        %840 = vdwg.mxu0
        %v842 = vsel %vm748, %v742, 0
        %v845 = vsel %vm748, %v746, 0
        %847 = vmatprep.subr.bf16.mxu0 0
        %848 = vmatpush1.bf16.xpose.msra.mxu0 %v845
        %849 = vmatprep.subr.bf16.mxu0 0
        %850 = vmatpush1.bf16.xpose.msra.mxu0 0
        %851 = vmatprep.subr.bf16.mxu0 0
        %852 = vmatpush1.bf16.xpose.msra.mxu0 0
        %853 = vmatprep.subr.bf16.mxu0 0
        %854 = vmatpush1.bf16.xpose.msra.mxu0 0
        %855 = vmatprep.subr.bf16.mxu0 0
        %856 = vmatpush1.bf16.xpose.msra.mxu0 0
        %857 = vmatprep.subr.bf16.mxu0 0
        %858 = vmatpush1.bf16.xpose.msra.mxu0 0
        %859 = vmatprep.subr.bf16.mxu0 0
        %860 = vmatpush1.bf16.xpose.msra.mxu0 0
        %861 = vmatprep.subr.bf16.mxu0 0
        %862 = vmatpush1.bf16.xpose.msra.mxu0 0
        %863 = vmatprep.subr.bf16.mxu0 0
        %864 = vmatpush1.bf16.xpose.msra.mxu0 0
        %865 = vmatprep.subr.bf16.mxu0 0
        %866 = vmatpush1.bf16.xpose.msra.mxu0 0
        %867 = vmatprep.subr.bf16.mxu0 0
        %868 = vmatpush1.bf16.xpose.msra.mxu0 0
        %869 = vmatprep.subr.bf16.mxu0 0
        %870 = vmatpush1.bf16.xpose.msra.mxu0 0
        %871 = vmatprep.subr.bf16.mxu0 0
        %872 = vmatpush1.bf16.xpose.msra.mxu0 0
        %873 = vmatprep.subr.bf16.mxu0 0
        %874 = vmatpush1.bf16.xpose.msra.mxu0 0
        %875 = vmatprep.subr.bf16.mxu0 0
        %876 = vmatpush1.bf16.xpose.msra.mxu0 0
        %877 = vmatprep.subr.bf16.mxu0 0
        %878 = vmatpush1.bf16.xpose.msra.mxu0 0
        %879 = vmatprep.mubr.bf16.mxu0 0
        %880 = vmatmul.mubr.bf16.gmra.mrb[0].mxu0 %v842
        %v881 = vpop.f32.mrb[0].mxu0
        %v882 = vadd.f32 0.0, %v881
        %v883 = vpop.f32.mrb[0].mxu0
        %v884 = vpop.f32.mrb[0].mxu0
        %v885 = vpop.f32.mrb[0].mxu0
        %886 = vdwg.mxu0
        %v888 = vsel %vm748, %v743, 0
        %v891 = vsel %vm748, %v747, 0
        %893 = vmatprep.subr.bf16.mxu0 0
        %894 = vmatpush1.bf16.xpose.msra.mxu0 %v891
        %895 = vmatprep.subr.bf16.mxu0 0
        %896 = vmatpush1.bf16.xpose.msra.mxu0 0
        %897 = vmatprep.subr.bf16.mxu0 0
        %898 = vmatpush1.bf16.xpose.msra.mxu0 0
        %899 = vmatprep.subr.bf16.mxu0 0
        %900 = vmatpush1.bf16.xpose.msra.mxu0 0
        %901 = vmatprep.subr.bf16.mxu0 0
        %902 = vmatpush1.bf16.xpose.msra.mxu0 0
        %903 = vmatprep.subr.bf16.mxu0 0
        %904 = vmatpush1.bf16.xpose.msra.mxu0 0
        %905 = vmatprep.subr.bf16.mxu0 0
        %906 = vmatpush1.bf16.xpose.msra.mxu0 0
        %907 = vmatprep.subr.bf16.mxu0 0
        %908 = vmatpush1.bf16.xpose.msra.mxu0 0
        %909 = vmatprep.subr.bf16.mxu0 0
        %910 = vmatpush1.bf16.xpose.msra.mxu0 0
        %911 = vmatprep.subr.bf16.mxu0 0
        %912 = vmatpush1.bf16.xpose.msra.mxu0 0
        %913 = vmatprep.subr.bf16.mxu0 0
        %914 = vmatpush1.bf16.xpose.msra.mxu0 0
        %915 = vmatprep.subr.bf16.mxu0 0
        %916 = vmatpush1.bf16.xpose.msra.mxu0 0
        %917 = vmatprep.subr.bf16.mxu0 0
        %918 = vmatpush1.bf16.xpose.msra.mxu0 0
        %919 = vmatprep.subr.bf16.mxu0 0
        %920 = vmatpush1.bf16.xpose.msra.mxu0 0
        %921 = vmatprep.subr.bf16.mxu0 0
        %922 = vmatpush1.bf16.xpose.msra.mxu0 0
        %923 = vmatprep.subr.bf16.mxu0 0
        %924 = vmatpush1.bf16.xpose.msra.mxu0 0
        %925 = vmatprep.mubr.bf16.mxu0 0
        %926 = vmatmul.mubr.bf16.gmra.mrb[0].mxu0 %v888
        %v927 = vpop.f32.mrb[0].mxu0
        %v928 = vadd.f32 0.0, %v927
        %v929 = vpop.f32.mrb[0].mxu0
        %v930 = vpop.f32.mrb[0].mxu0
        %v931 = vpop.f32.mrb[0].mxu0
        %932 = vdwg.mxu0
        %v933 = vmul.f32 %v790, 0.17677669
        %v934 = vmul.f32 %v836, 0.17677669
        %v935 = vmul.f32 %v882, 0.17677669
        %v936 = vmul.f32 %v928, 0.17677669
        %v937 = vsel %vm748, %v933, -inf
        %938 = vmax.xlane.f32.xlu0 %v937
        %v939 = vpop.xlane.xlu0 %938
        %v940 = vsel %vm748, %v934, -inf
        %941 = vmax.xlane.f32.xlu0 %v940
        %v942 = vpop.xlane.xlu0 %941
        %v943 = vsel %vm748, %v935, -inf
        %944 = vmax.xlane.f32.xlu0 %v943
        %v945 = vpop.xlane.xlu0 %944
        %v946 = vsel %vm748, %v936, -inf
        %947 = vmax.xlane.f32.xlu0 %v946
        %v948 = vpop.xlane.xlu0 %947
        %v949 = vsub.f32 %v933, %v939
        %v950 = vsub.f32 %v934, %v942
        %v951 = vsub.f32 %v935, %v945
        %v952 = vsub.f32 %v936, %v948
        %v953 = vmul.f32 %v949, 1.442695
        %v954 = vpow.pop %v953
        %v955 = vmul.f32 %v950, 1.442695
        %v956 = vpow.pop %v955
        %v957 = vmul.f32 %v951, 1.442695
        %v958 = vpow.pop %v957
        %v959 = vmul.f32 %v952, 1.442695
        %v960 = vpow.pop %v959
        %v961 = vsel %vm748, %v954, 0.0
        %962 = vadd.xlane.f32.xlu0 %v961
        %v963 = vpop.xlane.xlu0 %962
        %v964 = vsel %vm748, %v956, 0.0
        %965 = vadd.xlane.f32.xlu0 %v964
        %v966 = vpop.xlane.xlu0 %965
        %v967 = vsel %vm748, %v958, 0.0
        %968 = vadd.xlane.f32.xlu0 %v967
        %v969 = vpop.xlane.xlu0 %968
        %v970 = vsel %vm748, %v960, 0.0
        %971 = vadd.xlane.f32.xlu0 %v970
        %v972 = vpop.xlane.xlu0 %971
        %v973 = vrcp.pop %v963
        %v974 = vrcp.pop %v966
        %v975 = vrcp.pop %v969
        %v976 = vrcp.pop %v972
        %v977 = vmul.f32 %v954, %v973
        %v978 = vmul.f32 %v956, %v974
        %v979 = vmul.f32 %v958, %v975
        %v980 = vmul.f32 %v960, %v976
        %v981 = vpack.c.bf16 %v977, %v977
        %v982 = vpack.c.bf16 %v978, %v978
        %v983 = vpack.c.bf16 %v979, %v979
        %v984 = vpack.c.bf16 %v980, %v980
        %v985 = vld [vmem:[#allocation4] sm:$0xf]
        %v986 = vld [vmem:[#allocation4 + $0x4] sm:$0xf]
        %v987 = vld [vmem:[#allocation4 + $0x8] sm:$0xf]
        %v988 = vld [vmem:[#allocation4 + $0xc] sm:$0xf]
        %v990 = vsel %vm748, %v981, 0
        %vm992 = vcmask 1043456
        %v994 = vsel %vm992, %v985, 0
        %996 = vmatprep.subr.bf16.mxu0 0
        %997 = vmatpush1.bf16.msra.mxu0 %v994
        %998 = vmatprep.subr.bf16.mxu0 0
        %999 = vmatpush1.bf16.msra.mxu0 0
        %1000 = vmatprep.subr.bf16.mxu0 0
        %1001 = vmatpush1.bf16.msra.mxu0 0
        %1002 = vmatprep.subr.bf16.mxu0 0
        %1003 = vmatpush1.bf16.msra.mxu0 0
        %1004 = vmatprep.subr.bf16.mxu0 0
        %1005 = vmatpush1.bf16.msra.mxu0 0
        %1006 = vmatprep.subr.bf16.mxu0 0
        %1007 = vmatpush1.bf16.msra.mxu0 0
        %1008 = vmatprep.subr.bf16.mxu0 0
        %1009 = vmatpush1.bf16.msra.mxu0 0
        %1010 = vmatprep.subr.bf16.mxu0 0
        %1011 = vmatpush1.bf16.msra.mxu0 0
        %1012 = vmatprep.subr.bf16.mxu0 0
        %1013 = vmatpush1.bf16.msra.mxu0 0
        %1014 = vmatprep.subr.bf16.mxu0 0
        %1015 = vmatpush1.bf16.msra.mxu0 0
        %1016 = vmatprep.subr.bf16.mxu0 0
        %1017 = vmatpush1.bf16.msra.mxu0 0
        %1018 = vmatprep.subr.bf16.mxu0 0
        %1019 = vmatpush1.bf16.msra.mxu0 0
        %1020 = vmatprep.subr.bf16.mxu0 0
        %1021 = vmatpush1.bf16.msra.mxu0 0
        %1022 = vmatprep.subr.bf16.mxu0 0
        %1023 = vmatpush1.bf16.msra.mxu0 0
        %1024 = vmatprep.subr.bf16.mxu0 0
        %1025 = vmatpush1.bf16.msra.mxu0 0
        %1026 = vmatprep.subr.bf16.mxu0 0
        %1027 = vmatpush1.bf16.msra.mxu0 0
        %1028 = vmatprep.mubr.bf16.mxu0 0
        %1029 = vmatmul.mubr.bf16.gmra.mrb[0].mxu0 %v990
        %v1030 = vpop.f32.mrb[0].mxu0
        %v1031 = vadd.f32 0.0, %v1030
        %v1032 = vpop.f32.mrb[0].mxu0
        %v1033 = vpop.f32.mrb[0].mxu0
        %v1034 = vpop.f32.mrb[0].mxu0
        %1035 = vdwg.mxu0
        %v1037 = vsel %vm748, %v982, 0
        %v1040 = vsel %vm992, %v986, 0
        %1042 = vmatprep.subr.bf16.mxu0 0
        %1043 = vmatpush1.bf16.msra.mxu0 %v1040
        %1044 = vmatprep.subr.bf16.mxu0 0
        %1045 = vmatpush1.bf16.msra.mxu0 0
        %1046 = vmatprep.subr.bf16.mxu0 0
        %1047 = vmatpush1.bf16.msra.mxu0 0
        %1048 = vmatprep.subr.bf16.mxu0 0
        %1049 = vmatpush1.bf16.msra.mxu0 0
        %1050 = vmatprep.subr.bf16.mxu0 0
        %1051 = vmatpush1.bf16.msra.mxu0 0
        %1052 = vmatprep.subr.bf16.mxu0 0
        %1053 = vmatpush1.bf16.msra.mxu0 0
        %1054 = vmatprep.subr.bf16.mxu0 0
        %1055 = vmatpush1.bf16.msra.mxu0 0
        %1056 = vmatprep.subr.bf16.mxu0 0
        %1057 = vmatpush1.bf16.msra.mxu0 0
        %1058 = vmatprep.subr.bf16.mxu0 0
        %1059 = vmatpush1.bf16.msra.mxu0 0
        %1060 = vmatprep.subr.bf16.mxu0 0
        %1061 = vmatpush1.bf16.msra.mxu0 0
        %1062 = vmatprep.subr.bf16.mxu0 0
        %1063 = vmatpush1.bf16.msra.mxu0 0
        %1064 = vmatprep.subr.bf16.mxu0 0
        %1065 = vmatpush1.bf16.msra.mxu0 0
        %1066 = vmatprep.subr.bf16.mxu0 0
        %1067 = vmatpush1.bf16.msra.mxu0 0
        %1068 = vmatprep.subr.bf16.mxu0 0
        %1069 = vmatpush1.bf16.msra.mxu0 0
        %1070 = vmatprep.subr.bf16.mxu0 0
        %1071 = vmatpush1.bf16.msra.mxu0 0
        %1072 = vmatprep.subr.bf16.mxu0 0
        %1073 = vmatpush1.bf16.msra.mxu0 0
        %1074 = vmatprep.mubr.bf16.mxu0 0
        %1075 = vmatmul.mubr.bf16.gmra.mrb[0].mxu0 %v1037
        %v1076 = vpop.f32.mrb[0].mxu0
        %v1077 = vadd.f32 0.0, %v1076
        %v1078 = vpop.f32.mrb[0].mxu0
        %v1079 = vpop.f32.mrb[0].mxu0
        %v1080 = vpop.f32.mrb[0].mxu0
        %1081 = vdwg.mxu0
        %v1083 = vsel %vm748, %v983, 0
        %v1086 = vsel %vm992, %v987, 0
        %1088 = vmatprep.subr.bf16.mxu0 0
        %1089 = vmatpush1.bf16.msra.mxu0 %v1086
        %1090 = vmatprep.subr.bf16.mxu0 0
        %1091 = vmatpush1.bf16.msra.mxu0 0
        %1092 = vmatprep.subr.bf16.mxu0 0
        %1093 = vmatpush1.bf16.msra.mxu0 0
        %1094 = vmatprep.subr.bf16.mxu0 0
        %1095 = vmatpush1.bf16.msra.mxu0 0
        %1096 = vmatprep.subr.bf16.mxu0 0
        %1097 = vmatpush1.bf16.msra.mxu0 0
        %1098 = vmatprep.subr.bf16.mxu0 0
        %1099 = vmatpush1.bf16.msra.mxu0 0
        %1100 = vmatprep.subr.bf16.mxu0 0
        %1101 = vmatpush1.bf16.msra.mxu0 0
        %1102 = vmatprep.subr.bf16.mxu0 0
        %1103 = vmatpush1.bf16.msra.mxu0 0
        %1104 = vmatprep.subr.bf16.mxu0 0
        %1105 = vmatpush1.bf16.msra.mxu0 0
        %1106 = vmatprep.subr.bf16.mxu0 0
        %1107 = vmatpush1.bf16.msra.mxu0 0
        %1108 = vmatprep.subr.bf16.mxu0 0
        %1109 = vmatpush1.bf16.msra.mxu0 0
        %1110 = vmatprep.subr.bf16.mxu0 0
        %1111 = vmatpush1.bf16.msra.mxu0 0
        %1112 = vmatprep.subr.bf16.mxu0 0
        %1113 = vmatpush1.bf16.msra.mxu0 0
        %1114 = vmatprep.subr.bf16.mxu0 0
        %1115 = vmatpush1.bf16.msra.mxu0 0
        %1116 = vmatprep.subr.bf16.mxu0 0
        %1117 = vmatpush1.bf16.msra.mxu0 0
        %1118 = vmatprep.subr.bf16.mxu0 0
        %1119 = vmatpush1.bf16.msra.mxu0 0
        %1120 = vmatprep.mubr.bf16.mxu0 0
        %1121 = vmatmul.mubr.bf16.gmra.mrb[0].mxu0 %v1083
        %v1122 = vpop.f32.mrb[0].mxu0
        %v1123 = vadd.f32 0.0, %v1122
        %v1124 = vpop.f32.mrb[0].mxu0
        %v1125 = vpop.f32.mrb[0].mxu0
        %v1126 = vpop.f32.mrb[0].mxu0
        %1127 = vdwg.mxu0
        %v1129 = vsel %vm748, %v984, 0
        %v1132 = vsel %vm992, %v988, 0
        %1134 = vmatprep.subr.bf16.mxu0 0
        %1135 = vmatpush1.bf16.msra.mxu0 %v1132
        %1136 = vmatprep.subr.bf16.mxu0 0
        %1137 = vmatpush1.bf16.msra.mxu0 0
        %1138 = vmatprep.subr.bf16.mxu0 0
        %1139 = vmatpush1.bf16.msra.mxu0 0
        %1140 = vmatprep.subr.bf16.mxu0 0
        %1141 = vmatpush1.bf16.msra.mxu0 0
        %1142 = vmatprep.subr.bf16.mxu0 0
        %1143 = vmatpush1.bf16.msra.mxu0 0
        %1144 = vmatprep.subr.bf16.mxu0 0
        %1145 = vmatpush1.bf16.msra.mxu0 0
        %1146 = vmatprep.subr.bf16.mxu0 0
        %1147 = vmatpush1.bf16.msra.mxu0 0
        %1148 = vmatprep.subr.bf16.mxu0 0
        %1149 = vmatpush1.bf16.msra.mxu0 0
        %1150 = vmatprep.subr.bf16.mxu0 0
        %1151 = vmatpush1.bf16.msra.mxu0 0
        %1152 = vmatprep.subr.bf16.mxu0 0
        %1153 = vmatpush1.bf16.msra.mxu0 0
        %1154 = vmatprep.subr.bf16.mxu0 0
        %1155 = vmatpush1.bf16.msra.mxu0 0
        %1156 = vmatprep.subr.bf16.mxu0 0
        %1157 = vmatpush1.bf16.msra.mxu0 0
        %1158 = vmatprep.subr.bf16.mxu0 0
        %1159 = vmatpush1.bf16.msra.mxu0 0
        %1160 = vmatprep.subr.bf16.mxu0 0
        %1161 = vmatpush1.bf16.msra.mxu0 0
        %1162 = vmatprep.subr.bf16.mxu0 0
        %1163 = vmatpush1.bf16.msra.mxu0 0
        %1164 = vmatprep.subr.bf16.mxu0 0
        %1165 = vmatpush1.bf16.msra.mxu0 0
        %1166 = vmatprep.mubr.bf16.mxu0 0
        %1167 = vmatmul.mubr.bf16.gmra.mrb[0].mxu0 %v1129
        %v1168 = vpop.f32.mrb[0].mxu0
        %v1169 = vadd.f32 0.0, %v1168
        %v1170 = vpop.f32.mrb[0].mxu0
        %v1171 = vpop.f32.mrb[0].mxu0
        %v1172 = vpop.f32.mrb[0].mxu0
        %1173 = vdwg.mxu0
        %v1174 = vpack.c.bf16 %v1031, %v1031
        %v1175 = vpack.c.bf16 %v1077, %v1077
        %v1176 = vpack.c.bf16 %v1123, %v1123
        %v1177 = vpack.c.bf16 %v1169, %v1169
        %v1178 = vld [vmem:[%s4] sm:$0xf]
        %s1179 = scalar_lea.vmem %s4, 4
        %v1180 = vld [vmem:[%s1179] sm:$0xf]
        %v1182 = vsel %vm748, %v1175, 0
        %v1185 = vsel %vm992, %v1180, 0
        %1187 = vmatprep.subr.bf16.mxu0 0
        %1188 = vmatpush1.bf16.msra.mxu0 %v1185
        %1189 = vmatprep.subr.bf16.mxu0 0
        %1190 = vmatpush1.bf16.msra.mxu0 0
        %1191 = vmatprep.subr.bf16.mxu0 0
        %1192 = vmatpush1.bf16.msra.mxu0 0
        %1193 = vmatprep.subr.bf16.mxu0 0
        %1194 = vmatpush1.bf16.msra.mxu0 0
        %1195 = vmatprep.subr.bf16.mxu0 0
        %1196 = vmatpush1.bf16.msra.mxu0 0
        %1197 = vmatprep.subr.bf16.mxu0 0
        %1198 = vmatpush1.bf16.msra.mxu0 0
        %1199 = vmatprep.subr.bf16.mxu0 0
        %1200 = vmatpush1.bf16.msra.mxu0 0
        %1201 = vmatprep.subr.bf16.mxu0 0
        %1202 = vmatpush1.bf16.msra.mxu0 0
        %1203 = vmatprep.subr.bf16.mxu0 0
        %1204 = vmatpush1.bf16.msra.mxu0 0
        %1205 = vmatprep.subr.bf16.mxu0 0
        %1206 = vmatpush1.bf16.msra.mxu0 0
        %1207 = vmatprep.subr.bf16.mxu0 0
        %1208 = vmatpush1.bf16.msra.mxu0 0
        %1209 = vmatprep.subr.bf16.mxu0 0
        %1210 = vmatpush1.bf16.msra.mxu0 0
        %1211 = vmatprep.subr.bf16.mxu0 0
        %1212 = vmatpush1.bf16.msra.mxu0 0
        %1213 = vmatprep.subr.bf16.mxu0 0
        %1214 = vmatpush1.bf16.msra.mxu0 0
        %1215 = vmatprep.subr.bf16.mxu0 0
        %1216 = vmatpush1.bf16.msra.mxu0 0
        %1217 = vmatprep.subr.bf16.mxu0 0
        %1218 = vmatpush1.bf16.msra.mxu0 0
        %1219 = vmatprep.mubr.bf16.mxu0 0
        %1220 = vmatmul.mubr.bf16.gmra.mrb[0].mxu0 %v1182
        %v1221 = vpop.f32.mrb[0].mxu0
        %v1222 = vadd.f32 0.0, %v1221
        %v1223 = vpop.f32.mrb[0].mxu0
        %v1224 = vpop.f32.mrb[0].mxu0
        %v1225 = vpop.f32.mrb[0].mxu0
        %1226 = vdwg.mxu0
        %v1228 = vsel %vm748, %v1174, 0
        %v1231 = vsel %vm992, %v1178, 0
        %1233 = vmatprep.subr.bf16.mxu0 0
        %1234 = vmatpush1.bf16.msra.mxu0 %v1231
        %1235 = vmatprep.subr.bf16.mxu0 0
        %1236 = vmatpush1.bf16.msra.mxu0 0
        %1237 = vmatprep.subr.bf16.mxu0 0
        %1238 = vmatpush1.bf16.msra.mxu0 0
        %1239 = vmatprep.subr.bf16.mxu0 0
        %1240 = vmatpush1.bf16.msra.mxu0 0
        %1241 = vmatprep.subr.bf16.mxu0 0
        %1242 = vmatpush1.bf16.msra.mxu0 0
        %1243 = vmatprep.subr.bf16.mxu0 0
        %1244 = vmatpush1.bf16.msra.mxu0 0
        %1245 = vmatprep.subr.bf16.mxu0 0
        %1246 = vmatpush1.bf16.msra.mxu0 0
        %1247 = vmatprep.subr.bf16.mxu0 0
        %1248 = vmatpush1.bf16.msra.mxu0 0
        %1249 = vmatprep.subr.bf16.mxu0 0
        %1250 = vmatpush1.bf16.msra.mxu0 0
        %1251 = vmatprep.subr.bf16.mxu0 0
        %1252 = vmatpush1.bf16.msra.mxu0 0
        %1253 = vmatprep.subr.bf16.mxu0 0
        %1254 = vmatpush1.bf16.msra.mxu0 0
        %1255 = vmatprep.subr.bf16.mxu0 0
        %1256 = vmatpush1.bf16.msra.mxu0 0
        %1257 = vmatprep.subr.bf16.mxu0 0
        %1258 = vmatpush1.bf16.msra.mxu0 0
        %1259 = vmatprep.subr.bf16.mxu0 0
        %1260 = vmatpush1.bf16.msra.mxu0 0
        %1261 = vmatprep.subr.bf16.mxu0 0
        %1262 = vmatpush1.bf16.msra.mxu0 0
        %1263 = vmatprep.subr.bf16.mxu0 0
        %1264 = vmatpush1.bf16.msra.mxu0 0
        %1265 = vmatprep.mubr.bf16.mxu0 0
        %1266 = vmatmul.mubr.bf16.gmra.mrb[0].mxu0 %v1228
        %v1267 = vpop.f32.mrb[0].mxu0
        %v1268 = vadd.f32 %v1222, %v1267
        %v1269 = vpop.f32.mrb[0].mxu0
        %v1270 = vpop.f32.mrb[0].mxu0
        %v1271 = vpop.f32.mrb[0].mxu0
        %1272 = vdwg.mxu0
        %s1273 = scalar_lea.vmem %s4, 8
        %v1274 = vld [vmem:[%s1273] sm:$0xf]
        %v1276 = vsel %vm748, %v1176, 0
        %v1279 = vsel %vm992, %v1274, 0
        %1281 = vmatprep.subr.bf16.mxu0 0
        %1282 = vmatpush1.bf16.msra.mxu0 %v1279
        %1283 = vmatprep.subr.bf16.mxu0 0
        %1284 = vmatpush1.bf16.msra.mxu0 0
        %1285 = vmatprep.subr.bf16.mxu0 0
        %1286 = vmatpush1.bf16.msra.mxu0 0
        %1287 = vmatprep.subr.bf16.mxu0 0
        %1288 = vmatpush1.bf16.msra.mxu0 0
        %1289 = vmatprep.subr.bf16.mxu0 0
        %1290 = vmatpush1.bf16.msra.mxu0 0
        %1291 = vmatprep.subr.bf16.mxu0 0
        %1292 = vmatpush1.bf16.msra.mxu0 0
        %1293 = vmatprep.subr.bf16.mxu0 0
        %1294 = vmatpush1.bf16.msra.mxu0 0
        %1295 = vmatprep.subr.bf16.mxu0 0
        %1296 = vmatpush1.bf16.msra.mxu0 0
        %1297 = vmatprep.subr.bf16.mxu0 0
        %1298 = vmatpush1.bf16.msra.mxu0 0
        %1299 = vmatprep.subr.bf16.mxu0 0
        %1300 = vmatpush1.bf16.msra.mxu0 0
        %1301 = vmatprep.subr.bf16.mxu0 0
        %1302 = vmatpush1.bf16.msra.mxu0 0
        %1303 = vmatprep.subr.bf16.mxu0 0
        %1304 = vmatpush1.bf16.msra.mxu0 0
        %1305 = vmatprep.subr.bf16.mxu0 0
        %1306 = vmatpush1.bf16.msra.mxu0 0
        %1307 = vmatprep.subr.bf16.mxu0 0
        %1308 = vmatpush1.bf16.msra.mxu0 0
        %1309 = vmatprep.subr.bf16.mxu0 0
        %1310 = vmatpush1.bf16.msra.mxu0 0
        %1311 = vmatprep.subr.bf16.mxu0 0
        %1312 = vmatpush1.bf16.msra.mxu0 0
        %1313 = vmatprep.mubr.bf16.mxu0 0
        %1314 = vmatmul.mubr.bf16.gmra.mrb[0].mxu0 %v1276
        %v1315 = vpop.f32.mrb[0].mxu0
        %v1316 = vadd.f32 0.0, %v1315
        %v1317 = vpop.f32.mrb[0].mxu0
        %v1318 = vpop.f32.mrb[0].mxu0
        %v1319 = vpop.f32.mrb[0].mxu0
        %1320 = vdwg.mxu0
        %v1321 = vadd.f32 %v1268, %v1316
        %s1322 = scalar_lea.vmem %s4, 12
        %v1323 = vld [vmem:[%s1322] sm:$0xf]
        %v1325 = vsel %vm748, %v1177, 0
        %v1328 = vsel %vm992, %v1323, 0
        %1330 = vmatprep.subr.bf16.mxu0 0
        %1331 = vmatpush1.bf16.msra.mxu0 %v1328
        %1332 = vmatprep.subr.bf16.mxu0 0
        %1333 = vmatpush1.bf16.msra.mxu0 0
        %1334 = vmatprep.subr.bf16.mxu0 0
        %1335 = vmatpush1.bf16.msra.mxu0 0
        %1336 = vmatprep.subr.bf16.mxu0 0
        %1337 = vmatpush1.bf16.msra.mxu0 0
        %1338 = vmatprep.subr.bf16.mxu0 0
        %1339 = vmatpush1.bf16.msra.mxu0 0
        %1340 = vmatprep.subr.bf16.mxu0 0
        %1341 = vmatpush1.bf16.msra.mxu0 0
        %1342 = vmatprep.subr.bf16.mxu0 0
        %1343 = vmatpush1.bf16.msra.mxu0 0
        %1344 = vmatprep.subr.bf16.mxu0 0
        %1345 = vmatpush1.bf16.msra.mxu0 0
        %1346 = vmatprep.subr.bf16.mxu0 0
        %1347 = vmatpush1.bf16.msra.mxu0 0
        %1348 = vmatprep.subr.bf16.mxu0 0
        %1349 = vmatpush1.bf16.msra.mxu0 0
        %1350 = vmatprep.subr.bf16.mxu0 0
        %1351 = vmatpush1.bf16.msra.mxu0 0
        %1352 = vmatprep.subr.bf16.mxu0 0
        %1353 = vmatpush1.bf16.msra.mxu0 0
        %1354 = vmatprep.subr.bf16.mxu0 0
        %1355 = vmatpush1.bf16.msra.mxu0 0
        %1356 = vmatprep.subr.bf16.mxu0 0
        %1357 = vmatpush1.bf16.msra.mxu0 0
        %1358 = vmatprep.subr.bf16.mxu0 0
        %1359 = vmatpush1.bf16.msra.mxu0 0
        %1360 = vmatprep.subr.bf16.mxu0 0
        %1361 = vmatpush1.bf16.msra.mxu0 0
        %1362 = vmatprep.mubr.bf16.mxu0 0
        %1363 = vmatmul.mubr.bf16.gmra.mrb[0].mxu0 %v1325
        %v1364 = vpop.f32.mrb[0].mxu0
        %v1365 = vadd.f32 0.0, %v1364
        %v1366 = vpop.f32.mrb[0].mxu0
        %v1367 = vpop.f32.mrb[0].mxu0
        %v1368 = vpop.f32.mrb[0].mxu0
        %1369 = vdwg.mxu0
        %v1370 = vadd.f32 %v1321, %v1365
        %v1371 = vld [vmem:[%s5] sm:$0x1]
        %v1373 = vlaneseq
        %v1374 = vshrl.u32 %v1373, 7
        %v1375 = vsub.s32 0, %v1374
        %v1376 = vrot.slane %v1371, %v1375
        %v1378 = vadd.f32 %v1370, %v1376
        %s1379 = scalar_lea.vmem %s491, %s735
        %v1380 = vld [vmem:[%s1379] sm:$0xff]
        %v1381 = vadd.f32 %v1378, %v1380
        %v1382 = vld [vmem:[%s6] sm:$0x1]
        %v1383 = vld [vmem:[%s7] sm:$0x1]
        %vm1384 = vcmask 261120
        %v1385 = vsel %vm1384, %v1381, 0.0
        %1386 = vadd.xlane.f32.xlu0 %v1385
        %v1387 = vpop.xlane.xlu0 %1386
        %v1388 = vrcp.pop 32.0
        %v1389 = vmul.f32 %v1387, %v1388
        %v1390 = vmul.f32 %v1381, %v1381
        %v1391 = vsel %vm1384, %v1390, 0.0
        %1392 = vadd.xlane.f32.xlu0 %v1391
        %v1393 = vpop.xlane.xlu0 %1392
        %v1394 = vmul.f32 %v1393, %v1388
        %v1395 = vmul.f32 %v1389, %v1389
        %v1396 = vsub.f32 %v1394, %v1395
        %v1397 = vsub.f32 %v1381, %v1389
        %v1398 = vadd.f32 %v1396, 1e-05
        %v1399 = vrsqrt.pop %v1398
        %v1400 = vmul.f32 %v1397, %v1399
        %v1402 = vlaneseq
        %v1403 = vshrl.u32 %v1402, 7
        %v1404 = vsub.s32 0, %v1403
        %v1405 = vrot.slane %v1382, %v1404
        %v1407 = vmul.f32 %v1400, %v1405
        %v1409 = vlaneseq
        %v1410 = vshrl.u32 %v1409, 7
        %v1411 = vsub.s32 0, %v1410
        %v1412 = vrot.slane %v1383, %v1411
        %v1414 = vadd.f32 %v1407, %v1412
        %v1415 = vpack.c.bf16 %v1414, %v1414
        %v1416 = vld [vmem:[#allocation5] sm:$0xf]
        %v1417 = vld [vmem:[#allocation5 + $0x4] sm:$0xf]
        %v1418 = vld [vmem:[#allocation5 + $0x8] sm:$0xf]
        %v1419 = vld [vmem:[#allocation5 + $0xc] sm:$0xf]
        %v1420 = vld [vmem:[%s9] sm:$0x1]
        %v1422 = vlaneseq
        %v1423 = vshrl.u32 %v1422, 7
        %v1424 = vsub.s32 0, %v1423
        %v1425 = vrot.slane %v1420, %v1424
        %v1431 = vunpack.c.l.b16 %v1416
        %v1432 = vunpack.c.l.b16 %v1417
        %v1433 = vunpack.c.l.b16 %v1418
        %v1434 = vunpack.c.l.b16 %v1419
        %v1435 = vpack.c.b16 %v1432, %v1431
        %v1436 = vpack.c.b16 %v1434, %v1433
        %v1440 = vsel %vm1384, %v1415, 0
        %1442 = vmatprep.subr.bf16.mxu0 0
        %1443 = vmatpush1.bf16.msra.mxu0 %v1435
        %1444 = vmatprep.subr.bf16.mxu0 0
        %1445 = vmatpush1.bf16.msra.mxu0 %v1436
        %1446 = vmatprep.subr.bf16.mxu0 0
        %1447 = vmatpush1.bf16.msra.mxu0 0
        %1448 = vmatprep.subr.bf16.mxu0 0
        %1449 = vmatpush1.bf16.msra.mxu0 0
        %1450 = vmatprep.subr.bf16.mxu0 0
        %1451 = vmatpush1.bf16.msra.mxu0 0
        %1452 = vmatprep.subr.bf16.mxu0 0
        %1453 = vmatpush1.bf16.msra.mxu0 0
        %1454 = vmatprep.subr.bf16.mxu0 0
        %1455 = vmatpush1.bf16.msra.mxu0 0
        %1456 = vmatprep.subr.bf16.mxu0 0
        %1457 = vmatpush1.bf16.msra.mxu0 0
        %1458 = vmatprep.subr.bf16.mxu0 0
        %1459 = vmatpush1.bf16.msra.mxu0 0
        %1460 = vmatprep.subr.bf16.mxu0 0
        %1461 = vmatpush1.bf16.msra.mxu0 0
        %1462 = vmatprep.subr.bf16.mxu0 0
        %1463 = vmatpush1.bf16.msra.mxu0 0
        %1464 = vmatprep.subr.bf16.mxu0 0
        %1465 = vmatpush1.bf16.msra.mxu0 0
        %1466 = vmatprep.subr.bf16.mxu0 0
        %1467 = vmatpush1.bf16.msra.mxu0 0
        %1468 = vmatprep.subr.bf16.mxu0 0
        %1469 = vmatpush1.bf16.msra.mxu0 0
        %1470 = vmatprep.subr.bf16.mxu0 0
        %1471 = vmatpush1.bf16.msra.mxu0 0
        %1472 = vmatprep.subr.bf16.mxu0 0
        %1473 = vmatpush1.bf16.msra.mxu0 0
        %1474 = vmatprep.mubr.bf16.mxu0 0
        %1475 = vmatmul.mubr.bf16.gmra.mrb[0].mxu0 %v1440
        %v1476 = vpop.f32.mrb[0].mxu0
        %v1477 = vadd.f32 %v1425, %v1476
        %v1478 = vpop.f32.mrb[0].mxu0
        %v1479 = vpop.f32.mrb[0].mxu0
        %v1480 = vpop.f32.mrb[0].mxu0
        %1481 = vdwg.mxu0
        %v1482 = vmax.f32 %v1477, 0.0
        %v1483 = vpack.c.bf16 %v1482, %v1482
        %v1484 = vld [vmem:[%s10] sm:$0xf]
        %v1485 = vld [vmem:[%s10 + $0x4] sm:$0xf]
        %v1486 = vld [vmem:[%s10 + $0x8] sm:$0xf]
        %v1487 = vld [vmem:[%s10 + $0xc] sm:$0xf]
        %v1488 = vld [vmem:[%s10 + $0x10] sm:$0xf]
        %v1489 = vld [vmem:[%s10 + $0x14] sm:$0xf]
        %v1490 = vld [vmem:[%s10 + $0x18] sm:$0xf]
        %v1491 = vld [vmem:[%s10 + $0x1c] sm:$0xf]
        %v1492 = vld [vmem:[%s10 + $0x20] sm:$0xf]
        %v1493 = vld [vmem:[%s10 + $0x24] sm:$0xf]
        %v1494 = vld [vmem:[%s10 + $0x28] sm:$0xf]
        %v1495 = vld [vmem:[%s10 + $0x2c] sm:$0xf]
        %v1496 = vld [vmem:[%s10 + $0x30] sm:$0xf]
        %v1497 = vld [vmem:[%s10 + $0x34] sm:$0xf]
        %v1498 = vld [vmem:[%s10 + $0x38] sm:$0xf]
        %v1499 = vld [vmem:[%s10 + $0x3c] sm:$0xf]
        %v1500 = vld [vmem:[%s11] sm:$0x1]
        %v1502 = vlaneseq
        %v1503 = vshrl.u32 %v1502, 7
        %v1504 = vsub.s32 0, %v1503
        %v1505 = vrot.slane %v1500, %v1504
        %v1523 = vunpack.c.l.b16 %v1484
        %v1524 = vunpack.c.l.b16 %v1485
        %v1525 = vunpack.c.l.b16 %v1486
        %v1526 = vunpack.c.l.b16 %v1487
        %v1527 = vunpack.c.l.b16 %v1488
        %v1528 = vunpack.c.l.b16 %v1489
        %v1529 = vunpack.c.l.b16 %v1490
        %v1530 = vunpack.c.l.b16 %v1491
        %v1531 = vunpack.c.l.b16 %v1492
        %v1532 = vunpack.c.l.b16 %v1493
        %v1533 = vunpack.c.l.b16 %v1494
        %v1534 = vunpack.c.l.b16 %v1495
        %v1535 = vunpack.c.l.b16 %v1496
        %v1536 = vunpack.c.l.b16 %v1497
        %v1537 = vunpack.c.l.b16 %v1498
        %v1538 = vunpack.c.l.b16 %v1499
        %v1539 = vpack.c.b16 %v1524, %v1523
        %v1540 = vpack.c.b16 %v1526, %v1525
        %v1541 = vpack.c.b16 %v1528, %v1527
        %v1542 = vpack.c.b16 %v1530, %v1529
        %v1543 = vpack.c.b16 %v1532, %v1531
        %v1544 = vpack.c.b16 %v1534, %v1533
        %v1545 = vpack.c.b16 %v1536, %v1535
        %v1546 = vpack.c.b16 %v1538, %v1537
        %1555 = vmatprep.subr.bf16.mxu0 0
        %1556 = vmatpush1.bf16.msra.mxu0 %v1539
        %1557 = vmatprep.subr.bf16.mxu0 0
        %1558 = vmatpush1.bf16.msra.mxu0 %v1540
        %1559 = vmatprep.subr.bf16.mxu0 0
        %1560 = vmatpush1.bf16.msra.mxu0 %v1541
        %1561 = vmatprep.subr.bf16.mxu0 0
        %1562 = vmatpush1.bf16.msra.mxu0 %v1542
        %1563 = vmatprep.subr.bf16.mxu0 0
        %1564 = vmatpush1.bf16.msra.mxu0 %v1543
        %1565 = vmatprep.subr.bf16.mxu0 0
        %1566 = vmatpush1.bf16.msra.mxu0 %v1544
        %1567 = vmatprep.subr.bf16.mxu0 0
        %1568 = vmatpush1.bf16.msra.mxu0 %v1545
        %1569 = vmatprep.subr.bf16.mxu0 0
        %1570 = vmatpush1.bf16.msra.mxu0 %v1546
        %1571 = vmatprep.subr.bf16.mxu0 0
        %1572 = vmatpush1.bf16.msra.mxu0 0
        %1573 = vmatprep.subr.bf16.mxu0 0
        %1574 = vmatpush1.bf16.msra.mxu0 0
        %1575 = vmatprep.subr.bf16.mxu0 0
        %1576 = vmatpush1.bf16.msra.mxu0 0
        %1577 = vmatprep.subr.bf16.mxu0 0
        %1578 = vmatpush1.bf16.msra.mxu0 0
        %1579 = vmatprep.subr.bf16.mxu0 0
        %1580 = vmatpush1.bf16.msra.mxu0 0
        %1581 = vmatprep.subr.bf16.mxu0 0
        %1582 = vmatpush1.bf16.msra.mxu0 0
        %1583 = vmatprep.subr.bf16.mxu0 0
        %1584 = vmatpush1.bf16.msra.mxu0 0
        %1585 = vmatprep.subr.bf16.mxu0 0
        %1586 = vmatpush1.bf16.msra.mxu0 0
        %1587 = vmatprep.mubr.bf16.mxu0 0
        %1588 = vmatmul.mubr.bf16.gmra.mrb[0].mxu0 %v1483
        %v1589 = vpop.f32.mrb[0].mxu0
        %v1590 = vadd.f32 %v1505, %v1589
        %v1591 = vpop.f32.mrb[0].mxu0
        %v1592 = vpop.f32.mrb[0].mxu0
        %v1593 = vpop.f32.mrb[0].mxu0
        %1594 = vdwg.mxu0
        %v1595 = vadd.f32 %v1590, %v1414
        %v1596 = vld [vmem:[%s12] sm:$0x1]
        %v1597 = vld [vmem:[%s13] sm:$0x1]
        %v1598 = vsel %vm1384, %v1595, 0.0
        %1599 = vadd.xlane.f32.xlu0 %v1598
        %v1600 = vpop.xlane.xlu0 %1599
        %v1601 = vmul.f32 %v1600, %v1388
        %v1602 = vmul.f32 %v1595, %v1595
        %v1603 = vsel %vm1384, %v1602, 0.0
        %1604 = vadd.xlane.f32.xlu0 %v1603
        %v1605 = vpop.xlane.xlu0 %1604
        %v1606 = vmul.f32 %v1605, %v1388
        %v1607 = vmul.f32 %v1601, %v1601
        %v1608 = vsub.f32 %v1606, %v1607
        %v1609 = vsub.f32 %v1595, %v1601
        %v1610 = vadd.f32 %v1608, 1e-05
        %v1611 = vrsqrt.pop %v1610
        %v1612 = vmul.f32 %v1609, %v1611
        %v1614 = vlaneseq
        %v1615 = vshrl.u32 %v1614, 7
        %v1616 = vsub.s32 0, %v1615
        %v1617 = vrot.slane %v1596, %v1616
        %v1619 = vmul.f32 %v1612, %v1617
        %v1621 = vlaneseq
        %v1622 = vshrl.u32 %v1621, 7
        %v1623 = vsub.s32 0, %v1622
        %v1624 = vrot.slane %v1597, %v1623
        %v1626 = vadd.f32 %v1619, %v1624
        %1627 = vst.msk [vmem:[%s487] sm:$0xff] %vm1384, %v1626
        %s1628 = sand.u32 %s350, 1
        %s1629 = scalar_lea.sflag [#allocation7], %s1628
        %s1630 = sand.u32 %s350, 1
        %s1631 = smul.addr %s1630, 8
        %s1632 = scalar_lea.vmem [#allocation8], %s1631
        // Predicated region
        $region85: #{tpu_custom_call.1} parent=75 // pred_check
          %p1633 = pneg %p360
        $region86: #{tpu_custom_call.1} parent=75 // pred_check_branch
          %1635 = sbr.rel (%p1633) target = $region88
        $region87: #{tpu_custom_call.1} parent=75 // pred_region
          %s1637 = ssub.s32 128, 128
          %1638 = vsyncadd %s1629, %s1637
          %s1639 = sadd.s32 %s34, %s33
          %s1640 = smul.addr %s1639, 128
          %s1641 = scalar_lea.hbm %s14, %s1640
          %s1643 = sshll.u32 %s1632, 4
          %s1644 = int_to_ptr.vmem [resolvable:$true] %s1643
          %1646 = dma.vmem_to_hbm [thread:$0]  %s1644, 128, %s1641, %s1629
        $region88: #{tpu_custom_call.1} parent=75 // pred_fallthru
          _
      $region76: #{tpu_custom_call.1} parent=5 // pred_fallthru
        _
      %p1647 = scmp.le.s32.totalorder 2, %s24
      // Predicated region
      $region89: #{tpu_custom_call.1} parent=5 // pred_check
        %p1648 = pneg %p1647
      $region90: #{tpu_custom_call.1} parent=5 // pred_check_branch
        %1650 = sbr.rel (%p1648) target = $region92
      $region91: #{tpu_custom_call.1} parent=5 // pred_region
        %s1651 = ssub.s32 %s24, 2
        // Predicated region
        $region93: #{tpu_custom_call.1} parent=91 // pred_check
          %p1652 = pneg %p366
        $region94: #{tpu_custom_call.1} parent=91 // pred_check_branch
          %1654 = sbr.rel (%p1652) target = $region96
        $region95: #{tpu_custom_call.1} parent=91 // pred_region
          %s1655 = sand.u32 %s351, 1
          %s1656 = scalar_lea.sflag [#allocation7], %s1655
          %s1657 = sand.u32 %s351, 1
          %s1658 = smul.addr %s1657, 8
          %s1659 = scalar_lea.vmem [#allocation8], %s1658
          %1660 = dma.done %s1656, 128
        $region96: #{tpu_custom_call.1} parent=91 // pred_fallthru
          _
      $region92: #{tpu_custom_call.1} parent=5 // pred_fallthru
        _
    $region6: #{tpu_custom_call.1} parent=1 // loop_footer
      %s28 = sadd.s32 1, %s24
    $region7: #{tpu_custom_call.1} parent=1 // loop_footer_branch
      %23 = sbr.rel target = $region3
    $region8: #{tpu_custom_call.1} parent=1 // loop_exit
      _
    %1661 = vsyncpa [#allocation6], 1
    %s1662 = scalar_lea.sflag [#allocation6], 1
    %1663 = vsyncpa %s1662, 1
    %1664 = vsyncpa [#allocation7], 1
    %s1665 = scalar_lea.sflag [#allocation7], 1
    %1666 = vsyncpa %s1665, 1

// kernel: tpu_custom_call.1
$region0: #{tpu_custom_call.1}
  #allocation0 [shape = 'u32[]', space=smem, size = 0x4, offset = 0x4, fixed_abs, tag = 'smem constant byte address 0x4 - core index']
  #allocation1 [shape = 'u32[144,128]{1,0:T(1,128)}', space=vmem, size = 0x12000, scoped, tag = 'internal scratch']
  #allocation2 [shape = 'bf16[4,8,8]{2,1,0:T(8,128)(2,1)}', space=vmem, size = 0x2000, scoped, tag = 'scratch operand']
  #allocation3 [shape = 'bf16[4,8,8]{2,1,0:T(8,128)(2,1)}', space=vmem, size = 0x2000, scoped, tag = 'scratch operand']
  #allocation4 [shape = 'bf16[4,8,8]{2,1,0:T(8,128)(2,1)}', space=vmem, size = 0x2000, scoped, tag = 'scratch operand']
  %s0 = inlined_call_operand.vmem [shape: f32[2,8,32], index: 0, kind: input, shape index: {}]
  %s1 = inlined_call_operand.vmem [shape: bf16[32,32], index: 1, kind: input, shape index: {}]
  %s2 = inlined_call_operand.vmem [shape: bf16[32,32], index: 2, kind: input, shape index: {}]
  %s3 = inlined_call_operand.vmem [shape: bf16[32,32], index: 3, kind: input, shape index: {}]
  %s4 = inlined_call_operand.vmem [shape: bf16[4,8,32], index: 4, kind: input, shape index: {}]
  %s5 = inlined_call_operand.vmem [shape: f32[1,32], index: 5, kind: input, shape index: {}]
  %s6 = inlined_call_operand.vmem [shape: f32[1,32], index: 6, kind: input, shape index: {}]
  %s7 = inlined_call_operand.vmem [shape: f32[1,32], index: 7, kind: input, shape index: {}]
  %s8 = inlined_call_operand.hbm [shape: bf16[32,128], index: 8, kind: input, shape index: {}]
  %s9 = inlined_call_operand.vmem [shape: f32[1,128], index: 9, kind: input, shape index: {}]
  %s10 = inlined_call_operand.vmem [shape: bf16[128,32], index: 10, kind: input, shape index: {}]
  %s11 = inlined_call_operand.vmem [shape: f32[1,32], index: 11, kind: input, shape index: {}]
  %s12 = inlined_call_operand.vmem [shape: f32[1,32], index: 12, kind: input, shape index: {}]
  %s13 = inlined_call_operand.vmem [shape: f32[1,32], index: 13, kind: input, shape index: {}]
  %s14 = inlined_call_operand.hbm [shape: f32[2,8,32], index: 14, kind: output, shape index: {}]
  %s15 = sld [smem:[#allocation0]]
  $region97: #{tpu_custom_call.1} parent=0
    _
  %s17 = ssub.s32 1, %s15
  %s18 = scalar_select 0, %s17, %s15
  $region1: #{tpu_custom_call.1} parent=0
    #allocation5 [shape = 'u8[8192]{0}', space=vmem, size = 0x2000, scoped, tag = 'input window, operand 8, single buffered']
    #allocation6 [shape = 's32[2]{0}', space=sflag, size = 0x8, scoped, tag = 'scoped memory for tpu_custom_call.1']
    #allocation7 [shape = 's32[2]{0}', space=sflag, size = 0x8, scoped, tag = 'scoped memory for tpu_custom_call.1']
    #allocation8 [shape = 'u8[8192]{0}', space=vmem, size = 0x2000, scoped, tag = 'output window, operand 0']
    %19 = vsyncpa [#allocation6], 0
    %20 = vsyncpa [#allocation7], 0
    %s21 = scalar_lea.sflag [#allocation7], 1
    %22 = vsyncpa %s21, 0
    loop: start=0, step=1, limit=4
    $region2: #{tpu_custom_call.1} parent=1 // loop_pre_header
      _
    $region3: #{tpu_custom_call.1} parent=1 // loop_header
      %s24 = sphi 0, %s28
      %p25 = scmp.ge.s32.totalorder %s24, 4
      %s31 = sphi 0, %s43
      %s32 = sphi 0, %s39
      %s33 = sphi 0, %s31
      %s34 = sphi 0, %s32
      %s35 = sphi 0, %s33
      %s36 = sphi 0, %s34
      %s46 = sphi 0, %s48
      %s49 = sphi 0, %s46
      %s50 = sphi 0, %s49
      %s66 = sphi 0, %s50
      %s70 = sphi 0, %s70
      %s72 = sphi 0, %s70
      %s73 = sphi 0, %s72
      %s87 = sphi 0, %s73
      %s91 = sphi 0, %s91
      %s93 = sphi 0, %s91
      %s94 = sphi 0, %s93
      %s108 = sphi 0, %s94
      %s112 = sphi 0, %s112
      %s114 = sphi 0, %s112
      %s115 = sphi 0, %s114
      %s129 = sphi 0, %s115
      %s133 = sphi 0, %s133
      %s135 = sphi 0, %s133
      %s136 = sphi 0, %s135
      %s150 = sphi 0, %s136
      %s154 = sphi 0, %s154
      %s156 = sphi 0, %s154
      %s157 = sphi 0, %s156
      %s171 = sphi 0, %s157
      %s175 = sphi 0, %s175
      %s177 = sphi 0, %s175
      %s178 = sphi 0, %s177
      %s192 = sphi 0, %s178
      %s196 = sphi 0, %s196
      %s198 = sphi 0, %s196
      %s199 = sphi 0, %s198
      %s213 = sphi 0, %s199
      %s217 = sphi 0, %s217
      %s219 = sphi 0, %s217
      %s220 = sphi 0, %s219
      %s234 = sphi 0, %s220
      %s238 = sphi 0, %s238
      %s240 = sphi 0, %s238
      %s241 = sphi 0, %s240
      %s255 = sphi 0, %s241
      %s259 = sphi 0, %s259
      %s261 = sphi 0, %s259
      %s262 = sphi 0, %s261
      %s276 = sphi 0, %s262
      %s280 = sphi 0, %s280
      %s282 = sphi 0, %s280
      %s283 = sphi 0, %s282
      %s297 = sphi 0, %s283
      %s301 = sphi 0, %s301
      %s303 = sphi 0, %s301
      %s304 = sphi 0, %s303
      %s318 = sphi 0, %s304
      %s322 = sphi 0, %s322
      %s324 = sphi 0, %s322
      %s325 = sphi 0, %s324
      %s339 = sphi 0, %s325
      %s347 = sphi 0, %s349
      %s350 = sphi 0, %s347
      %s351 = sphi 0, %s350
      %s367 = sphi 0, %s351
    $region4: #{tpu_custom_call.1} parent=1 // loop_header_branch
      %27 = sbr.rel (%p25) target = $region8
    $region5: #{tpu_custom_call.1} parent=1 // loop_body
      %s29 = ssub.s32 %s24, 1
      %s30 = ssub.s32 %s24, 2
      %s37 = sadd.s32 1, %s32
      %p38 = scmp.ge.s32.totalorder %s37, 1
      %s39 = scalar_select %p38, 0, %s37
      %s40 = sadd.s32 1, %s31
      %s41 = scalar_select %p38, %s40, %s31
      %p42 = scmp.ge.s32.totalorder %s41, 2
      %s43 = scalar_select %p42, 0, %s41
      %s44 = ssub.s32 %s31, %s43
      %p45 = scmp.eq.s32.totalorder %s44, 0
      %s47 = sadd.s32 %s46, 1
      %s48 = scalar_select %p45, %s46, %s47
      %p51 = pneg %p45
      %p52 = scmp.eq.s32.totalorder %s24, 1
      %p53 = por %p51, %p52
      %p54 = scmp.ne.s32.totalorder %s46, %s49
      %p55 = scmp.eq.s32.totalorder %s24, 0
      %p56 = por %p54, %p55
      %p57 = scmp.ne.s32.totalorder %s46, %s49
      %p58 = scmp.eq.s32.totalorder %s29, 1
      %p59 = por %p57, %p58
      %p60 = scmp.ne.s32.totalorder %s49, %s50
      %p61 = scmp.eq.s32.totalorder %s29, 0
      %p62 = por %p60, %p61
      %p63 = scmp.ne.s32.totalorder %s49, %s50
      %p64 = scmp.eq.s32.totalorder %s30, 1
      %p65 = por %p63, %p64
      %p67 = scmp.ne.s32.totalorder %s50, %s66
      %p68 = scmp.eq.s32.totalorder %s30, 0
      %p69 = por %p67, %p68
      %s71 = sadd.s32 %s70, 1
      %p74 = scmp.eq.s32.totalorder %s24, 1
      %p75 = scmp.ne.s32.totalorder %s70, %s72
      %p76 = scmp.eq.s32.totalorder %s24, 0
      %p77 = por %p75, %p76
      %p78 = scmp.ne.s32.totalorder %s70, %s72
      %p79 = scmp.eq.s32.totalorder %s29, 1
      %p80 = por %p78, %p79
      %p81 = scmp.ne.s32.totalorder %s72, %s73
      %p82 = scmp.eq.s32.totalorder %s29, 0
      %p83 = por %p81, %p82
      %p84 = scmp.ne.s32.totalorder %s72, %s73
      %p85 = scmp.eq.s32.totalorder %s30, 1
      %p86 = por %p84, %p85
      %p88 = scmp.ne.s32.totalorder %s73, %s87
      %p89 = scmp.eq.s32.totalorder %s30, 0
      %p90 = por %p88, %p89
      %s92 = sadd.s32 %s91, 1
      %p95 = scmp.eq.s32.totalorder %s24, 1
      %p96 = scmp.ne.s32.totalorder %s91, %s93
      %p97 = scmp.eq.s32.totalorder %s24, 0
      %p98 = por %p96, %p97
      %p99 = scmp.ne.s32.totalorder %s91, %s93
      %p100 = scmp.eq.s32.totalorder %s29, 1
      %p101 = por %p99, %p100
      %p102 = scmp.ne.s32.totalorder %s93, %s94
      %p103 = scmp.eq.s32.totalorder %s29, 0
      %p104 = por %p102, %p103
      %p105 = scmp.ne.s32.totalorder %s93, %s94
      %p106 = scmp.eq.s32.totalorder %s30, 1
      %p107 = por %p105, %p106
      %p109 = scmp.ne.s32.totalorder %s94, %s108
      %p110 = scmp.eq.s32.totalorder %s30, 0
      %p111 = por %p109, %p110
      %s113 = sadd.s32 %s112, 1
      %p116 = scmp.eq.s32.totalorder %s24, 1
      %p117 = scmp.ne.s32.totalorder %s112, %s114
      %p118 = scmp.eq.s32.totalorder %s24, 0
      %p119 = por %p117, %p118
      %p120 = scmp.ne.s32.totalorder %s112, %s114
      %p121 = scmp.eq.s32.totalorder %s29, 1
      %p122 = por %p120, %p121
      %p123 = scmp.ne.s32.totalorder %s114, %s115
      %p124 = scmp.eq.s32.totalorder %s29, 0
      %p125 = por %p123, %p124
      %p126 = scmp.ne.s32.totalorder %s114, %s115
      %p127 = scmp.eq.s32.totalorder %s30, 1
      %p128 = por %p126, %p127
      %p130 = scmp.ne.s32.totalorder %s115, %s129
      %p131 = scmp.eq.s32.totalorder %s30, 0
      %p132 = por %p130, %p131
      %s134 = sadd.s32 %s133, 1
      %p137 = scmp.eq.s32.totalorder %s24, 1
      %p138 = scmp.ne.s32.totalorder %s133, %s135
      %p139 = scmp.eq.s32.totalorder %s24, 0
      %p140 = por %p138, %p139
      %p141 = scmp.ne.s32.totalorder %s133, %s135
      %p142 = scmp.eq.s32.totalorder %s29, 1
      %p143 = por %p141, %p142
      %p144 = scmp.ne.s32.totalorder %s135, %s136
      %p145 = scmp.eq.s32.totalorder %s29, 0
      %p146 = por %p144, %p145
      %p147 = scmp.ne.s32.totalorder %s135, %s136
      %p148 = scmp.eq.s32.totalorder %s30, 1
      %p149 = por %p147, %p148
      %p151 = scmp.ne.s32.totalorder %s136, %s150
      %p152 = scmp.eq.s32.totalorder %s30, 0
      %p153 = por %p151, %p152
      %s155 = sadd.s32 %s154, 1
      %p158 = scmp.eq.s32.totalorder %s24, 1
      %p159 = scmp.ne.s32.totalorder %s154, %s156
      %p160 = scmp.eq.s32.totalorder %s24, 0
      %p161 = por %p159, %p160
      %p162 = scmp.ne.s32.totalorder %s154, %s156
      %p163 = scmp.eq.s32.totalorder %s29, 1
      %p164 = por %p162, %p163
      %p165 = scmp.ne.s32.totalorder %s156, %s157
      %p166 = scmp.eq.s32.totalorder %s29, 0
      %p167 = por %p165, %p166
      %p168 = scmp.ne.s32.totalorder %s156, %s157
      %p169 = scmp.eq.s32.totalorder %s30, 1
      %p170 = por %p168, %p169
      %p172 = scmp.ne.s32.totalorder %s157, %s171
      %p173 = scmp.eq.s32.totalorder %s30, 0
      %p174 = por %p172, %p173
      %s176 = sadd.s32 %s175, 1
      %p179 = scmp.eq.s32.totalorder %s24, 1
      %p180 = scmp.ne.s32.totalorder %s175, %s177
      %p181 = scmp.eq.s32.totalorder %s24, 0
      %p182 = por %p180, %p181
      %p183 = scmp.ne.s32.totalorder %s175, %s177
      %p184 = scmp.eq.s32.totalorder %s29, 1
      %p185 = por %p183, %p184
      %p186 = scmp.ne.s32.totalorder %s177, %s178
      %p187 = scmp.eq.s32.totalorder %s29, 0
      %p188 = por %p186, %p187
      %p189 = scmp.ne.s32.totalorder %s177, %s178
      %p190 = scmp.eq.s32.totalorder %s30, 1
      %p191 = por %p189, %p190
      %p193 = scmp.ne.s32.totalorder %s178, %s192
      %p194 = scmp.eq.s32.totalorder %s30, 0
      %p195 = por %p193, %p194
      %s197 = sadd.s32 %s196, 1
      %p200 = scmp.eq.s32.totalorder %s24, 1
      %p201 = scmp.ne.s32.totalorder %s196, %s198
      %p202 = scmp.eq.s32.totalorder %s24, 0
      %p203 = por %p201, %p202
      %p204 = scmp.ne.s32.totalorder %s196, %s198
      %p205 = scmp.eq.s32.totalorder %s29, 1
      %p206 = por %p204, %p205
      %p207 = scmp.ne.s32.totalorder %s198, %s199
      %p208 = scmp.eq.s32.totalorder %s29, 0
      %p209 = por %p207, %p208
      %p210 = scmp.ne.s32.totalorder %s198, %s199
      %p211 = scmp.eq.s32.totalorder %s30, 1
      %p212 = por %p210, %p211
      %p214 = scmp.ne.s32.totalorder %s199, %s213
      %p215 = scmp.eq.s32.totalorder %s30, 0
      %p216 = por %p214, %p215
      %s218 = sadd.s32 %s217, 1
      %p221 = scmp.eq.s32.totalorder %s24, 1
      %p222 = scmp.ne.s32.totalorder %s217, %s219
      %p223 = scmp.eq.s32.totalorder %s24, 0
      %p224 = por %p222, %p223
      %p225 = scmp.ne.s32.totalorder %s217, %s219
      %p226 = scmp.eq.s32.totalorder %s29, 1
      %p227 = por %p225, %p226
      %p228 = scmp.ne.s32.totalorder %s219, %s220
      %p229 = scmp.eq.s32.totalorder %s29, 0
      %p230 = por %p228, %p229
      %p231 = scmp.ne.s32.totalorder %s219, %s220
      %p232 = scmp.eq.s32.totalorder %s30, 1
      %p233 = por %p231, %p232
      %p235 = scmp.ne.s32.totalorder %s220, %s234
      %p236 = scmp.eq.s32.totalorder %s30, 0
      %p237 = por %p235, %p236
      %s239 = sadd.s32 %s238, 1
      %p242 = scmp.eq.s32.totalorder %s24, 1
      %p243 = scmp.ne.s32.totalorder %s238, %s240
      %p244 = scmp.eq.s32.totalorder %s24, 0
      %p245 = por %p243, %p244
      %p246 = scmp.ne.s32.totalorder %s238, %s240
      %p247 = scmp.eq.s32.totalorder %s29, 1
      %p248 = por %p246, %p247
      %p249 = scmp.ne.s32.totalorder %s240, %s241
      %p250 = scmp.eq.s32.totalorder %s29, 0
      %p251 = por %p249, %p250
      %p252 = scmp.ne.s32.totalorder %s240, %s241
      %p253 = scmp.eq.s32.totalorder %s30, 1
      %p254 = por %p252, %p253
      %p256 = scmp.ne.s32.totalorder %s241, %s255
      %p257 = scmp.eq.s32.totalorder %s30, 0
      %p258 = por %p256, %p257
      %s260 = sadd.s32 %s259, 1
      %p263 = scmp.eq.s32.totalorder %s24, 1
      %p264 = scmp.ne.s32.totalorder %s259, %s261
      %p265 = scmp.eq.s32.totalorder %s24, 0
      %p266 = por %p264, %p265
      %p267 = scmp.ne.s32.totalorder %s259, %s261
      %p268 = scmp.eq.s32.totalorder %s29, 1
      %p269 = por %p267, %p268
      %p270 = scmp.ne.s32.totalorder %s261, %s262
      %p271 = scmp.eq.s32.totalorder %s29, 0
      %p272 = por %p270, %p271
      %p273 = scmp.ne.s32.totalorder %s261, %s262
      %p274 = scmp.eq.s32.totalorder %s30, 1
      %p275 = por %p273, %p274
      %p277 = scmp.ne.s32.totalorder %s262, %s276
      %p278 = scmp.eq.s32.totalorder %s30, 0
      %p279 = por %p277, %p278
      %s281 = sadd.s32 %s280, 1
      %p284 = scmp.eq.s32.totalorder %s24, 1
      %p285 = scmp.ne.s32.totalorder %s280, %s282
      %p286 = scmp.eq.s32.totalorder %s24, 0
      %p287 = por %p285, %p286
      %p288 = scmp.ne.s32.totalorder %s280, %s282
      %p289 = scmp.eq.s32.totalorder %s29, 1
      %p290 = por %p288, %p289
      %p291 = scmp.ne.s32.totalorder %s282, %s283
      %p292 = scmp.eq.s32.totalorder %s29, 0
      %p293 = por %p291, %p292
      %p294 = scmp.ne.s32.totalorder %s282, %s283
      %p295 = scmp.eq.s32.totalorder %s30, 1
      %p296 = por %p294, %p295
      %p298 = scmp.ne.s32.totalorder %s283, %s297
      %p299 = scmp.eq.s32.totalorder %s30, 0
      %p300 = por %p298, %p299
      %s302 = sadd.s32 %s301, 1
      %p305 = scmp.eq.s32.totalorder %s24, 1
      %p306 = scmp.ne.s32.totalorder %s301, %s303
      %p307 = scmp.eq.s32.totalorder %s24, 0
      %p308 = por %p306, %p307
      %p309 = scmp.ne.s32.totalorder %s301, %s303
      %p310 = scmp.eq.s32.totalorder %s29, 1
      %p311 = por %p309, %p310
      %p312 = scmp.ne.s32.totalorder %s303, %s304
      %p313 = scmp.eq.s32.totalorder %s29, 0
      %p314 = por %p312, %p313
      %p315 = scmp.ne.s32.totalorder %s303, %s304
      %p316 = scmp.eq.s32.totalorder %s30, 1
      %p317 = por %p315, %p316
      %p319 = scmp.ne.s32.totalorder %s304, %s318
      %p320 = scmp.eq.s32.totalorder %s30, 0
      %p321 = por %p319, %p320
      %s323 = sadd.s32 %s322, 1
      %p326 = scmp.eq.s32.totalorder %s24, 1
      %p327 = scmp.ne.s32.totalorder %s322, %s324
      %p328 = scmp.eq.s32.totalorder %s24, 0
      %p329 = por %p327, %p328
      %p330 = scmp.ne.s32.totalorder %s322, %s324
      %p331 = scmp.eq.s32.totalorder %s29, 1
      %p332 = por %p330, %p331
      %p333 = scmp.ne.s32.totalorder %s324, %s325
      %p334 = scmp.eq.s32.totalorder %s29, 0
      %p335 = por %p333, %p334
      %p336 = scmp.ne.s32.totalorder %s324, %s325
      %p337 = scmp.eq.s32.totalorder %s30, 1
      %p338 = por %p336, %p337
      %p340 = scmp.ne.s32.totalorder %s325, %s339
      %p341 = scmp.eq.s32.totalorder %s30, 0
      %p342 = por %p340, %p341
      %s343 = ssub.s32 %s31, %s43
      %s344 = ssub.s32 %s32, %s39
      %s345 = sor.u32 %s343, %s344
      %p346 = scmp.eq.s32.totalorder %s345, 0
      %s348 = sadd.s32 %s347, 1
      %s349 = scalar_select %p346, %s347, %s348
      %p352 = pneg %p346
      %p353 = scmp.eq.s32.totalorder %s24, 1
      %p354 = por %p352, %p353
      %p355 = scmp.ne.s32.totalorder %s347, %s350
      %p356 = scmp.eq.s32.totalorder %s24, 0
      %p357 = por %p355, %p356
      %p358 = scmp.ne.s32.totalorder %s347, %s350
      %p359 = scmp.eq.s32.totalorder %s29, 1
      %p360 = por %p358, %p359
      %p361 = scmp.ne.s32.totalorder %s350, %s351
      %p362 = scmp.eq.s32.totalorder %s29, 0
      %p363 = por %p361, %p362
      %p364 = scmp.ne.s32.totalorder %s350, %s351
      %p365 = scmp.eq.s32.totalorder %s30, 1
      %p366 = por %p364, %p365
      %p368 = scmp.ne.s32.totalorder %s351, %s367
      %p369 = scmp.eq.s32.totalorder %s30, 0
      %p370 = por %p368, %p369
      %p371 = scmp.le.s32.totalorder 1, %s24
      %p372 = scmp.lt.s32.totalorder %s24, 3
      %p373 = pnand %p371, %p372
      %p374 = pneg %p373
      // Predicated region
      $region9: #{tpu_custom_call.1} parent=5 // pred_check
        _
      $region10: #{tpu_custom_call.1} parent=5 // pred_check_branch
        %376 = sbr.rel (%p373) target = $region12
      $region11: #{tpu_custom_call.1} parent=5 // pred_region
        %s377 = ssub.s32 %s24, 1
        // Predicated region
        $region13: #{tpu_custom_call.1} parent=11 // pred_check
          %p378 = pneg %p83
        $region14: #{tpu_custom_call.1} parent=11 // pred_check_branch
          %380 = sbr.rel (%p378) target = $region16
        $region15: #{tpu_custom_call.1} parent=11 // pred_region
          _
        $region16: #{tpu_custom_call.1} parent=11 // pred_fallthru
          _
        // Predicated region
        $region17: #{tpu_custom_call.1} parent=11 // pred_check
          %p381 = pneg %p104
        $region18: #{tpu_custom_call.1} parent=11 // pred_check_branch
          %383 = sbr.rel (%p381) target = $region20
        $region19: #{tpu_custom_call.1} parent=11 // pred_region
          _
        $region20: #{tpu_custom_call.1} parent=11 // pred_fallthru
          _
        // Predicated region
        $region21: #{tpu_custom_call.1} parent=11 // pred_check
          %p384 = pneg %p125
        $region22: #{tpu_custom_call.1} parent=11 // pred_check_branch
          %386 = sbr.rel (%p384) target = $region24
        $region23: #{tpu_custom_call.1} parent=11 // pred_region
          _
        $region24: #{tpu_custom_call.1} parent=11 // pred_fallthru
          _
        // Predicated region
        $region25: #{tpu_custom_call.1} parent=11 // pred_check
          %p387 = pneg %p146
        $region26: #{tpu_custom_call.1} parent=11 // pred_check_branch
          %389 = sbr.rel (%p387) target = $region28
        $region27: #{tpu_custom_call.1} parent=11 // pred_region
          _
        $region28: #{tpu_custom_call.1} parent=11 // pred_fallthru
          _
        // Predicated region
        $region29: #{tpu_custom_call.1} parent=11 // pred_check
          %p390 = pneg %p167
        $region30: #{tpu_custom_call.1} parent=11 // pred_check_branch
          %392 = sbr.rel (%p390) target = $region32
        $region31: #{tpu_custom_call.1} parent=11 // pred_region
          _
        $region32: #{tpu_custom_call.1} parent=11 // pred_fallthru
          _
        // Predicated region
        $region33: #{tpu_custom_call.1} parent=11 // pred_check
          %p393 = pneg %p188
        $region34: #{tpu_custom_call.1} parent=11 // pred_check_branch
          %395 = sbr.rel (%p393) target = $region36
        $region35: #{tpu_custom_call.1} parent=11 // pred_region
          _
        $region36: #{tpu_custom_call.1} parent=11 // pred_fallthru
          _
        // Predicated region
        $region37: #{tpu_custom_call.1} parent=11 // pred_check
          %p396 = pneg %p209
        $region38: #{tpu_custom_call.1} parent=11 // pred_check_branch
          %398 = sbr.rel (%p396) target = $region40
        $region39: #{tpu_custom_call.1} parent=11 // pred_region
          _
        $region40: #{tpu_custom_call.1} parent=11 // pred_fallthru
          _
        // Predicated region
        $region41: #{tpu_custom_call.1} parent=11 // pred_check
          %p399 = pneg %p230
        $region42: #{tpu_custom_call.1} parent=11 // pred_check_branch
          %401 = sbr.rel (%p399) target = $region44
        $region43: #{tpu_custom_call.1} parent=11 // pred_region
          %s403 = ssub.s32 256, 256
          %404 = vsyncadd [#allocation6], %s403
          %s405 = sshll.u32 [#allocation5], 4
          %s406 = int_to_ptr.vmem [resolvable:$true] %s405
          %411 = dma.hbm_to_vmem [thread:$0]  %s8, 256, %s406, [#allocation6], 64, 64, 4
        $region44: #{tpu_custom_call.1} parent=11 // pred_fallthru
          _
        // Predicated region
        $region45: #{tpu_custom_call.1} parent=11 // pred_check
          %p412 = pneg %p251
        $region46: #{tpu_custom_call.1} parent=11 // pred_check_branch
          %414 = sbr.rel (%p412) target = $region48
        $region47: #{tpu_custom_call.1} parent=11 // pred_region
          _
        $region48: #{tpu_custom_call.1} parent=11 // pred_fallthru
          _
        // Predicated region
        $region49: #{tpu_custom_call.1} parent=11 // pred_check
          %p415 = pneg %p272
        $region50: #{tpu_custom_call.1} parent=11 // pred_check_branch
          %417 = sbr.rel (%p415) target = $region52
        $region51: #{tpu_custom_call.1} parent=11 // pred_region
          _
        $region52: #{tpu_custom_call.1} parent=11 // pred_fallthru
          _
        // Predicated region
        $region53: #{tpu_custom_call.1} parent=11 // pred_check
          %p418 = pneg %p293
        $region54: #{tpu_custom_call.1} parent=11 // pred_check_branch
          %420 = sbr.rel (%p418) target = $region56
        $region55: #{tpu_custom_call.1} parent=11 // pred_region
          _
        $region56: #{tpu_custom_call.1} parent=11 // pred_fallthru
          _
        // Predicated region
        $region57: #{tpu_custom_call.1} parent=11 // pred_check
          %p421 = pneg %p314
        $region58: #{tpu_custom_call.1} parent=11 // pred_check_branch
          %423 = sbr.rel (%p421) target = $region60
        $region59: #{tpu_custom_call.1} parent=11 // pred_region
          _
        $region60: #{tpu_custom_call.1} parent=11 // pred_fallthru
          _
        // Predicated region
        $region61: #{tpu_custom_call.1} parent=11 // pred_check
          %p424 = pneg %p335
        $region62: #{tpu_custom_call.1} parent=11 // pred_check_branch
          %426 = sbr.rel (%p424) target = $region64
        $region63: #{tpu_custom_call.1} parent=11 // pred_region
          _
        $region64: #{tpu_custom_call.1} parent=11 // pred_fallthru
          _
      $region12: #{tpu_custom_call.1} parent=5 // pred_fallthru
        _
      %p427 = scmp.lt.s32.totalorder %s24, 2
      // Predicated region
      $region65: #{tpu_custom_call.1} parent=5 // pred_check
        %p428 = pneg %p427
      $region66: #{tpu_custom_call.1} parent=5 // pred_check_branch
        %430 = sbr.rel (%p428) target = $region68
      $region67: #{tpu_custom_call.1} parent=5 // pred_region
        // Predicated region
        $region69: #{tpu_custom_call.1} parent=67 // pred_check
          %p431 = pneg %p56
        $region70: #{tpu_custom_call.1} parent=67 // pred_check_branch
          %433 = sbr.rel (%p431) target = $region72
        $region71: #{tpu_custom_call.1} parent=67 // pred_region
          %p434 = scmp.lt.s32.totalorder %s31, 1
          %s435 = scalar_select %p434, %s31, 1
          %s436 = smul.addr %s435, 8
          %s437 = scalar_lea.vmem %s0, %s436
        $region72: #{tpu_custom_call.1} parent=67 // pred_fallthru
          _
      $region68: #{tpu_custom_call.1} parent=5 // pred_fallthru
        _
      %p438 = scmp.le.s32.totalorder 1, %s24
      %p439 = scmp.lt.s32.totalorder %s24, 3
      %p440 = pnand %p438, %p439
      %p441 = pneg %p440
      // Predicated region
      $region73: #{tpu_custom_call.1} parent=5 // pred_check
        _
      $region74: #{tpu_custom_call.1} parent=5 // pred_check_branch
        %443 = sbr.rel (%p440) target = $region76
      $region75: #{tpu_custom_call.1} parent=5 // pred_region
        %s444 = ssub.s32 %s24, 1
        // Predicated region
        $region77: #{tpu_custom_call.1} parent=75 // pred_check
          %p445 = pneg %p230
        $region78: #{tpu_custom_call.1} parent=75 // pred_check_branch
          %447 = sbr.rel (%p445) target = $region80
        $region79: #{tpu_custom_call.1} parent=75 // pred_region
          %448 = dma.done [#allocation6], 256
        $region80: #{tpu_custom_call.1} parent=75 // pred_fallthru
          _
        %p449 = scmp.lt.s32.totalorder %s33, 1
        %s450 = scalar_select %p449, %s33, 1
        %s451 = smul.addr %s450, 8
        %s452 = scalar_lea.vmem %s0, %s451
        %p453 = pneg %p62
        %p454 = pneg %p59
        %p455 = pneg %p83
        %p456 = pneg %p80
        %p457 = pneg %p104
        %p458 = pneg %p101
        %p459 = pneg %p125
        %p460 = pneg %p122
        %p461 = pneg %p146
        %p462 = pneg %p143
        %p463 = pneg %p167
        %p464 = pneg %p164
        %p465 = pneg %p188
        %p466 = pneg %p185
        %p467 = pneg %p209
        %p468 = pneg %p206
        %p469 = pneg %p230
        %p470 = pneg %p227
        %p471 = pneg %p251
        %p472 = pneg %p248
        %p473 = pneg %p272
        %p474 = pneg %p269
        %p475 = pneg %p293
        %p476 = pneg %p290
        %p477 = pneg %p314
        %p478 = pneg %p311
        %p479 = pneg %p335
        %p480 = pneg %p332
        %p481 = pneg %p363
        %p482 = pneg %p360
        %s483 = sand.u32 %s350, 1
        %s484 = scalar_lea.sflag [#allocation7], %s483
        %s485 = sand.u32 %s350, 1
        %s486 = smul.addr %s485, 8
        %s487 = scalar_lea.vmem [#allocation8], %s486
        %p488 = scmp.lt.s32.totalorder %s33, 1
        %s489 = scalar_select %p488, %s33, 1
        %s490 = smul.addr %s489, 8
        %s491 = scalar_lea.vmem %s0, %s490
        %p493 = scmp.eq.s32.totalorder %s34, 0
        // Predicated region
        $region81: #{tpu_custom_call.1} parent=75 // pred_check
          %p494 = pneg %p493
        $region82: #{tpu_custom_call.1} parent=75 // pred_check_branch
          %496 = sbr.rel (%p494) target = $region84
        $region83: #{tpu_custom_call.1} parent=75 // pred_region
          %v497 = vld [vmem:[%s491] sm:$0xff]
          %v498 = vpack.c.bf16 %v497, %v497
          %v499 = vld [vmem:[%s1] sm:$0xf]
          %v500 = vld [vmem:[%s1 + $0x4] sm:$0xf]
          %v501 = vld [vmem:[%s1 + $0x8] sm:$0xf]
          %v502 = vld [vmem:[%s1 + $0xc] sm:$0xf]
          %v507 = vunpack.c.l.b16 %v499
          %v508 = vunpack.c.l.b16 %v500
          %v509 = vunpack.c.l.b16 %v501
          %v510 = vunpack.c.l.b16 %v502
          %v511 = vpack.c.b16 %v508, %v507
          %v512 = vpack.c.b16 %v510, %v509
          %vm513 = vcmask 261120
          %v515 = vsel %vm513, %v511, 0
          %v518 = vsel %vm513, %v512, 0
          %v521 = vsel %vm513, %v498, 0
          %523 = vmatprep.subr.bf16.mxu0 0
          %524 = vmatpush1.bf16.xpose.msra.mxu0 %v521
          %525 = vmatprep.subr.bf16.mxu0 0
          %526 = vmatpush1.bf16.xpose.msra.mxu0 0
          %527 = vmatprep.subr.bf16.mxu0 0
          %528 = vmatpush1.bf16.xpose.msra.mxu0 0
          %529 = vmatprep.subr.bf16.mxu0 0
          %530 = vmatpush1.bf16.xpose.msra.mxu0 0
          %531 = vmatprep.subr.bf16.mxu0 0
          %532 = vmatpush1.bf16.xpose.msra.mxu0 0
          %533 = vmatprep.subr.bf16.mxu0 0
          %534 = vmatpush1.bf16.xpose.msra.mxu0 0
          %535 = vmatprep.subr.bf16.mxu0 0
          %536 = vmatpush1.bf16.xpose.msra.mxu0 0
          %537 = vmatprep.subr.bf16.mxu0 0
          %538 = vmatpush1.bf16.xpose.msra.mxu0 0
          %539 = vmatprep.subr.bf16.mxu0 0
          %540 = vmatpush1.bf16.xpose.msra.mxu0 0
          %541 = vmatprep.subr.bf16.mxu0 0
          %542 = vmatpush1.bf16.xpose.msra.mxu0 0
          %543 = vmatprep.subr.bf16.mxu0 0
          %544 = vmatpush1.bf16.xpose.msra.mxu0 0
          %545 = vmatprep.subr.bf16.mxu0 0
          %546 = vmatpush1.bf16.xpose.msra.mxu0 0
          %547 = vmatprep.subr.bf16.mxu0 0
          %548 = vmatpush1.bf16.xpose.msra.mxu0 0
          %549 = vmatprep.subr.bf16.mxu0 0
          %550 = vmatpush1.bf16.xpose.msra.mxu0 0
          %551 = vmatprep.subr.bf16.mxu0 0
          %552 = vmatpush1.bf16.xpose.msra.mxu0 0
          %553 = vmatprep.subr.bf16.mxu0 0
          %554 = vmatpush1.bf16.xpose.msra.mxu0 0
          %555 = vmatprep.mubr.bf16.mxu0 0
          %556 = vmatmul.mubr.bf16.gmra.mrb[0].mxu0 %v515
          %v557 = vpop.f32.mrb[0].mxu0
          %v558 = vadd.f32 0.0, %v557
          %v559 = vpop.f32.mrb[0].mxu0
          %v560 = vpop.f32.mrb[0].mxu0
          %v561 = vadd.f32 0.0, %v560
          %v562 = vpop.f32.mrb[0].mxu0
          %563 = vmatprep.mubr.bf16.mxu0 0
          %564 = vmatmul.mubr.bf16.gmra.mrb[0].mxu0 %v518
          %v565 = vpop.f32.mrb[0].mxu0
          %v566 = vadd.f32 0.0, %v565
          %v567 = vpop.f32.mrb[0].mxu0
          %v568 = vpop.f32.mrb[0].mxu0
          %v569 = vadd.f32 0.0, %v568
          %v570 = vpop.f32.mrb[0].mxu0
          %571 = vdwg.mxu0
          %v572 = vpack.c.bf16 %v558, %v558
          %v573 = vpack.c.bf16 %v561, %v561
          %v574 = vpack.c.bf16 %v566, %v566
          %v575 = vpack.c.bf16 %v569, %v569
          %vm576 = vcmask 60416
          %577 = vst.msk [vmem:[#allocation2] sm:$0xf] %vm576, %v572
          %578 = vst.msk [vmem:[#allocation2 + $0x4] sm:$0xf] %vm576, %v573
          %579 = vst.msk [vmem:[#allocation2 + $0x8] sm:$0xf] %vm576, %v574
          %580 = vst.msk [vmem:[#allocation2 + $0xc] sm:$0xf] %vm576, %v575
          %v581 = vld [vmem:[%s2] sm:$0xf]
          %v582 = vld [vmem:[%s2 + $0x4] sm:$0xf]
          %v583 = vld [vmem:[%s2 + $0x8] sm:$0xf]
          %v584 = vld [vmem:[%s2 + $0xc] sm:$0xf]
          %v589 = vunpack.c.l.b16 %v581
          %v590 = vunpack.c.l.b16 %v582
          %v591 = vunpack.c.l.b16 %v583
          %v592 = vunpack.c.l.b16 %v584
          %v593 = vpack.c.b16 %v590, %v589
          %v594 = vpack.c.b16 %v592, %v591
          %v596 = vsel %vm513, %v593, 0
          %v599 = vsel %vm513, %v594, 0
          %601 = vmatprep.subr.bf16.mxu0 0
          %602 = vmatpush1.bf16.xpose.msra.mxu0 %v521
          %603 = vmatprep.subr.bf16.mxu0 0
          %604 = vmatpush1.bf16.xpose.msra.mxu0 0
          %605 = vmatprep.subr.bf16.mxu0 0
          %606 = vmatpush1.bf16.xpose.msra.mxu0 0
          %607 = vmatprep.subr.bf16.mxu0 0
          %608 = vmatpush1.bf16.xpose.msra.mxu0 0
          %609 = vmatprep.subr.bf16.mxu0 0
          %610 = vmatpush1.bf16.xpose.msra.mxu0 0
          %611 = vmatprep.subr.bf16.mxu0 0
          %612 = vmatpush1.bf16.xpose.msra.mxu0 0
          %613 = vmatprep.subr.bf16.mxu0 0
          %614 = vmatpush1.bf16.xpose.msra.mxu0 0
          %615 = vmatprep.subr.bf16.mxu0 0
          %616 = vmatpush1.bf16.xpose.msra.mxu0 0
          %617 = vmatprep.subr.bf16.mxu0 0
          %618 = vmatpush1.bf16.xpose.msra.mxu0 0
          %619 = vmatprep.subr.bf16.mxu0 0
          %620 = vmatpush1.bf16.xpose.msra.mxu0 0
          %621 = vmatprep.subr.bf16.mxu0 0
          %622 = vmatpush1.bf16.xpose.msra.mxu0 0
          %623 = vmatprep.subr.bf16.mxu0 0
          %624 = vmatpush1.bf16.xpose.msra.mxu0 0
          %625 = vmatprep.subr.bf16.mxu0 0
          %626 = vmatpush1.bf16.xpose.msra.mxu0 0
          %627 = vmatprep.subr.bf16.mxu0 0
          %628 = vmatpush1.bf16.xpose.msra.mxu0 0
          %629 = vmatprep.subr.bf16.mxu0 0
          %630 = vmatpush1.bf16.xpose.msra.mxu0 0
          %631 = vmatprep.subr.bf16.mxu0 0
          %632 = vmatpush1.bf16.xpose.msra.mxu0 0
          %633 = vmatprep.mubr.bf16.mxu0 0
          %634 = vmatmul.mubr.bf16.gmra.mrb[0].mxu0 %v596
          %v635 = vpop.f32.mrb[0].mxu0
          %v636 = vadd.f32 0.0, %v635
          %v637 = vpop.f32.mrb[0].mxu0
          %v638 = vpop.f32.mrb[0].mxu0
          %v639 = vadd.f32 0.0, %v638
          %v640 = vpop.f32.mrb[0].mxu0
          %641 = vmatprep.mubr.bf16.mxu0 0
          %642 = vmatmul.mubr.bf16.gmra.mrb[0].mxu0 %v599
          %v643 = vpop.f32.mrb[0].mxu0
          %v644 = vadd.f32 0.0, %v643
          %v645 = vpop.f32.mrb[0].mxu0
          %v646 = vpop.f32.mrb[0].mxu0
          %v647 = vadd.f32 0.0, %v646
          %v648 = vpop.f32.mrb[0].mxu0
          %649 = vdwg.mxu0
          %v650 = vpack.c.bf16 %v636, %v636
          %v651 = vpack.c.bf16 %v639, %v639
          %v652 = vpack.c.bf16 %v644, %v644
          %v653 = vpack.c.bf16 %v647, %v647
          %654 = vst.msk [vmem:[#allocation3] sm:$0xf] %vm576, %v650
          %655 = vst.msk [vmem:[#allocation3 + $0x4] sm:$0xf] %vm576, %v651
          %656 = vst.msk [vmem:[#allocation3 + $0x8] sm:$0xf] %vm576, %v652
          %657 = vst.msk [vmem:[#allocation3 + $0xc] sm:$0xf] %vm576, %v653
          %v658 = vld [vmem:[%s3] sm:$0xf]
          %v659 = vld [vmem:[%s3 + $0x4] sm:$0xf]
          %v660 = vld [vmem:[%s3 + $0x8] sm:$0xf]
          %v661 = vld [vmem:[%s3 + $0xc] sm:$0xf]
          %v666 = vunpack.c.l.b16 %v658
          %v667 = vunpack.c.l.b16 %v659
          %v668 = vunpack.c.l.b16 %v660
          %v669 = vunpack.c.l.b16 %v661
          %v670 = vpack.c.b16 %v667, %v666
          %v671 = vpack.c.b16 %v669, %v668
          %v673 = vsel %vm513, %v670, 0
          %v676 = vsel %vm513, %v671, 0
          %678 = vmatprep.subr.bf16.mxu0 0
          %679 = vmatpush1.bf16.xpose.msra.mxu0 %v521
          %680 = vmatprep.subr.bf16.mxu0 0
          %681 = vmatpush1.bf16.xpose.msra.mxu0 0
          %682 = vmatprep.subr.bf16.mxu0 0
          %683 = vmatpush1.bf16.xpose.msra.mxu0 0
          %684 = vmatprep.subr.bf16.mxu0 0
          %685 = vmatpush1.bf16.xpose.msra.mxu0 0
          %686 = vmatprep.subr.bf16.mxu0 0
          %687 = vmatpush1.bf16.xpose.msra.mxu0 0
          %688 = vmatprep.subr.bf16.mxu0 0
          %689 = vmatpush1.bf16.xpose.msra.mxu0 0
          %690 = vmatprep.subr.bf16.mxu0 0
          %691 = vmatpush1.bf16.xpose.msra.mxu0 0
          %692 = vmatprep.subr.bf16.mxu0 0
          %693 = vmatpush1.bf16.xpose.msra.mxu0 0
          %694 = vmatprep.subr.bf16.mxu0 0
          %695 = vmatpush1.bf16.xpose.msra.mxu0 0
          %696 = vmatprep.subr.bf16.mxu0 0
          %697 = vmatpush1.bf16.xpose.msra.mxu0 0
          %698 = vmatprep.subr.bf16.mxu0 0
          %699 = vmatpush1.bf16.xpose.msra.mxu0 0
          %700 = vmatprep.subr.bf16.mxu0 0
          %701 = vmatpush1.bf16.xpose.msra.mxu0 0
          %702 = vmatprep.subr.bf16.mxu0 0
          %703 = vmatpush1.bf16.xpose.msra.mxu0 0
          %704 = vmatprep.subr.bf16.mxu0 0
          %705 = vmatpush1.bf16.xpose.msra.mxu0 0
          %706 = vmatprep.subr.bf16.mxu0 0
          %707 = vmatpush1.bf16.xpose.msra.mxu0 0
          %708 = vmatprep.subr.bf16.mxu0 0
          %709 = vmatpush1.bf16.xpose.msra.mxu0 0
          %710 = vmatprep.mubr.bf16.mxu0 0
          %711 = vmatmul.mubr.bf16.gmra.mrb[0].mxu0 %v673
          %v712 = vpop.f32.mrb[0].mxu0
          %v713 = vadd.f32 0.0, %v712
          %v714 = vpop.f32.mrb[0].mxu0
          %v715 = vpop.f32.mrb[0].mxu0
          %v716 = vadd.f32 0.0, %v715
          %v717 = vpop.f32.mrb[0].mxu0
          %718 = vmatprep.mubr.bf16.mxu0 0
          %719 = vmatmul.mubr.bf16.gmra.mrb[0].mxu0 %v676
          %v720 = vpop.f32.mrb[0].mxu0
          %v721 = vadd.f32 0.0, %v720
          %v722 = vpop.f32.mrb[0].mxu0
          %v723 = vpop.f32.mrb[0].mxu0
          %v724 = vadd.f32 0.0, %v723
          %v725 = vpop.f32.mrb[0].mxu0
          %726 = vdwg.mxu0
          %v727 = vpack.c.bf16 %v713, %v713
          %v728 = vpack.c.bf16 %v716, %v716
          %v729 = vpack.c.bf16 %v721, %v721
          %v730 = vpack.c.bf16 %v724, %v724
          %731 = vst.msk [vmem:[#allocation4] sm:$0xf] %vm576, %v727
          %732 = vst.msk [vmem:[#allocation4 + $0x4] sm:$0xf] %vm576, %v728
          %733 = vst.msk [vmem:[#allocation4 + $0x8] sm:$0xf] %vm576, %v729
          %734 = vst.msk [vmem:[#allocation4 + $0xc] sm:$0xf] %vm576, %v730
        $region84: #{tpu_custom_call.1} parent=75 // pred_fallthru
          _
        %s735 = smul.u32 %s34, 8
        %s736 = sshra.s32 %s735, 3
        %s737 = sand.u32 %s735, 7
        %s738 = smul.addr %s736, 4
        %s739 = scalar_lea.vmem [#allocation2], %s738
        %v740 = vld [vmem:[%s739] sm:$0xf]
        %v741 = vld [vmem:[%s739 + $0x4] sm:$0xf]
        %v742 = vld [vmem:[%s739 + $0x8] sm:$0xf]
        %v743 = vld [vmem:[%s739 + $0xc] sm:$0xf]
        %v744 = vld [vmem:[#allocation3] sm:$0xf]
        %v745 = vld [vmem:[#allocation3 + $0x4] sm:$0xf]
        %v746 = vld [vmem:[#allocation3 + $0x8] sm:$0xf]
        %v747 = vld [vmem:[#allocation3 + $0xc] sm:$0xf]
        %vm748 = vcmask 64512
        %v750 = vsel %vm748, %v740, 0
        %v753 = vsel %vm748, %v744, 0
        %755 = vmatprep.subr.bf16.mxu0 0
        %756 = vmatpush1.bf16.xpose.msra.mxu0 %v753
        %757 = vmatprep.subr.bf16.mxu0 0
        %758 = vmatpush1.bf16.xpose.msra.mxu0 0
        %759 = vmatprep.subr.bf16.mxu0 0
        %760 = vmatpush1.bf16.xpose.msra.mxu0 0
        %761 = vmatprep.subr.bf16.mxu0 0
        %762 = vmatpush1.bf16.xpose.msra.mxu0 0
        %763 = vmatprep.subr.bf16.mxu0 0
        %764 = vmatpush1.bf16.xpose.msra.mxu0 0
        %765 = vmatprep.subr.bf16.mxu0 0
        %766 = vmatpush1.bf16.xpose.msra.mxu0 0
        %767 = vmatprep.subr.bf16.mxu0 0
        %768 = vmatpush1.bf16.xpose.msra.mxu0 0
        %769 = vmatprep.subr.bf16.mxu0 0
        %770 = vmatpush1.bf16.xpose.msra.mxu0 0
        %771 = vmatprep.subr.bf16.mxu0 0
        %772 = vmatpush1.bf16.xpose.msra.mxu0 0
        %773 = vmatprep.subr.bf16.mxu0 0
        %774 = vmatpush1.bf16.xpose.msra.mxu0 0
        %775 = vmatprep.subr.bf16.mxu0 0
        %776 = vmatpush1.bf16.xpose.msra.mxu0 0
        %777 = vmatprep.subr.bf16.mxu0 0
        %778 = vmatpush1.bf16.xpose.msra.mxu0 0
        %779 = vmatprep.subr.bf16.mxu0 0
        %780 = vmatpush1.bf16.xpose.msra.mxu0 0
        %781 = vmatprep.subr.bf16.mxu0 0
        %782 = vmatpush1.bf16.xpose.msra.mxu0 0
        %783 = vmatprep.subr.bf16.mxu0 0
        %784 = vmatpush1.bf16.xpose.msra.mxu0 0
        %785 = vmatprep.subr.bf16.mxu0 0
        %786 = vmatpush1.bf16.xpose.msra.mxu0 0
        %787 = vmatprep.mubr.bf16.mxu0 0
        %788 = vmatmul.mubr.bf16.gmra.mrb[0].mxu0 %v750
        %v789 = vpop.f32.mrb[0].mxu0
        %v790 = vadd.f32 0.0, %v789
        %v791 = vpop.f32.mrb[0].mxu0
        %v792 = vpop.f32.mrb[0].mxu0
        %v793 = vpop.f32.mrb[0].mxu0
        %794 = vdwg.mxu0
        %v796 = vsel %vm748, %v741, 0
        %v799 = vsel %vm748, %v745, 0
        %801 = vmatprep.subr.bf16.mxu0 0
        %802 = vmatpush1.bf16.xpose.msra.mxu0 %v799
        %803 = vmatprep.subr.bf16.mxu0 0
        %804 = vmatpush1.bf16.xpose.msra.mxu0 0
        %805 = vmatprep.subr.bf16.mxu0 0
        %806 = vmatpush1.bf16.xpose.msra.mxu0 0
        %807 = vmatprep.subr.bf16.mxu0 0
        %808 = vmatpush1.bf16.xpose.msra.mxu0 0
        %809 = vmatprep.subr.bf16.mxu0 0
        %810 = vmatpush1.bf16.xpose.msra.mxu0 0
        %811 = vmatprep.subr.bf16.mxu0 0
        %812 = vmatpush1.bf16.xpose.msra.mxu0 0
        %813 = vmatprep.subr.bf16.mxu0 0
        %814 = vmatpush1.bf16.xpose.msra.mxu0 0
        %815 = vmatprep.subr.bf16.mxu0 0
        %816 = vmatpush1.bf16.xpose.msra.mxu0 0
        %817 = vmatprep.subr.bf16.mxu0 0
        %818 = vmatpush1.bf16.xpose.msra.mxu0 0
        %819 = vmatprep.subr.bf16.mxu0 0
        %820 = vmatpush1.bf16.xpose.msra.mxu0 0
        %821 = vmatprep.subr.bf16.mxu0 0
        %822 = vmatpush1.bf16.xpose.msra.mxu0 0
        %823 = vmatprep.subr.bf16.mxu0 0
        %824 = vmatpush1.bf16.xpose.msra.mxu0 0
        %825 = vmatprep.subr.bf16.mxu0 0
        %826 = vmatpush1.bf16.xpose.msra.mxu0 0
        %827 = vmatprep.subr.bf16.mxu0 0
        %828 = vmatpush1.bf16.xpose.msra.mxu0 0
        %829 = vmatprep.subr.bf16.mxu0 0
        %830 = vmatpush1.bf16.xpose.msra.mxu0 0
        %831 = vmatprep.subr.bf16.mxu0 0
        %832 = vmatpush1.bf16.xpose.msra.mxu0 0
        %833 = vmatprep.mubr.bf16.mxu0 0
        %834 = vmatmul.mubr.bf16.gmra.mrb[0].mxu0 %v796
        %v835 = vpop.f32.mrb[0].mxu0
        %v836 = vadd.f32 0.0, %v835
        %v837 = vpop.f32.mrb[0].mxu0
        %v838 = vpop.f32.mrb[0].mxu0
        %v839 = vpop.f32.mrb[0].mxu0
        %840 = vdwg.mxu0
        %v842 = vsel %vm748, %v742, 0
        %v845 = vsel %vm748, %v746, 0
        %847 = vmatprep.subr.bf16.mxu0 0
        %848 = vmatpush1.bf16.xpose.msra.mxu0 %v845
        %849 = vmatprep.subr.bf16.mxu0 0
        %850 = vmatpush1.bf16.xpose.msra.mxu0 0
        %851 = vmatprep.subr.bf16.mxu0 0
        %852 = vmatpush1.bf16.xpose.msra.mxu0 0
        %853 = vmatprep.subr.bf16.mxu0 0
        %854 = vmatpush1.bf16.xpose.msra.mxu0 0
        %855 = vmatprep.subr.bf16.mxu0 0
        %856 = vmatpush1.bf16.xpose.msra.mxu0 0
        %857 = vmatprep.subr.bf16.mxu0 0
        %858 = vmatpush1.bf16.xpose.msra.mxu0 0
        %859 = vmatprep.subr.bf16.mxu0 0
        %860 = vmatpush1.bf16.xpose.msra.mxu0 0
        %861 = vmatprep.subr.bf16.mxu0 0
        %862 = vmatpush1.bf16.xpose.msra.mxu0 0
        %863 = vmatprep.subr.bf16.mxu0 0
        %864 = vmatpush1.bf16.xpose.msra.mxu0 0
        %865 = vmatprep.subr.bf16.mxu0 0
        %866 = vmatpush1.bf16.xpose.msra.mxu0 0
        %867 = vmatprep.subr.bf16.mxu0 0
        %868 = vmatpush1.bf16.xpose.msra.mxu0 0
        %869 = vmatprep.subr.bf16.mxu0 0
        %870 = vmatpush1.bf16.xpose.msra.mxu0 0
        %871 = vmatprep.subr.bf16.mxu0 0
        %872 = vmatpush1.bf16.xpose.msra.mxu0 0
        %873 = vmatprep.subr.bf16.mxu0 0
        %874 = vmatpush1.bf16.xpose.msra.mxu0 0
        %875 = vmatprep.subr.bf16.mxu0 0
        %876 = vmatpush1.bf16.xpose.msra.mxu0 0
        %877 = vmatprep.subr.bf16.mxu0 0
        %878 = vmatpush1.bf16.xpose.msra.mxu0 0
        %879 = vmatprep.mubr.bf16.mxu0 0
        %880 = vmatmul.mubr.bf16.gmra.mrb[0].mxu0 %v842
        %v881 = vpop.f32.mrb[0].mxu0
        %v882 = vadd.f32 0.0, %v881
        %v883 = vpop.f32.mrb[0].mxu0
        %v884 = vpop.f32.mrb[0].mxu0
        %v885 = vpop.f32.mrb[0].mxu0
        %886 = vdwg.mxu0
        %v888 = vsel %vm748, %v743, 0
        %v891 = vsel %vm748, %v747, 0
        %893 = vmatprep.subr.bf16.mxu0 0
        %894 = vmatpush1.bf16.xpose.msra.mxu0 %v891
        %895 = vmatprep.subr.bf16.mxu0 0
        %896 = vmatpush1.bf16.xpose.msra.mxu0 0
        %897 = vmatprep.subr.bf16.mxu0 0
        %898 = vmatpush1.bf16.xpose.msra.mxu0 0
        %899 = vmatprep.subr.bf16.mxu0 0
        %900 = vmatpush1.bf16.xpose.msra.mxu0 0
        %901 = vmatprep.subr.bf16.mxu0 0
        %902 = vmatpush1.bf16.xpose.msra.mxu0 0
        %903 = vmatprep.subr.bf16.mxu0 0
        %904 = vmatpush1.bf16.xpose.msra.mxu0 0
        %905 = vmatprep.subr.bf16.mxu0 0
        %906 = vmatpush1.bf16.xpose.msra.mxu0 0
        %907 = vmatprep.subr.bf16.mxu0 0
        %908 = vmatpush1.bf16.xpose.msra.mxu0 0
        %909 = vmatprep.subr.bf16.mxu0 0
        %910 = vmatpush1.bf16.xpose.msra.mxu0 0
        %911 = vmatprep.subr.bf16.mxu0 0
        %912 = vmatpush1.bf16.xpose.msra.mxu0 0
        %913 = vmatprep.subr.bf16.mxu0 0
        %914 = vmatpush1.bf16.xpose.msra.mxu0 0
        %915 = vmatprep.subr.bf16.mxu0 0
        %916 = vmatpush1.bf16.xpose.msra.mxu0 0
        %917 = vmatprep.subr.bf16.mxu0 0
        %918 = vmatpush1.bf16.xpose.msra.mxu0 0
        %919 = vmatprep.subr.bf16.mxu0 0
        %920 = vmatpush1.bf16.xpose.msra.mxu0 0
        %921 = vmatprep.subr.bf16.mxu0 0
        %922 = vmatpush1.bf16.xpose.msra.mxu0 0
        %923 = vmatprep.subr.bf16.mxu0 0
        %924 = vmatpush1.bf16.xpose.msra.mxu0 0
        %925 = vmatprep.mubr.bf16.mxu0 0
        %926 = vmatmul.mubr.bf16.gmra.mrb[0].mxu0 %v888
        %v927 = vpop.f32.mrb[0].mxu0
        %v928 = vadd.f32 0.0, %v927
        %v929 = vpop.f32.mrb[0].mxu0
        %v930 = vpop.f32.mrb[0].mxu0
        %v931 = vpop.f32.mrb[0].mxu0
        %932 = vdwg.mxu0
        %v933 = vmul.f32 %v790, 0.17677669
        %v934 = vmul.f32 %v836, 0.17677669
        %v935 = vmul.f32 %v882, 0.17677669
        %v936 = vmul.f32 %v928, 0.17677669
        %v937 = vsel %vm748, %v933, -inf
        %938 = vmax.xlane.f32.xlu0 %v937
        %v939 = vpop.xlane.xlu0 %938
        %v940 = vsel %vm748, %v934, -inf
        %941 = vmax.xlane.f32.xlu0 %v940
        %v942 = vpop.xlane.xlu0 %941
        %v943 = vsel %vm748, %v935, -inf
        %944 = vmax.xlane.f32.xlu0 %v943
        %v945 = vpop.xlane.xlu0 %944
        %v946 = vsel %vm748, %v936, -inf
        %947 = vmax.xlane.f32.xlu0 %v946
        %v948 = vpop.xlane.xlu0 %947
        %v949 = vsub.f32 %v933, %v939
        %v950 = vsub.f32 %v934, %v942
        %v951 = vsub.f32 %v935, %v945
        %v952 = vsub.f32 %v936, %v948
        %v953 = vmul.f32 %v949, 1.442695
        %v954 = vpow.pop %v953
        %v955 = vmul.f32 %v950, 1.442695
        %v956 = vpow.pop %v955
        %v957 = vmul.f32 %v951, 1.442695
        %v958 = vpow.pop %v957
        %v959 = vmul.f32 %v952, 1.442695
        %v960 = vpow.pop %v959
        %v961 = vsel %vm748, %v954, 0.0
        %962 = vadd.xlane.f32.xlu0 %v961
        %v963 = vpop.xlane.xlu0 %962
        %v964 = vsel %vm748, %v956, 0.0
        %965 = vadd.xlane.f32.xlu0 %v964
        %v966 = vpop.xlane.xlu0 %965
        %v967 = vsel %vm748, %v958, 0.0
        %968 = vadd.xlane.f32.xlu0 %v967
        %v969 = vpop.xlane.xlu0 %968
        %v970 = vsel %vm748, %v960, 0.0
        %971 = vadd.xlane.f32.xlu0 %v970
        %v972 = vpop.xlane.xlu0 %971
        %v973 = vrcp.pop %v963
        %v974 = vrcp.pop %v966
        %v975 = vrcp.pop %v969
        %v976 = vrcp.pop %v972
        %v977 = vmul.f32 %v954, %v973
        %v978 = vmul.f32 %v956, %v974
        %v979 = vmul.f32 %v958, %v975
        %v980 = vmul.f32 %v960, %v976
        %v981 = vpack.c.bf16 %v977, %v977
        %v982 = vpack.c.bf16 %v978, %v978
        %v983 = vpack.c.bf16 %v979, %v979
        %v984 = vpack.c.bf16 %v980, %v980
        %v985 = vld [vmem:[#allocation4] sm:$0xf]
        %v986 = vld [vmem:[#allocation4 + $0x4] sm:$0xf]
        %v987 = vld [vmem:[#allocation4 + $0x8] sm:$0xf]
        %v988 = vld [vmem:[#allocation4 + $0xc] sm:$0xf]
        %v990 = vsel %vm748, %v981, 0
        %vm992 = vcmask 1043456
        %v994 = vsel %vm992, %v985, 0
        %996 = vmatprep.subr.bf16.mxu0 0
        %997 = vmatpush1.bf16.msra.mxu0 %v994
        %998 = vmatprep.subr.bf16.mxu0 0
        %999 = vmatpush1.bf16.msra.mxu0 0
        %1000 = vmatprep.subr.bf16.mxu0 0
        %1001 = vmatpush1.bf16.msra.mxu0 0
        %1002 = vmatprep.subr.bf16.mxu0 0
        %1003 = vmatpush1.bf16.msra.mxu0 0
        %1004 = vmatprep.subr.bf16.mxu0 0
        %1005 = vmatpush1.bf16.msra.mxu0 0
        %1006 = vmatprep.subr.bf16.mxu0 0
        %1007 = vmatpush1.bf16.msra.mxu0 0
        %1008 = vmatprep.subr.bf16.mxu0 0
        %1009 = vmatpush1.bf16.msra.mxu0 0
        %1010 = vmatprep.subr.bf16.mxu0 0
        %1011 = vmatpush1.bf16.msra.mxu0 0
        %1012 = vmatprep.subr.bf16.mxu0 0
        %1013 = vmatpush1.bf16.msra.mxu0 0
        %1014 = vmatprep.subr.bf16.mxu0 0
        %1015 = vmatpush1.bf16.msra.mxu0 0
        %1016 = vmatprep.subr.bf16.mxu0 0
        %1017 = vmatpush1.bf16.msra.mxu0 0
        %1018 = vmatprep.subr.bf16.mxu0 0
        %1019 = vmatpush1.bf16.msra.mxu0 0
        %1020 = vmatprep.subr.bf16.mxu0 0
        %1021 = vmatpush1.bf16.msra.mxu0 0
        %1022 = vmatprep.subr.bf16.mxu0 0
        %1023 = vmatpush1.bf16.msra.mxu0 0
        %1024 = vmatprep.subr.bf16.mxu0 0
        %1025 = vmatpush1.bf16.msra.mxu0 0
        %1026 = vmatprep.subr.bf16.mxu0 0
        %1027 = vmatpush1.bf16.msra.mxu0 0
        %1028 = vmatprep.mubr.bf16.mxu0 0
        %1029 = vmatmul.mubr.bf16.gmra.mrb[0].mxu0 %v990
        %v1030 = vpop.f32.mrb[0].mxu0
        %v1031 = vadd.f32 0.0, %v1030
        %v1032 = vpop.f32.mrb[0].mxu0
        %v1033 = vpop.f32.mrb[0].mxu0
        %v1034 = vpop.f32.mrb[0].mxu0
        %1035 = vdwg.mxu0
        %v1037 = vsel %vm748, %v982, 0
        %v1040 = vsel %vm992, %v986, 0
        %1042 = vmatprep.subr.bf16.mxu0 0
        %1043 = vmatpush1.bf16.msra.mxu0 %v1040
        %1044 = vmatprep.subr.bf16.mxu0 0
        %1045 = vmatpush1.bf16.msra.mxu0 0
        %1046 = vmatprep.subr.bf16.mxu0 0
        %1047 = vmatpush1.bf16.msra.mxu0 0
        %1048 = vmatprep.subr.bf16.mxu0 0
        %1049 = vmatpush1.bf16.msra.mxu0 0
        %1050 = vmatprep.subr.bf16.mxu0 0
        %1051 = vmatpush1.bf16.msra.mxu0 0
        %1052 = vmatprep.subr.bf16.mxu0 0
        %1053 = vmatpush1.bf16.msra.mxu0 0
        %1054 = vmatprep.subr.bf16.mxu0 0
        %1055 = vmatpush1.bf16.msra.mxu0 0
        %1056 = vmatprep.subr.bf16.mxu0 0
        %1057 = vmatpush1.bf16.msra.mxu0 0
        %1058 = vmatprep.subr.bf16.mxu0 0
        %1059 = vmatpush1.bf16.msra.mxu0 0
        %1060 = vmatprep.subr.bf16.mxu0 0
        %1061 = vmatpush1.bf16.msra.mxu0 0
        %1062 = vmatprep.subr.bf16.mxu0 0
        %1063 = vmatpush1.bf16.msra.mxu0 0
        %1064 = vmatprep.subr.bf16.mxu0 0
        %1065 = vmatpush1.bf16.msra.mxu0 0
        %1066 = vmatprep.subr.bf16.mxu0 0
        %1067 = vmatpush1.bf16.msra.mxu0 0
        %1068 = vmatprep.subr.bf16.mxu0 0
        %1069 = vmatpush1.bf16.msra.mxu0 0
        %1070 = vmatprep.subr.bf16.mxu0 0
        %1071 = vmatpush1.bf16.msra.mxu0 0
        %1072 = vmatprep.subr.bf16.mxu0 0
        %1073 = vmatpush1.bf16.msra.mxu0 0
        %1074 = vmatprep.mubr.bf16.mxu0 0
        %1075 = vmatmul.mubr.bf16.gmra.mrb[0].mxu0 %v1037
        %v1076 = vpop.f32.mrb[0].mxu0
        %v1077 = vadd.f32 0.0, %v1076
        %v1078 = vpop.f32.mrb[0].mxu0
        %v1079 = vpop.f32.mrb[0].mxu0
        %v1080 = vpop.f32.mrb[0].mxu0
        %1081 = vdwg.mxu0
        %v1083 = vsel %vm748, %v983, 0
        %v1086 = vsel %vm992, %v987, 0
        %1088 = vmatprep.subr.bf16.mxu0 0
        %1089 = vmatpush1.bf16.msra.mxu0 %v1086
        %1090 = vmatprep.subr.bf16.mxu0 0
        %1091 = vmatpush1.bf16.msra.mxu0 0
        %1092 = vmatprep.subr.bf16.mxu0 0
        %1093 = vmatpush1.bf16.msra.mxu0 0
        %1094 = vmatprep.subr.bf16.mxu0 0
        %1095 = vmatpush1.bf16.msra.mxu0 0
        %1096 = vmatprep.subr.bf16.mxu0 0
        %1097 = vmatpush1.bf16.msra.mxu0 0
        %1098 = vmatprep.subr.bf16.mxu0 0
        %1099 = vmatpush1.bf16.msra.mxu0 0
        %1100 = vmatprep.subr.bf16.mxu0 0
        %1101 = vmatpush1.bf16.msra.mxu0 0
        %1102 = vmatprep.subr.bf16.mxu0 0
        %1103 = vmatpush1.bf16.msra.mxu0 0
        %1104 = vmatprep.subr.bf16.mxu0 0
        %1105 = vmatpush1.bf16.msra.mxu0 0
        %1106 = vmatprep.subr.bf16.mxu0 0
        %1107 = vmatpush1.bf16.msra.mxu0 0
        %1108 = vmatprep.subr.bf16.mxu0 0
        %1109 = vmatpush1.bf16.msra.mxu0 0
        %1110 = vmatprep.subr.bf16.mxu0 0
        %1111 = vmatpush1.bf16.msra.mxu0 0
        %1112 = vmatprep.subr.bf16.mxu0 0
        %1113 = vmatpush1.bf16.msra.mxu0 0
        %1114 = vmatprep.subr.bf16.mxu0 0
        %1115 = vmatpush1.bf16.msra.mxu0 0
        %1116 = vmatprep.subr.bf16.mxu0 0
        %1117 = vmatpush1.bf16.msra.mxu0 0
        %1118 = vmatprep.subr.bf16.mxu0 0
        %1119 = vmatpush1.bf16.msra.mxu0 0
        %1120 = vmatprep.mubr.bf16.mxu0 0
        %1121 = vmatmul.mubr.bf16.gmra.mrb[0].mxu0 %v1083
        %v1122 = vpop.f32.mrb[0].mxu0
        %v1123 = vadd.f32 0.0, %v1122
        %v1124 = vpop.f32.mrb[0].mxu0
        %v1125 = vpop.f32.mrb[0].mxu0
        %v1126 = vpop.f32.mrb[0].mxu0
        %1127 = vdwg.mxu0
        %v1129 = vsel %vm748, %v984, 0
        %v1132 = vsel %vm992, %v988, 0
        %1134 = vmatprep.subr.bf16.mxu0 0
        %1135 = vmatpush1.bf16.msra.mxu0 %v1132
        %1136 = vmatprep.subr.bf16.mxu0 0
        %1137 = vmatpush1.bf16.msra.mxu0 0
        %1138 = vmatprep.subr.bf16.mxu0 0
        %1139 = vmatpush1.bf16.msra.mxu0 0
        %1140 = vmatprep.subr.bf16.mxu0 0
        %1141 = vmatpush1.bf16.msra.mxu0 0
        %1142 = vmatprep.subr.bf16.mxu0 0
        %1143 = vmatpush1.bf16.msra.mxu0 0
        %1144 = vmatprep.subr.bf16.mxu0 0
        %1145 = vmatpush1.bf16.msra.mxu0 0
        %1146 = vmatprep.subr.bf16.mxu0 0
        %1147 = vmatpush1.bf16.msra.mxu0 0
        %1148 = vmatprep.subr.bf16.mxu0 0
        %1149 = vmatpush1.bf16.msra.mxu0 0
        %1150 = vmatprep.subr.bf16.mxu0 0
        %1151 = vmatpush1.bf16.msra.mxu0 0
        %1152 = vmatprep.subr.bf16.mxu0 0
        %1153 = vmatpush1.bf16.msra.mxu0 0
        %1154 = vmatprep.subr.bf16.mxu0 0
        %1155 = vmatpush1.bf16.msra.mxu0 0
        %1156 = vmatprep.subr.bf16.mxu0 0
        %1157 = vmatpush1.bf16.msra.mxu0 0
        %1158 = vmatprep.subr.bf16.mxu0 0
        %1159 = vmatpush1.bf16.msra.mxu0 0
        %1160 = vmatprep.subr.bf16.mxu0 0
        %1161 = vmatpush1.bf16.msra.mxu0 0
        %1162 = vmatprep.subr.bf16.mxu0 0
        %1163 = vmatpush1.bf16.msra.mxu0 0
        %1164 = vmatprep.subr.bf16.mxu0 0
        %1165 = vmatpush1.bf16.msra.mxu0 0
        %1166 = vmatprep.mubr.bf16.mxu0 0
        %1167 = vmatmul.mubr.bf16.gmra.mrb[0].mxu0 %v1129
        %v1168 = vpop.f32.mrb[0].mxu0
        %v1169 = vadd.f32 0.0, %v1168
        %v1170 = vpop.f32.mrb[0].mxu0
        %v1171 = vpop.f32.mrb[0].mxu0
        %v1172 = vpop.f32.mrb[0].mxu0
        %1173 = vdwg.mxu0
        %v1174 = vpack.c.bf16 %v1031, %v1031
        %v1175 = vpack.c.bf16 %v1077, %v1077
        %v1176 = vpack.c.bf16 %v1123, %v1123
        %v1177 = vpack.c.bf16 %v1169, %v1169
        %v1178 = vld [vmem:[%s4] sm:$0xf]
        %s1179 = scalar_lea.vmem %s4, 4
        %v1180 = vld [vmem:[%s1179] sm:$0xf]
        %v1182 = vsel %vm748, %v1175, 0
        %v1185 = vsel %vm992, %v1180, 0
        %1187 = vmatprep.subr.bf16.mxu0 0
        %1188 = vmatpush1.bf16.msra.mxu0 %v1185
        %1189 = vmatprep.subr.bf16.mxu0 0
        %1190 = vmatpush1.bf16.msra.mxu0 0
        %1191 = vmatprep.subr.bf16.mxu0 0
        %1192 = vmatpush1.bf16.msra.mxu0 0
        %1193 = vmatprep.subr.bf16.mxu0 0
        %1194 = vmatpush1.bf16.msra.mxu0 0
        %1195 = vmatprep.subr.bf16.mxu0 0
        %1196 = vmatpush1.bf16.msra.mxu0 0
        %1197 = vmatprep.subr.bf16.mxu0 0
        %1198 = vmatpush1.bf16.msra.mxu0 0
        %1199 = vmatprep.subr.bf16.mxu0 0
        %1200 = vmatpush1.bf16.msra.mxu0 0
        %1201 = vmatprep.subr.bf16.mxu0 0
        %1202 = vmatpush1.bf16.msra.mxu0 0
        %1203 = vmatprep.subr.bf16.mxu0 0
        %1204 = vmatpush1.bf16.msra.mxu0 0
        %1205 = vmatprep.subr.bf16.mxu0 0
        %1206 = vmatpush1.bf16.msra.mxu0 0
        %1207 = vmatprep.subr.bf16.mxu0 0
        %1208 = vmatpush1.bf16.msra.mxu0 0
        %1209 = vmatprep.subr.bf16.mxu0 0
        %1210 = vmatpush1.bf16.msra.mxu0 0
        %1211 = vmatprep.subr.bf16.mxu0 0
        %1212 = vmatpush1.bf16.msra.mxu0 0
        %1213 = vmatprep.subr.bf16.mxu0 0
        %1214 = vmatpush1.bf16.msra.mxu0 0
        %1215 = vmatprep.subr.bf16.mxu0 0
        %1216 = vmatpush1.bf16.msra.mxu0 0
        %1217 = vmatprep.subr.bf16.mxu0 0
        %1218 = vmatpush1.bf16.msra.mxu0 0
        %1219 = vmatprep.mubr.bf16.mxu0 0
        %1220 = vmatmul.mubr.bf16.gmra.mrb[0].mxu0 %v1182
        %v1221 = vpop.f32.mrb[0].mxu0
        %v1222 = vadd.f32 0.0, %v1221
        %v1223 = vpop.f32.mrb[0].mxu0
        %v1224 = vpop.f32.mrb[0].mxu0
        %v1225 = vpop.f32.mrb[0].mxu0
        %1226 = vdwg.mxu0
        %v1228 = vsel %vm748, %v1174, 0
        %v1231 = vsel %vm992, %v1178, 0
        %1233 = vmatprep.subr.bf16.mxu0 0
        %1234 = vmatpush1.bf16.msra.mxu0 %v1231
        %1235 = vmatprep.subr.bf16.mxu0 0
        %1236 = vmatpush1.bf16.msra.mxu0 0
        %1237 = vmatprep.subr.bf16.mxu0 0
        %1238 = vmatpush1.bf16.msra.mxu0 0
        %1239 = vmatprep.subr.bf16.mxu0 0
        %1240 = vmatpush1.bf16.msra.mxu0 0
        %1241 = vmatprep.subr.bf16.mxu0 0
        %1242 = vmatpush1.bf16.msra.mxu0 0
        %1243 = vmatprep.subr.bf16.mxu0 0
        %1244 = vmatpush1.bf16.msra.mxu0 0
        %1245 = vmatprep.subr.bf16.mxu0 0
        %1246 = vmatpush1.bf16.msra.mxu0 0
        %1247 = vmatprep.subr.bf16.mxu0 0
        %1248 = vmatpush1.bf16.msra.mxu0 0
        %1249 = vmatprep.subr.bf16.mxu0 0
        %1250 = vmatpush1.bf16.msra.mxu0 0
        %1251 = vmatprep.subr.bf16.mxu0 0
        %1252 = vmatpush1.bf16.msra.mxu0 0
        %1253 = vmatprep.subr.bf16.mxu0 0
        %1254 = vmatpush1.bf16.msra.mxu0 0
        %1255 = vmatprep.subr.bf16.mxu0 0
        %1256 = vmatpush1.bf16.msra.mxu0 0
        %1257 = vmatprep.subr.bf16.mxu0 0
        %1258 = vmatpush1.bf16.msra.mxu0 0
        %1259 = vmatprep.subr.bf16.mxu0 0
        %1260 = vmatpush1.bf16.msra.mxu0 0
        %1261 = vmatprep.subr.bf16.mxu0 0
        %1262 = vmatpush1.bf16.msra.mxu0 0
        %1263 = vmatprep.subr.bf16.mxu0 0
        %1264 = vmatpush1.bf16.msra.mxu0 0
        %1265 = vmatprep.mubr.bf16.mxu0 0
        %1266 = vmatmul.mubr.bf16.gmra.mrb[0].mxu0 %v1228
        %v1267 = vpop.f32.mrb[0].mxu0
        %v1268 = vadd.f32 %v1222, %v1267
        %v1269 = vpop.f32.mrb[0].mxu0
        %v1270 = vpop.f32.mrb[0].mxu0
        %v1271 = vpop.f32.mrb[0].mxu0
        %1272 = vdwg.mxu0
        %s1273 = scalar_lea.vmem %s4, 8
        %v1274 = vld [vmem:[%s1273] sm:$0xf]
        %v1276 = vsel %vm748, %v1176, 0
        %v1279 = vsel %vm992, %v1274, 0
        %1281 = vmatprep.subr.bf16.mxu0 0
        %1282 = vmatpush1.bf16.msra.mxu0 %v1279
        %1283 = vmatprep.subr.bf16.mxu0 0
        %1284 = vmatpush1.bf16.msra.mxu0 0
        %1285 = vmatprep.subr.bf16.mxu0 0
        %1286 = vmatpush1.bf16.msra.mxu0 0
        %1287 = vmatprep.subr.bf16.mxu0 0
        %1288 = vmatpush1.bf16.msra.mxu0 0
        %1289 = vmatprep.subr.bf16.mxu0 0
        %1290 = vmatpush1.bf16.msra.mxu0 0
        %1291 = vmatprep.subr.bf16.mxu0 0
        %1292 = vmatpush1.bf16.msra.mxu0 0
        %1293 = vmatprep.subr.bf16.mxu0 0
        %1294 = vmatpush1.bf16.msra.mxu0 0
        %1295 = vmatprep.subr.bf16.mxu0 0
        %1296 = vmatpush1.bf16.msra.mxu0 0
        %1297 = vmatprep.subr.bf16.mxu0 0
        %1298 = vmatpush1.bf16.msra.mxu0 0
        %1299 = vmatprep.subr.bf16.mxu0 0
        %1300 = vmatpush1.bf16.msra.mxu0 0
        %1301 = vmatprep.subr.bf16.mxu0 0
        %1302 = vmatpush1.bf16.msra.mxu0 0
        %1303 = vmatprep.subr.bf16.mxu0 0
        %1304 = vmatpush1.bf16.msra.mxu0 0
        %1305 = vmatprep.subr.bf16.mxu0 0
        %1306 = vmatpush1.bf16.msra.mxu0 0
        %1307 = vmatprep.subr.bf16.mxu0 0
        %1308 = vmatpush1.bf16.msra.mxu0 0
        %1309 = vmatprep.subr.bf16.mxu0 0
        %1310 = vmatpush1.bf16.msra.mxu0 0
        %1311 = vmatprep.subr.bf16.mxu0 0
        %1312 = vmatpush1.bf16.msra.mxu0 0
        %1313 = vmatprep.mubr.bf16.mxu0 0
        %1314 = vmatmul.mubr.bf16.gmra.mrb[0].mxu0 %v1276
        %v1315 = vpop.f32.mrb[0].mxu0
        %v1316 = vadd.f32 0.0, %v1315
        %v1317 = vpop.f32.mrb[0].mxu0
        %v1318 = vpop.f32.mrb[0].mxu0
        %v1319 = vpop.f32.mrb[0].mxu0
        %1320 = vdwg.mxu0
        %v1321 = vadd.f32 %v1268, %v1316
        %s1322 = scalar_lea.vmem %s4, 12
        %v1323 = vld [vmem:[%s1322] sm:$0xf]
        %v1325 = vsel %vm748, %v1177, 0
        %v1328 = vsel %vm992, %v1323, 0
        %1330 = vmatprep.subr.bf16.mxu0 0
        %1331 = vmatpush1.bf16.msra.mxu0 %v1328
        %1332 = vmatprep.subr.bf16.mxu0 0
        %1333 = vmatpush1.bf16.msra.mxu0 0
        %1334 = vmatprep.subr.bf16.mxu0 0
        %1335 = vmatpush1.bf16.msra.mxu0 0
        %1336 = vmatprep.subr.bf16.mxu0 0
        %1337 = vmatpush1.bf16.msra.mxu0 0
        %1338 = vmatprep.subr.bf16.mxu0 0
        %1339 = vmatpush1.bf16.msra.mxu0 0
        %1340 = vmatprep.subr.bf16.mxu0 0
        %1341 = vmatpush1.bf16.msra.mxu0 0
        %1342 = vmatprep.subr.bf16.mxu0 0
        %1343 = vmatpush1.bf16.msra.mxu0 0
        %1344 = vmatprep.subr.bf16.mxu0 0
        %1345 = vmatpush1.bf16.msra.mxu0 0
        %1346 = vmatprep.subr.bf16.mxu0 0
        %1347 = vmatpush1.bf16.msra.mxu0 0
        %1348 = vmatprep.subr.bf16.mxu0 0
        %1349 = vmatpush1.bf16.msra.mxu0 0
        %1350 = vmatprep.subr.bf16.mxu0 0
        %1351 = vmatpush1.bf16.msra.mxu0 0
        %1352 = vmatprep.subr.bf16.mxu0 0
        %1353 = vmatpush1.bf16.msra.mxu0 0
        %1354 = vmatprep.subr.bf16.mxu0 0
        %1355 = vmatpush1.bf16.msra.mxu0 0
        %1356 = vmatprep.subr.bf16.mxu0 0
        %1357 = vmatpush1.bf16.msra.mxu0 0
        %1358 = vmatprep.subr.bf16.mxu0 0
        %1359 = vmatpush1.bf16.msra.mxu0 0
        %1360 = vmatprep.subr.bf16.mxu0 0
        %1361 = vmatpush1.bf16.msra.mxu0 0
        %1362 = vmatprep.mubr.bf16.mxu0 0
        %1363 = vmatmul.mubr.bf16.gmra.mrb[0].mxu0 %v1325
        %v1364 = vpop.f32.mrb[0].mxu0
        %v1365 = vadd.f32 0.0, %v1364
        %v1366 = vpop.f32.mrb[0].mxu0
        %v1367 = vpop.f32.mrb[0].mxu0
        %v1368 = vpop.f32.mrb[0].mxu0
        %1369 = vdwg.mxu0
        %v1370 = vadd.f32 %v1321, %v1365
        %v1371 = vld [vmem:[%s5] sm:$0x1]
        %v1373 = vlaneseq
        %v1374 = vshrl.u32 %v1373, 7
        %v1375 = vsub.s32 0, %v1374
        %v1376 = vrot.slane %v1371, %v1375
        %v1378 = vadd.f32 %v1370, %v1376
        %s1379 = scalar_lea.vmem %s491, %s735
        %v1380 = vld [vmem:[%s1379] sm:$0xff]
        %v1381 = vadd.f32 %v1378, %v1380
        %v1382 = vld [vmem:[%s6] sm:$0x1]
        %v1383 = vld [vmem:[%s7] sm:$0x1]
        %vm1384 = vcmask 261120
        %v1385 = vsel %vm1384, %v1381, 0.0
        %1386 = vadd.xlane.f32.xlu0 %v1385
        %v1387 = vpop.xlane.xlu0 %1386
        %v1388 = vrcp.pop 32.0
        %v1389 = vmul.f32 %v1387, %v1388
        %v1390 = vmul.f32 %v1381, %v1381
        %v1391 = vsel %vm1384, %v1390, 0.0
        %1392 = vadd.xlane.f32.xlu0 %v1391
        %v1393 = vpop.xlane.xlu0 %1392
        %v1394 = vmul.f32 %v1393, %v1388
        %v1395 = vmul.f32 %v1389, %v1389
        %v1396 = vsub.f32 %v1394, %v1395
        %v1397 = vsub.f32 %v1381, %v1389
        %v1398 = vadd.f32 %v1396, 1e-05
        %v1399 = vrsqrt.pop %v1398
        %v1400 = vmul.f32 %v1397, %v1399
        %v1402 = vlaneseq
        %v1403 = vshrl.u32 %v1402, 7
        %v1404 = vsub.s32 0, %v1403
        %v1405 = vrot.slane %v1382, %v1404
        %v1407 = vmul.f32 %v1400, %v1405
        %v1409 = vlaneseq
        %v1410 = vshrl.u32 %v1409, 7
        %v1411 = vsub.s32 0, %v1410
        %v1412 = vrot.slane %v1383, %v1411
        %v1414 = vadd.f32 %v1407, %v1412
        %v1415 = vpack.c.bf16 %v1414, %v1414
        %v1416 = vld [vmem:[#allocation5] sm:$0xf]
        %v1417 = vld [vmem:[#allocation5 + $0x4] sm:$0xf]
        %v1418 = vld [vmem:[#allocation5 + $0x8] sm:$0xf]
        %v1419 = vld [vmem:[#allocation5 + $0xc] sm:$0xf]
        %v1420 = vld [vmem:[%s9] sm:$0x1]
        %v1422 = vlaneseq
        %v1423 = vshrl.u32 %v1422, 7
        %v1424 = vsub.s32 0, %v1423
        %v1425 = vrot.slane %v1420, %v1424
        %v1431 = vunpack.c.l.b16 %v1416
        %v1432 = vunpack.c.l.b16 %v1417
        %v1433 = vunpack.c.l.b16 %v1418
        %v1434 = vunpack.c.l.b16 %v1419
        %v1435 = vpack.c.b16 %v1432, %v1431
        %v1436 = vpack.c.b16 %v1434, %v1433
        %v1440 = vsel %vm1384, %v1415, 0
        %1442 = vmatprep.subr.bf16.mxu0 0
        %1443 = vmatpush1.bf16.msra.mxu0 %v1435
        %1444 = vmatprep.subr.bf16.mxu0 0
        %1445 = vmatpush1.bf16.msra.mxu0 %v1436
        %1446 = vmatprep.subr.bf16.mxu0 0
        %1447 = vmatpush1.bf16.msra.mxu0 0
        %1448 = vmatprep.subr.bf16.mxu0 0
        %1449 = vmatpush1.bf16.msra.mxu0 0
        %1450 = vmatprep.subr.bf16.mxu0 0
        %1451 = vmatpush1.bf16.msra.mxu0 0
        %1452 = vmatprep.subr.bf16.mxu0 0
        %1453 = vmatpush1.bf16.msra.mxu0 0
        %1454 = vmatprep.subr.bf16.mxu0 0
        %1455 = vmatpush1.bf16.msra.mxu0 0
        %1456 = vmatprep.subr.bf16.mxu0 0
        %1457 = vmatpush1.bf16.msra.mxu0 0
        %1458 = vmatprep.subr.bf16.mxu0 0
        %1459 = vmatpush1.bf16.msra.mxu0 0
        %1460 = vmatprep.subr.bf16.mxu0 0
        %1461 = vmatpush1.bf16.msra.mxu0 0
        %1462 = vmatprep.subr.bf16.mxu0 0
        %1463 = vmatpush1.bf16.msra.mxu0 0
        %1464 = vmatprep.subr.bf16.mxu0 0
        %1465 = vmatpush1.bf16.msra.mxu0 0
        %1466 = vmatprep.subr.bf16.mxu0 0
        %1467 = vmatpush1.bf16.msra.mxu0 0
        %1468 = vmatprep.subr.bf16.mxu0 0
        %1469 = vmatpush1.bf16.msra.mxu0 0
        %1470 = vmatprep.subr.bf16.mxu0 0
        %1471 = vmatpush1.bf16.msra.mxu0 0
        %1472 = vmatprep.subr.bf16.mxu0 0
        %1473 = vmatpush1.bf16.msra.mxu0 0
        %1474 = vmatprep.mubr.bf16.mxu0 0
        %1475 = vmatmul.mubr.bf16.gmra.mrb[0].mxu0 %v1440
        %v1476 = vpop.f32.mrb[0].mxu0
        %v1477 = vadd.f32 %v1425, %v1476
        %v1478 = vpop.f32.mrb[0].mxu0
        %v1479 = vpop.f32.mrb[0].mxu0
        %v1480 = vpop.f32.mrb[0].mxu0
        %1481 = vdwg.mxu0
        %v1482 = vmax.f32 %v1477, 0.0
        %v1483 = vpack.c.bf16 %v1482, %v1482
        %v1484 = vld [vmem:[%s10] sm:$0xf]
        %v1485 = vld [vmem:[%s10 + $0x4] sm:$0xf]
        %v1486 = vld [vmem:[%s10 + $0x8] sm:$0xf]
        %v1487 = vld [vmem:[%s10 + $0xc] sm:$0xf]
        %v1488 = vld [vmem:[%s10 + $0x10] sm:$0xf]
        %v1489 = vld [vmem:[%s10 + $0x14] sm:$0xf]
        %v1490 = vld [vmem:[%s10 + $0x18] sm:$0xf]
        %v1491 = vld [vmem:[%s10 + $0x1c] sm:$0xf]
        %v1492 = vld [vmem:[%s10 + $0x20] sm:$0xf]
        %v1493 = vld [vmem:[%s10 + $0x24] sm:$0xf]
        %v1494 = vld [vmem:[%s10 + $0x28] sm:$0xf]
        %v1495 = vld [vmem:[%s10 + $0x2c] sm:$0xf]
        %v1496 = vld [vmem:[%s10 + $0x30] sm:$0xf]
        %v1497 = vld [vmem:[%s10 + $0x34] sm:$0xf]
        %v1498 = vld [vmem:[%s10 + $0x38] sm:$0xf]
        %v1499 = vld [vmem:[%s10 + $0x3c] sm:$0xf]
        %v1500 = vld [vmem:[%s11] sm:$0x1]
        %v1502 = vlaneseq
        %v1503 = vshrl.u32 %v1502, 7
        %v1504 = vsub.s32 0, %v1503
        %v1505 = vrot.slane %v1500, %v1504
        %v1523 = vunpack.c.l.b16 %v1484
        %v1524 = vunpack.c.l.b16 %v1485
        %v1525 = vunpack.c.l.b16 %v1486
        %v1526 = vunpack.c.l.b16 %v1487
        %v1527 = vunpack.c.l.b16 %v1488
        %v1528 = vunpack.c.l.b16 %v1489
        %v1529 = vunpack.c.l.b16 %v1490
        %v1530 = vunpack.c.l.b16 %v1491
        %v1531 = vunpack.c.l.b16 %v1492
        %v1532 = vunpack.c.l.b16 %v1493
        %v1533 = vunpack.c.l.b16 %v1494
        %v1534 = vunpack.c.l.b16 %v1495
        %v1535 = vunpack.c.l.b16 %v1496
        %v1536 = vunpack.c.l.b16 %v1497
        %v1537 = vunpack.c.l.b16 %v1498
        %v1538 = vunpack.c.l.b16 %v1499
        %v1539 = vpack.c.b16 %v1524, %v1523
        %v1540 = vpack.c.b16 %v1526, %v1525
        %v1541 = vpack.c.b16 %v1528, %v1527
        %v1542 = vpack.c.b16 %v1530, %v1529
        %v1543 = vpack.c.b16 %v1532, %v1531
        %v1544 = vpack.c.b16 %v1534, %v1533
        %v1545 = vpack.c.b16 %v1536, %v1535
        %v1546 = vpack.c.b16 %v1538, %v1537
        %1555 = vmatprep.subr.bf16.mxu0 0
        %1556 = vmatpush1.bf16.msra.mxu0 %v1539
        %1557 = vmatprep.subr.bf16.mxu0 0
        %1558 = vmatpush1.bf16.msra.mxu0 %v1540
        %1559 = vmatprep.subr.bf16.mxu0 0
        %1560 = vmatpush1.bf16.msra.mxu0 %v1541
        %1561 = vmatprep.subr.bf16.mxu0 0
        %1562 = vmatpush1.bf16.msra.mxu0 %v1542
        %1563 = vmatprep.subr.bf16.mxu0 0
        %1564 = vmatpush1.bf16.msra.mxu0 %v1543
        %1565 = vmatprep.subr.bf16.mxu0 0
        %1566 = vmatpush1.bf16.msra.mxu0 %v1544
        %1567 = vmatprep.subr.bf16.mxu0 0
        %1568 = vmatpush1.bf16.msra.mxu0 %v1545
        %1569 = vmatprep.subr.bf16.mxu0 0
        %1570 = vmatpush1.bf16.msra.mxu0 %v1546
        %1571 = vmatprep.subr.bf16.mxu0 0
        %1572 = vmatpush1.bf16.msra.mxu0 0
        %1573 = vmatprep.subr.bf16.mxu0 0
        %1574 = vmatpush1.bf16.msra.mxu0 0
        %1575 = vmatprep.subr.bf16.mxu0 0
        %1576 = vmatpush1.bf16.msra.mxu0 0
        %1577 = vmatprep.subr.bf16.mxu0 0
        %1578 = vmatpush1.bf16.msra.mxu0 0
        %1579 = vmatprep.subr.bf16.mxu0 0
        %1580 = vmatpush1.bf16.msra.mxu0 0
        %1581 = vmatprep.subr.bf16.mxu0 0
        %1582 = vmatpush1.bf16.msra.mxu0 0
        %1583 = vmatprep.subr.bf16.mxu0 0
        %1584 = vmatpush1.bf16.msra.mxu0 0
        %1585 = vmatprep.subr.bf16.mxu0 0
        %1586 = vmatpush1.bf16.msra.mxu0 0
        %1587 = vmatprep.mubr.bf16.mxu0 0
        %1588 = vmatmul.mubr.bf16.gmra.mrb[0].mxu0 %v1483
        %v1589 = vpop.f32.mrb[0].mxu0
        %v1590 = vadd.f32 %v1505, %v1589
        %v1591 = vpop.f32.mrb[0].mxu0
        %v1592 = vpop.f32.mrb[0].mxu0
        %v1593 = vpop.f32.mrb[0].mxu0
        %1594 = vdwg.mxu0
        %v1595 = vadd.f32 %v1590, %v1414
        %v1596 = vld [vmem:[%s12] sm:$0x1]
        %v1597 = vld [vmem:[%s13] sm:$0x1]
        %v1598 = vsel %vm1384, %v1595, 0.0
        %1599 = vadd.xlane.f32.xlu0 %v1598
        %v1600 = vpop.xlane.xlu0 %1599
        %v1601 = vmul.f32 %v1600, %v1388
        %v1602 = vmul.f32 %v1595, %v1595
        %v1603 = vsel %vm1384, %v1602, 0.0
        %1604 = vadd.xlane.f32.xlu0 %v1603
        %v1605 = vpop.xlane.xlu0 %1604
        %v1606 = vmul.f32 %v1605, %v1388
        %v1607 = vmul.f32 %v1601, %v1601
        %v1608 = vsub.f32 %v1606, %v1607
        %v1609 = vsub.f32 %v1595, %v1601
        %v1610 = vadd.f32 %v1608, 1e-05
        %v1611 = vrsqrt.pop %v1610
        %v1612 = vmul.f32 %v1609, %v1611
        %v1614 = vlaneseq
        %v1615 = vshrl.u32 %v1614, 7
        %v1616 = vsub.s32 0, %v1615
        %v1617 = vrot.slane %v1596, %v1616
        %v1619 = vmul.f32 %v1612, %v1617
        %v1621 = vlaneseq
        %v1622 = vshrl.u32 %v1621, 7
        %v1623 = vsub.s32 0, %v1622
        %v1624 = vrot.slane %v1597, %v1623
        %v1626 = vadd.f32 %v1619, %v1624
        %1627 = vst.msk [vmem:[%s487] sm:$0xff] %vm1384, %v1626
        %s1628 = sand.u32 %s350, 1
        %s1629 = scalar_lea.sflag [#allocation7], %s1628
        %s1630 = sand.u32 %s350, 1
        %s1631 = smul.addr %s1630, 8
        %s1632 = scalar_lea.vmem [#allocation8], %s1631
        // Predicated region
        $region85: #{tpu_custom_call.1} parent=75 // pred_check
          %p1633 = pneg %p360
        $region86: #{tpu_custom_call.1} parent=75 // pred_check_branch
          %1635 = sbr.rel (%p1633) target = $region88
        $region87: #{tpu_custom_call.1} parent=75 // pred_region
          %s1637 = ssub.s32 128, 128
          %1638 = vsyncadd %s1629, %s1637
          %s1639 = sadd.s32 %s34, %s33
          %s1640 = smul.addr %s1639, 128
          %s1641 = scalar_lea.hbm %s14, %s1640
          %s1643 = sshll.u32 %s1632, 4
          %s1644 = int_to_ptr.vmem [resolvable:$true] %s1643
          %1646 = dma.vmem_to_hbm [thread:$0]  %s1644, 128, %s1641, %s1629
        $region88: #{tpu_custom_call.1} parent=75 // pred_fallthru
          _
      $region76: #{tpu_custom_call.1} parent=5 // pred_fallthru
        _
      %p1647 = scmp.le.s32.totalorder 2, %s24
      // Predicated region
      $region89: #{tpu_custom_call.1} parent=5 // pred_check
        %p1648 = pneg %p1647
      $region90: #{tpu_custom_call.1} parent=5 // pred_check_branch
        %1650 = sbr.rel (%p1648) target = $region92
      $region91: #{tpu_custom_call.1} parent=5 // pred_region
        %s1651 = ssub.s32 %s24, 2
        // Predicated region
        $region93: #{tpu_custom_call.1} parent=91 // pred_check
          %p1652 = pneg %p366
        $region94: #{tpu_custom_call.1} parent=91 // pred_check_branch
          %1654 = sbr.rel (%p1652) target = $region96
        $region95: #{tpu_custom_call.1} parent=91 // pred_region
          %s1655 = sand.u32 %s351, 1
          %s1656 = scalar_lea.sflag [#allocation7], %s1655
          %s1657 = sand.u32 %s351, 1
          %s1658 = smul.addr %s1657, 8
          %s1659 = scalar_lea.vmem [#allocation8], %s1658
          %1660 = dma.done %s1656, 128
        $region96: #{tpu_custom_call.1} parent=91 // pred_fallthru
          _
      $region92: #{tpu_custom_call.1} parent=5 // pred_fallthru
        _
    $region6: #{tpu_custom_call.1} parent=1 // loop_footer
      %s28 = sadd.s32 1, %s24
    $region7: #{tpu_custom_call.1} parent=1 // loop_footer_branch
      %23 = sbr.rel target = $region3
    $region8: #{tpu_custom_call.1} parent=1 // loop_exit
      _
    %1661 = vsyncpa [#allocation6], 1
    %s1662 = scalar_lea.sflag [#allocation6], 1
    %1663 = vsyncpa %s1662, 1
    %1664 = vsyncpa [#allocation7], 1
    %s1665 = scalar_lea.sflag [#allocation7], 1
    %1666 = vsyncpa %s1665, 1

</llo_original>
